<compile_context>
chip_gen: v7x
topology: tpu7x:2x2x1
jax: 0.10.0
libtpu: 0.0.40
codegen_flags: <defaults>
</compile_context>

<pallas_src>
import jax
import jax.numpy as jnp
from jax.experimental import pallas as pl
from jax.experimental.pallas import tpu as pltpu

EPS = 1e-5
K_IN = 28 * 28          # 784 (no padding; full-array block, 7 MXU K-groups)
H1, H2 = 512, 256
N_OUT = 10
N_PAD = 128             # lane-dense output width
NEG_PAD = -1e30         # b3 padding so padded logits never affect max / logsumexp


def mlp_kernel(x_ref,
               w1_ref, g1_ref, be1_ref,
               w2_ref, g2_ref, be2_ref,
               w3_ref, b3_ref,
               o_ref):
    # Cast to bf16 on the VPU (free filler); matmuls accumulate in f32 on the MXU.
    x = x_ref[...].astype(jnp.bfloat16)                            # [B, 784] bf16

    def bn_relu(h, g_ref, be_ref):
        # Fused training-mode BN (biased variance) + ReLU, statistics in f32.
        mu = jnp.mean(h, axis=0, keepdims=True)
        ex2 = jnp.mean(h * h, axis=0, keepdims=True)
        var = jnp.maximum(ex2 - mu * mu, 0.0)
        scale = g_ref[...] * jax.lax.rsqrt(var + EPS)
        shift = be_ref[...] - mu * scale
        return jnp.maximum(h * scale + shift, 0.0)

    # ---- fc1 (bias cancelled by BN) + BN(512) + ReLU ------------------------
    h = jnp.dot(x, w1_ref[...], preferred_element_type=jnp.float32)   # [B, 512] f32
    h = bn_relu(h, g1_ref, be1_ref).astype(jnp.bfloat16)

    # ---- fc2 (bias cancelled by BN) + BN(256) + ReLU ------------------------
    h = jnp.dot(h, w2_ref[...], preferred_element_type=jnp.float32)   # [B, 256] f32
    h = bn_relu(h, g2_ref, be2_ref).astype(jnp.bfloat16)

    # ---- fc3 (padded to 128 lanes) + log_softmax(dim=1) ---------------------
    logits = jnp.dot(h, w3_ref[...], preferred_element_type=jnp.float32) + b3_ref[...]
    m = jnp.max(logits, axis=1, keepdims=True)          # padded cols are ~-1e30
    z = logits - m
    lse = jnp.log(jnp.sum(jnp.exp(z), axis=1, keepdims=True))
    o_ref[...] = z - lse                                 # [B, 128] f32


def mlp_forward(x, params):
    # params are already kernel-ready (bf16 weights, w3/b3 padded) — no per-call
    # layout plumbing here.
    (w1, g1, be1, w2, g2, be2, w3p, b3p) = params
    B = x.shape[0]

    # HBM-visible traffic only: x in, weights/BN params in, padded log-probs out.
    weight_bytes = (w1.size + w2.size + w3p.size) * 2 + (b3p.size + g1.size
                   + be1.size + g2.size + be2.size) * 4
    io_bytes = B * K_IN * 4 + B * N_PAD * 4
    cost = pl.CostEstimate(
        flops=2 * B * (K_IN * H1 + H1 * H2 + H2 * N_PAD),
        transcendentals=B * N_PAD + 2 * (H1 + H2),
        bytes_accessed=weight_bytes + io_bytes,
    )

    vmem_spec = pl.BlockSpec(memory_space=pltpu.MemorySpace.VMEM)
    out = pl.pallas_call(
        mlp_kernel,
        out_shape=jax.ShapeDtypeStruct((B, N_PAD), jnp.float32),
        in_specs=[vmem_spec] * 9,
        out_specs=vmem_spec,
        compiler_params=pltpu.CompilerParams(vmem_limit_bytes=32 * 1024 * 1024),
        cost_estimate=cost,
    )(x, w1, g1, be1, w2, g2, be2, w3p, b3p)
    return out[:, :N_OUT]


def init_params(key):
    """One-time param construction + kernel-ready layout (casts / pads hoisted here)."""
    ks = jax.random.split(key, 6)

    def linear(kw, kb, fan_in, fan_out):
        # PyTorch nn.Linear default init: U(-1/sqrt(fan_in), 1/sqrt(fan_in)).
        bound = 1.0 / jnp.sqrt(jnp.float32(fan_in))
        w_t = jax.random.uniform(kw, (fan_in, fan_out), jnp.float32, -bound, bound)
        b = jax.random.uniform(kb, (1, fan_out), jnp.float32, -bound, bound)
        return w_t, b

    # fc1 / fc2 biases omitted: exactly cancelled by training-mode BN mean subtraction.
    w1, _ = linear(ks[0], ks[1], K_IN, H1)
    w2, _ = linear(ks[2], ks[3], H1, H2)
    w3, b3 = linear(ks[4], ks[5], H2, N_OUT)

    # Kernel-ready layouts, built once:
    w1 = w1.astype(jnp.bfloat16)                                     # [784, 512]
    w2 = w2.astype(jnp.bfloat16)                                     # [512, 256]
    w3p = jnp.pad(w3, ((0, 0), (0, N_PAD - N_OUT))).astype(jnp.bfloat16)   # [256, 128]
    b3p = jnp.pad(b3, ((0, 0), (0, N_PAD - N_OUT)), constant_values=NEG_PAD)  # [1, 128]

    # BatchNorm affine params (PyTorch default: gamma=1, beta=0), shapes [1, F].
    g1 = jnp.ones((1, H1), jnp.float32)
    be1 = jnp.zeros((1, H1), jnp.float32)
    g2 = jnp.ones((1, H2), jnp.float32)
    be2 = jnp.zeros((1, H2), jnp.float32)
    return (w1, g1, be1, w2, g2, be2, w3p, b3p)


def reference_forward(x, params):
    # Pure-JAX reference mirroring the PyTorch forward (training-mode BN) with
    # the same bf16 matmul inputs / f32 accumulation as the kernel.
    (w1, g1, be1, w2, g2, be2, w3p, b3p) = params
    w3 = w3p[:, :N_OUT]
    b3 = b3p[:, :N_OUT]

    def bn(h, g, be):
        mu = jnp.mean(h, axis=0, keepdims=True)
        var = jnp.mean((h - mu) ** 2, axis=0, keepdims=True)   # biased variance
        return (h - mu) / jnp.sqrt(var + EPS) * g + be

    h = jnp.dot(x.astype(jnp.bfloat16), w1, preferred_element_type=jnp.float32)
    h = jnp.maximum(bn(h, g1, be1), 0.0).astype(jnp.bfloat16)
    h = jnp.dot(h, w2, preferred_element_type=jnp.float32)
    h = jnp.maximum(bn(h, g2, be2), 0.0).astype(jnp.bfloat16)
    logits = jnp.dot(h, w3, preferred_element_type=jnp.float32) + b3
    return jax.nn.log_softmax(logits, axis=1)


if __name__ == "__main__":
    key = jax.random.PRNGKey(0)
    k_x, k_p = jax.random.split(key)

    B = 128  # multiple of 16 (bf16 sublanes), fills >=128 MXU rows; BN needs B > 1
    x = jax.random.normal(k_x, (B, K_IN), jnp.float32)
    params = init_params(k_p)

    out = jax.jit(mlp_forward)(x, params)
    out = jax.block_until_ready(out)

    ref = reference_forward(x, params)
    assert out.shape == (B, N_OUT)
    assert jnp.allclose(out, ref, atol=5e-3, rtol=5e-3), "mismatch vs reference"

    print("KERNEL_OK")
</pallas_src>

<mosaic_0001>
module attributes {stable_mosaic.version = 11 : i64} {
  func.func @mlp_kernel(%arg0: memref<128x784xf32, #tpu.memory_space<vmem>>, %arg1: memref<784x512xbf16, #tpu.memory_space<vmem>>, %arg2: memref<1x512xf32, #tpu.memory_space<vmem>>, %arg3: memref<1x512xf32, #tpu.memory_space<vmem>>, %arg4: memref<512x256xbf16, #tpu.memory_space<vmem>>, %arg5: memref<1x256xf32, #tpu.memory_space<vmem>>, %arg6: memref<1x256xf32, #tpu.memory_space<vmem>>, %arg7: memref<256x128xbf16, #tpu.memory_space<vmem>>, %arg8: memref<1x128xf32, #tpu.memory_space<vmem>>, %arg9: memref<128x128xf32, #tpu.memory_space<vmem>>) attributes {dimension_semantics = [], scalar_prefetch = 0 : i64, scratch_operands = 0 : i64, tpu.core_type = #tpu.core_type<tc>} {
    %c0 = arith.constant 0 : index
    %c0_0 = arith.constant 0 : index
    %0 = vector.load %arg0[%c0, %c0_0] : memref<128x784xf32, #tpu.memory_space<vmem>>, vector<128x784xf32>
    %1 = arith.truncf %0 : vector<128x784xf32> to vector<128x784xbf16>
    %c0_1 = arith.constant 0 : index
    %c0_2 = arith.constant 0 : index
    %2 = vector.load %arg1[%c0_1, %c0_2] : memref<784x512xbf16, #tpu.memory_space<vmem>>, vector<784x512xbf16>
    %cst = arith.constant dense<0.000000e+00> : vector<128x512xf32>
    %3 = tpu.matmul %1, %2, %cst {dimension_numbers = #tpu.dot_dimension_numbers<[1], [0], [0], [1], [0, 0, 1, 1], [], []>} : vector<128x784xbf16>, vector<784x512xbf16>, vector<128x512xf32> -> vector<128x512xf32>
    %cst_3 = arith.constant dense<0.000000e+00> : vector<512xf32>
    %4 = vector.multi_reduction <add>, %3, %cst_3 [0] : vector<128x512xf32> to vector<512xf32>
    %5 = vector.shape_cast %4 : vector<512xf32> to vector<1x512xf32>
    %cst_4 = arith.constant 1.280000e+02 : f32
    %6 = vector.broadcast %cst_4 : f32 to vector<1x512xf32>
    %7 = arith.divf %5, %6 : vector<1x512xf32>
    %8 = arith.mulf %3, %3 : vector<128x512xf32>
    %cst_5 = arith.constant dense<0.000000e+00> : vector<512xf32>
    %9 = vector.multi_reduction <add>, %8, %cst_5 [0] : vector<128x512xf32> to vector<512xf32>
    %10 = vector.shape_cast %9 : vector<512xf32> to vector<1x512xf32>
    %cst_6 = arith.constant 1.280000e+02 : f32
    %11 = vector.broadcast %cst_6 : f32 to vector<1x512xf32>
    %12 = arith.divf %10, %11 : vector<1x512xf32>
    %13 = arith.mulf %7, %7 : vector<1x512xf32>
    %14 = arith.subf %12, %13 : vector<1x512xf32>
    %cst_7 = arith.constant 0.000000e+00 : f32
    %15 = vector.broadcast %cst_7 : f32 to vector<1x512xf32>
    %16 = arith.maximumf %14, %15 : vector<1x512xf32>
    %c0_8 = arith.constant 0 : index
    %c0_9 = arith.constant 0 : index
    %17 = vector.load %arg2[%c0_8, %c0_9] : memref<1x512xf32, #tpu.memory_space<vmem>>, vector<1x512xf32>
    %cst_10 = arith.constant 9.99999974E-6 : f32
    %18 = vector.broadcast %cst_10 : f32 to vector<1x512xf32>
    %19 = arith.addf %16, %18 : vector<1x512xf32>
    %20 = math.rsqrt %19 : vector<1x512xf32>
    %21 = arith.mulf %17, %20 : vector<1x512xf32>
    %c0_11 = arith.constant 0 : index
    %c0_12 = arith.constant 0 : index
    %22 = vector.load %arg3[%c0_11, %c0_12] : memref<1x512xf32, #tpu.memory_space<vmem>>, vector<1x512xf32>
    %23 = arith.mulf %7, %21 : vector<1x512xf32>
    %24 = arith.subf %22, %23 : vector<1x512xf32>
    %25 = vector.broadcast %21 : vector<1x512xf32> to vector<128x512xf32>
    %26 = arith.mulf %3, %25 : vector<128x512xf32>
    %27 = vector.broadcast %24 : vector<1x512xf32> to vector<128x512xf32>
    %28 = arith.addf %26, %27 : vector<128x512xf32>
    %cst_13 = arith.constant 0.000000e+00 : f32
    %29 = vector.broadcast %cst_13 : f32 to vector<128x512xf32>
    %30 = arith.maximumf %28, %29 : vector<128x512xf32>
    %31 = arith.truncf %30 : vector<128x512xf32> to vector<128x512xbf16>
    %c0_14 = arith.constant 0 : index
    %c0_15 = arith.constant 0 : index
    %32 = vector.load %arg4[%c0_14, %c0_15] : memref<512x256xbf16, #tpu.memory_space<vmem>>, vector<512x256xbf16>
    %cst_16 = arith.constant dense<0.000000e+00> : vector<128x256xf32>
    %33 = tpu.matmul %31, %32, %cst_16 {dimension_numbers = #tpu.dot_dimension_numbers<[1], [0], [0], [1], [0, 0, 1, 1], [], []>} : vector<128x512xbf16>, vector<512x256xbf16>, vector<128x256xf32> -> vector<128x256xf32>
    %cst_17 = arith.constant dense<0.000000e+00> : vector<256xf32>
    %34 = vector.multi_reduction <add>, %33, %cst_17 [0] : vector<128x256xf32> to vector<256xf32>
    %35 = vector.shape_cast %34 : vector<256xf32> to vector<1x256xf32>
    %cst_18 = arith.constant 1.280000e+02 : f32
    %36 = vector.broadcast %cst_18 : f32 to vector<1x256xf32>
    %37 = arith.divf %35, %36 : vector<1x256xf32>
    %38 = arith.mulf %33, %33 : vector<128x256xf32>
    %cst_19 = arith.constant dense<0.000000e+00> : vector<256xf32>
    %39 = vector.multi_reduction <add>, %38, %cst_19 [0] : vector<128x256xf32> to vector<256xf32>
    %40 = vector.shape_cast %39 : vector<256xf32> to vector<1x256xf32>
    %cst_20 = arith.constant 1.280000e+02 : f32
    %41 = vector.broadcast %cst_20 : f32 to vector<1x256xf32>
    %42 = arith.divf %40, %41 : vector<1x256xf32>
    %43 = arith.mulf %37, %37 : vector<1x256xf32>
    %44 = arith.subf %42, %43 : vector<1x256xf32>
    %cst_21 = arith.constant 0.000000e+00 : f32
    %45 = vector.broadcast %cst_21 : f32 to vector<1x256xf32>
    %46 = arith.maximumf %44, %45 : vector<1x256xf32>
    %c0_22 = arith.constant 0 : index
    %c0_23 = arith.constant 0 : index
    %47 = vector.load %arg5[%c0_22, %c0_23] : memref<1x256xf32, #tpu.memory_space<vmem>>, vector<1x256xf32>
    %cst_24 = arith.constant 9.99999974E-6 : f32
    %48 = vector.broadcast %cst_24 : f32 to vector<1x256xf32>
    %49 = arith.addf %46, %48 : vector<1x256xf32>
    %50 = math.rsqrt %49 : vector<1x256xf32>
    %51 = arith.mulf %47, %50 : vector<1x256xf32>
    %c0_25 = arith.constant 0 : index
    %c0_26 = arith.constant 0 : index
    %52 = vector.load %arg6[%c0_25, %c0_26] : memref<1x256xf32, #tpu.memory_space<vmem>>, vector<1x256xf32>
    %53 = arith.mulf %37, %51 : vector<1x256xf32>
    %54 = arith.subf %52, %53 : vector<1x256xf32>
    %55 = vector.broadcast %51 : vector<1x256xf32> to vector<128x256xf32>
    %56 = arith.mulf %33, %55 : vector<128x256xf32>
    %57 = vector.broadcast %54 : vector<1x256xf32> to vector<128x256xf32>
    %58 = arith.addf %56, %57 : vector<128x256xf32>
    %cst_27 = arith.constant 0.000000e+00 : f32
    %59 = vector.broadcast %cst_27 : f32 to vector<128x256xf32>
    %60 = arith.maximumf %58, %59 : vector<128x256xf32>
    %61 = arith.truncf %60 : vector<128x256xf32> to vector<128x256xbf16>
    %c0_28 = arith.constant 0 : index
    %c0_29 = arith.constant 0 : index
    %62 = vector.load %arg7[%c0_28, %c0_29] : memref<256x128xbf16, #tpu.memory_space<vmem>>, vector<256x128xbf16>
    %cst_30 = arith.constant dense<0.000000e+00> : vector<128x128xf32>
    %63 = tpu.matmul %61, %62, %cst_30 {dimension_numbers = #tpu.dot_dimension_numbers<[1], [0], [0], [1], [0, 0, 1, 1], [], []>} : vector<128x256xbf16>, vector<256x128xbf16>, vector<128x128xf32> -> vector<128x128xf32>
    %c0_31 = arith.constant 0 : index
    %c0_32 = arith.constant 0 : index
    %64 = vector.load %arg8[%c0_31, %c0_32] : memref<1x128xf32, #tpu.memory_space<vmem>>, vector<1x128xf32>
    %65 = vector.broadcast %64 : vector<1x128xf32> to vector<128x128xf32>
    %66 = arith.addf %63, %65 : vector<128x128xf32>
    %cst_33 = arith.constant dense<0xFF800000> : vector<128xf32>
    %67 = vector.multi_reduction <maximumf>, %66, %cst_33 [1] : vector<128x128xf32> to vector<128xf32>
    %68 = vector.shape_cast %67 : vector<128xf32> to vector<128x1xf32>
    %69 = vector.broadcast %68 : vector<128x1xf32> to vector<128x128xf32>
    %70 = arith.subf %66, %69 : vector<128x128xf32>
    %71 = math.exp %70 : vector<128x128xf32>
    %cst_34 = arith.constant dense<0.000000e+00> : vector<128xf32>
    %72 = vector.multi_reduction <add>, %71, %cst_34 [1] : vector<128x128xf32> to vector<128xf32>
    %73 = vector.shape_cast %72 : vector<128xf32> to vector<128x1xf32>
    %74 = math.log %73 : vector<128x1xf32>
    %75 = vector.broadcast %74 : vector<128x1xf32> to vector<128x128xf32>
    %76 = arith.subf %70, %75 : vector<128x128xf32>
    %c0_35 = arith.constant 0 : index
    %c0_36 = arith.constant 0 : index
    %77 = vector.load %arg9[%c0_35, %c0_36] : memref<128x128xf32, #tpu.memory_space<vmem>>, vector<128x128xf32>
    tpu.vector_store %arg9[%c0_35, %c0_36], %76 {strides = array<i32>} : memref<128x128xf32, #tpu.memory_space<vmem>>, vector<128x128xf32>,
    return
  }
}

</mosaic_0001>

<llo_original>
// kernel: mlp_forward.1
$region0: #{mlp_forward.1}
  #allocation0 [shape = 'u32[]', space=smem, size = 0x4, offset = 0x4, fixed_abs, tag = 'smem constant byte address 0x4 - core index']
  #allocation1 [shape = 'u32[144,128]{1,0:T(1,128)}', space=vmem, size = 0x12000, scoped, tag = 'internal scratch']
  %s0 = inlined_call_operand.vmem [shape: f32[128,784], index: 0, kind: input, shape index: {}]
  %s1 = inlined_call_operand.vmem [shape: bf16[784,512], index: 1, kind: input, shape index: {}]
  %s2 = inlined_call_operand.hbm [shape: f32[1,512], index: 2, kind: input, shape index: {}]
  %s3 = inlined_call_operand.hbm [shape: f32[1,512], index: 3, kind: input, shape index: {}]
  %s4 = inlined_call_operand.hbm [shape: bf16[512,256], index: 4, kind: input, shape index: {}]
  %s5 = inlined_call_operand.vmem [shape: f32[1,256], index: 5, kind: input, shape index: {}]
  %s6 = inlined_call_operand.hbm [shape: f32[1,256], index: 6, kind: input, shape index: {}]
  %s7 = inlined_call_operand.vmem [shape: bf16[256,128], index: 7, kind: input, shape index: {}]
  %s8 = inlined_call_operand.hbm [shape: f32[1,128], index: 8, kind: input, shape index: {}]
  %s9 = inlined_call_operand.vmem [shape: f32[128,128], index: 9, kind: output, shape index: {}]
  %s10 = sld [smem:[#allocation0]]
  $region66: #{mlp_forward.1} parent=0
    _
  %s12 = ssub.s32 1, %s10
  %s13 = scalar_select 0, %s12, %s10
  $region1: #{mlp_forward.1} parent=0
    #allocation2 [shape = 'u8[2048]{0}', space=vmem, size = 0x800, scoped, tag = 'input window, operand 2, single buffered']
    #allocation3 [shape = 's32[1]{0}', space=sflag, size = 0x4, scoped, tag = 'scoped memory for mlp_forward.1']
    #allocation4 [shape = 'u8[2048]{0}', space=vmem, size = 0x800, scoped, tag = 'input window, operand 3, single buffered']
    #allocation5 [shape = 's32[1]{0}', space=sflag, size = 0x4, scoped, tag = 'scoped memory for mlp_forward.1']
    #allocation6 [shape = 'u8[262144]{0}', space=vmem, size = 0x40000, scoped, tag = 'input window, operand 4, single buffered']
    #allocation7 [shape = 'u8[1024]{0}', space=vmem, size = 0x400, scoped, tag = 'input window, operand 6, single buffered']
    #allocation8 [shape = 's32[1]{0}', space=sflag, size = 0x4, scoped, tag = 'scoped memory for mlp_forward.1']
    #allocation9 [shape = 'u8[512]{0}', space=vmem, size = 0x400, scoped, tag = 'input window, operand 8, single buffered']
    %14 = vsyncpa [#allocation3], 0
    %15 = vsyncpa [#allocation5], 0
    %16 = vsyncpa [#allocation8], 0
    // Predicated region
    $region2: #{mlp_forward.1} parent=1 // pred_check
      _
    $region3: #{mlp_forward.1} parent=1 // pred_check_branch
      %18 = sbr.rel (0) target = $region5
    $region4: #{mlp_forward.1} parent=1 // pred_region
      _
    $region5: #{mlp_forward.1} parent=1 // pred_fallthru
      _
    // Predicated region
    $region6: #{mlp_forward.1} parent=1 // pred_check
      _
    $region7: #{mlp_forward.1} parent=1 // pred_check_branch
      %20 = sbr.rel (0) target = $region9
    $region8: #{mlp_forward.1} parent=1 // pred_region
      _
    $region9: #{mlp_forward.1} parent=1 // pred_fallthru
      _
    // Predicated region
    $region10: #{mlp_forward.1} parent=1 // pred_check
      _
    $region11: #{mlp_forward.1} parent=1 // pred_check_branch
      %22 = sbr.rel (0) target = $region13
    $region12: #{mlp_forward.1} parent=1 // pred_region
      %s24 = ssub.s32 64, 64
      %25 = vsyncadd [#allocation3], %s24
      %s27 = sshll.u32 [#allocation2], 4
      %s28 = int_to_ptr.vmem [resolvable:$true] %s27
      %30 = dma.hbm_to_vmem [thread:$0]  %s2, 64, %s28, [#allocation3]
    $region13: #{mlp_forward.1} parent=1 // pred_fallthru
      _
    // Predicated region
    $region14: #{mlp_forward.1} parent=1 // pred_check
      _
    $region15: #{mlp_forward.1} parent=1 // pred_check_branch
      %32 = sbr.rel (0) target = $region17
    $region16: #{mlp_forward.1} parent=1 // pred_region
      %s34 = ssub.s32 64, 64
      %35 = vsyncadd [#allocation5], %s34
      %s37 = sshll.u32 [#allocation4], 4
      %s38 = int_to_ptr.vmem [resolvable:$true] %s37
      %40 = dma.hbm_to_vmem [thread:$0]  %s3, 64, %s38, [#allocation5]
    $region17: #{mlp_forward.1} parent=1 // pred_fallthru
      _
    // Predicated region
    $region18: #{mlp_forward.1} parent=1 // pred_check
      _
    $region19: #{mlp_forward.1} parent=1 // pred_check_branch
      %42 = sbr.rel (0) target = $region21
    $region20: #{mlp_forward.1} parent=1 // pred_region
      %s44 = ssub.s32 8192, 8192
      %45 = vsyncadd [#allocation5], %s44
      %s46 = sshll.u32 [#allocation6], 4
      %s47 = int_to_ptr.vmem [resolvable:$true] %s46
      %52 = dma.hbm_to_vmem [thread:$0]  %s4, 8192, %s47, [#allocation5], 128, 128, 8
    $region21: #{mlp_forward.1} parent=1 // pred_fallthru
      _
    // Predicated region
    $region22: #{mlp_forward.1} parent=1 // pred_check
      _
    $region23: #{mlp_forward.1} parent=1 // pred_check_branch
      %54 = sbr.rel (0) target = $region25
    $region24: #{mlp_forward.1} parent=1 // pred_region
      _
    $region25: #{mlp_forward.1} parent=1 // pred_fallthru
      _
    // Predicated region
    $region26: #{mlp_forward.1} parent=1 // pred_check
      _
    $region27: #{mlp_forward.1} parent=1 // pred_check_branch
      %56 = sbr.rel (0) target = $region29
    $region28: #{mlp_forward.1} parent=1 // pred_region
      %s58 = ssub.s32 32, 32
      %59 = vsyncadd [#allocation8], %s58
      %s61 = sshll.u32 [#allocation7], 4
      %s62 = int_to_ptr.vmem [resolvable:$true] %s61
      %64 = dma.hbm_to_vmem [thread:$0]  %s6, 32, %s62, [#allocation8]
    $region29: #{mlp_forward.1} parent=1 // pred_fallthru
      _
    // Predicated region
    $region30: #{mlp_forward.1} parent=1 // pred_check
      _
    $region31: #{mlp_forward.1} parent=1 // pred_check_branch
      %66 = sbr.rel (0) target = $region33
    $region32: #{mlp_forward.1} parent=1 // pred_region
      _
    $region33: #{mlp_forward.1} parent=1 // pred_fallthru
      _
    // Predicated region
    $region34: #{mlp_forward.1} parent=1 // pred_check
      _
    $region35: #{mlp_forward.1} parent=1 // pred_check_branch
      %68 = sbr.rel (0) target = $region37
    $region36: #{mlp_forward.1} parent=1 // pred_region
      %s70 = ssub.s32 16, 16
      %71 = vsyncadd [#allocation8], %s70
      %s73 = sshll.u32 [#allocation9], 4
      %s74 = int_to_ptr.vmem [resolvable:$true] %s73
      %76 = dma.hbm_to_vmem [thread:$0]  %s8, 16, %s74, [#allocation8]
    $region37: #{mlp_forward.1} parent=1 // pred_fallthru
      _
    // Predicated region
    $region38: #{mlp_forward.1} parent=1 // pred_check
      _
    $region39: #{mlp_forward.1} parent=1 // pred_check_branch
      %78 = sbr.rel (0) target = $region41
    $region40: #{mlp_forward.1} parent=1 // pred_region
      %79 = dma.done [#allocation3], 64
    $region41: #{mlp_forward.1} parent=1 // pred_fallthru
      _
    // Predicated region
    $region42: #{mlp_forward.1} parent=1 // pred_check
      _
    $region43: #{mlp_forward.1} parent=1 // pred_check_branch
      %81 = sbr.rel (0) target = $region45
    $region44: #{mlp_forward.1} parent=1 // pred_region
      %82 = dma.done [#allocation5], 64
    $region45: #{mlp_forward.1} parent=1 // pred_fallthru
      _
    // Predicated region
    $region46: #{mlp_forward.1} parent=1 // pred_check
      _
    $region47: #{mlp_forward.1} parent=1 // pred_check_branch
      %84 = sbr.rel (0) target = $region49
    $region48: #{mlp_forward.1} parent=1 // pred_region
      %85 = dma.done [#allocation5], 8192
    $region49: #{mlp_forward.1} parent=1 // pred_fallthru
      _
    // Predicated region
    $region50: #{mlp_forward.1} parent=1 // pred_check
      _
    $region51: #{mlp_forward.1} parent=1 // pred_check_branch
      %87 = sbr.rel (0) target = $region53
    $region52: #{mlp_forward.1} parent=1 // pred_region
      %88 = dma.done [#allocation8], 32
    $region53: #{mlp_forward.1} parent=1 // pred_fallthru
      _
    // Predicated region
    $region54: #{mlp_forward.1} parent=1 // pred_check
      _
    $region55: #{mlp_forward.1} parent=1 // pred_check_branch
      %90 = sbr.rel (0) target = $region57
    $region56: #{mlp_forward.1} parent=1 // pred_region
      %91 = dma.done [#allocation8], 16
    $region57: #{mlp_forward.1} parent=1 // pred_fallthru
      _
    %v93 = vld [vmem:[%s0] sm:$0xff]
    %v94 = vld [vmem:[%s0 + $0x8] sm:$0xff]
    %v95 = vld [vmem:[%s0 + $0x10] sm:$0xff]
    %v96 = vld [vmem:[%s0 + $0x18] sm:$0xff]
    %v97 = vld [vmem:[%s0 + $0x20] sm:$0xff]
    %v98 = vld [vmem:[%s0 + $0x28] sm:$0xff]
    %v99 = vld [vmem:[%s0 + $0x30] sm:$0xff]
    %v100 = vld [vmem:[%s0 + $0x38] sm:$0xff]
    %v101 = vld [vmem:[%s0 + $0x40] sm:$0xff]
    %v102 = vld [vmem:[%s0 + $0x48] sm:$0xff]
    %v103 = vld [vmem:[%s0 + $0x50] sm:$0xff]
    %v104 = vld [vmem:[%s0 + $0x58] sm:$0xff]
    %v105 = vld [vmem:[%s0 + $0x60] sm:$0xff]
    %v106 = vld [vmem:[%s0 + $0x68] sm:$0xff]
    %v107 = vld [vmem:[%s0 + $0x70] sm:$0xff]
    %v108 = vld [vmem:[%s0 + $0x78] sm:$0xff]
    %v109 = vld [vmem:[%s0 + $0x80] sm:$0xff]
    %v110 = vld [vmem:[%s0 + $0x88] sm:$0xff]
    %v111 = vld [vmem:[%s0 + $0x90] sm:$0xff]
    %v112 = vld [vmem:[%s0 + $0x98] sm:$0xff]
    %v113 = vld [vmem:[%s0 + $0xa0] sm:$0xff]
    %v114 = vld [vmem:[%s0 + $0xa8] sm:$0xff]
    %v115 = vld [vmem:[%s0 + $0xb0] sm:$0xff]
    %v116 = vld [vmem:[%s0 + $0xb8] sm:$0xff]
    %v117 = vld [vmem:[%s0 + $0xc0] sm:$0xff]
    %v118 = vld [vmem:[%s0 + $0xc8] sm:$0xff]
    %v119 = vld [vmem:[%s0 + $0xd0] sm:$0xff]
    %v120 = vld [vmem:[%s0 + $0xd8] sm:$0xff]
    %v121 = vld [vmem:[%s0 + $0xe0] sm:$0xff]
    %v122 = vld [vmem:[%s0 + $0xe8] sm:$0xff]
    %v123 = vld [vmem:[%s0 + $0xf0] sm:$0xff]
    %v124 = vld [vmem:[%s0 + $0xf8] sm:$0xff]
    %v125 = vld [vmem:[%s0 + $0x100] sm:$0xff]
    %v126 = vld [vmem:[%s0 + $0x108] sm:$0xff]
    %v127 = vld [vmem:[%s0 + $0x110] sm:$0xff]
    %v128 = vld [vmem:[%s0 + $0x118] sm:$0xff]
    %v129 = vld [vmem:[%s0 + $0x120] sm:$0xff]
    %v130 = vld [vmem:[%s0 + $0x128] sm:$0xff]
    %v131 = vld [vmem:[%s0 + $0x130] sm:$0xff]
    %v132 = vld [vmem:[%s0 + $0x138] sm:$0xff]
    %v133 = vld [vmem:[%s0 + $0x140] sm:$0xff]
    %v134 = vld [vmem:[%s0 + $0x148] sm:$0xff]
    %v135 = vld [vmem:[%s0 + $0x150] sm:$0xff]
    %v136 = vld [vmem:[%s0 + $0x158] sm:$0xff]
    %v137 = vld [vmem:[%s0 + $0x160] sm:$0xff]
    %v138 = vld [vmem:[%s0 + $0x168] sm:$0xff]
    %v139 = vld [vmem:[%s0 + $0x170] sm:$0xff]
    %v140 = vld [vmem:[%s0 + $0x178] sm:$0xff]
    %v141 = vld [vmem:[%s0 + $0x180] sm:$0xff]
    %v142 = vld [vmem:[%s0 + $0x188] sm:$0xff]
    %v143 = vld [vmem:[%s0 + $0x190] sm:$0xff]
    %v144 = vld [vmem:[%s0 + $0x198] sm:$0xff]
    %v145 = vld [vmem:[%s0 + $0x1a0] sm:$0xff]
    %v146 = vld [vmem:[%s0 + $0x1a8] sm:$0xff]
    %v147 = vld [vmem:[%s0 + $0x1b0] sm:$0xff]
    %v148 = vld [vmem:[%s0 + $0x1b8] sm:$0xff]
    %v149 = vld [vmem:[%s0 + $0x1c0] sm:$0xff]
    %v150 = vld [vmem:[%s0 + $0x1c8] sm:$0xff]
    %v151 = vld [vmem:[%s0 + $0x1d0] sm:$0xff]
    %v152 = vld [vmem:[%s0 + $0x1d8] sm:$0xff]
    %v153 = vld [vmem:[%s0 + $0x1e0] sm:$0xff]
    %v154 = vld [vmem:[%s0 + $0x1e8] sm:$0xff]
    %v155 = vld [vmem:[%s0 + $0x1f0] sm:$0xff]
    %v156 = vld [vmem:[%s0 + $0x1f8] sm:$0xff]
    %v157 = vld [vmem:[%s0 + $0x200] sm:$0xff]
    %v158 = vld [vmem:[%s0 + $0x208] sm:$0xff]
    %v159 = vld [vmem:[%s0 + $0x210] sm:$0xff]
    %v160 = vld [vmem:[%s0 + $0x218] sm:$0xff]
    %v161 = vld [vmem:[%s0 + $0x220] sm:$0xff]
    %v162 = vld [vmem:[%s0 + $0x228] sm:$0xff]
    %v163 = vld [vmem:[%s0 + $0x230] sm:$0xff]
    %v164 = vld [vmem:[%s0 + $0x238] sm:$0xff]
    %v165 = vld [vmem:[%s0 + $0x240] sm:$0xff]
    %v166 = vld [vmem:[%s0 + $0x248] sm:$0xff]
    %v167 = vld [vmem:[%s0 + $0x250] sm:$0xff]
    %v168 = vld [vmem:[%s0 + $0x258] sm:$0xff]
    %v169 = vld [vmem:[%s0 + $0x260] sm:$0xff]
    %v170 = vld [vmem:[%s0 + $0x268] sm:$0xff]
    %v171 = vld [vmem:[%s0 + $0x270] sm:$0xff]
    %v172 = vld [vmem:[%s0 + $0x278] sm:$0xff]
    %v173 = vld [vmem:[%s0 + $0x280] sm:$0xff]
    %v174 = vld [vmem:[%s0 + $0x288] sm:$0xff]
    %v175 = vld [vmem:[%s0 + $0x290] sm:$0xff]
    %v176 = vld [vmem:[%s0 + $0x298] sm:$0xff]
    %v177 = vld [vmem:[%s0 + $0x2a0] sm:$0xff]
    %v178 = vld [vmem:[%s0 + $0x2a8] sm:$0xff]
    %v179 = vld [vmem:[%s0 + $0x2b0] sm:$0xff]
    %v180 = vld [vmem:[%s0 + $0x2b8] sm:$0xff]
    %v181 = vld [vmem:[%s0 + $0x2c0] sm:$0xff]
    %v182 = vld [vmem:[%s0 + $0x2c8] sm:$0xff]
    %v183 = vld [vmem:[%s0 + $0x2d0] sm:$0xff]
    %v184 = vld [vmem:[%s0 + $0x2d8] sm:$0xff]
    %v185 = vld [vmem:[%s0 + $0x2e0] sm:$0xff]
    %v186 = vld [vmem:[%s0 + $0x2e8] sm:$0xff]
    %v187 = vld [vmem:[%s0 + $0x2f0] sm:$0xff]
    %v188 = vld [vmem:[%s0 + $0x2f8] sm:$0xff]
    %v189 = vld [vmem:[%s0 + $0x300] sm:$0xff]
    %v190 = vld [vmem:[%s0 + $0x308] sm:$0xff]
    %v191 = vld [vmem:[%s0 + $0x310] sm:$0xff]
    %v192 = vld [vmem:[%s0 + $0x318] sm:$0xff]
    %v193 = vld [vmem:[%s0 + $0x320] sm:$0xff]
    %v194 = vld [vmem:[%s0 + $0x328] sm:$0xff]
    %v195 = vld [vmem:[%s0 + $0x330] sm:$0xff]
    %v196 = vld [vmem:[%s0 + $0x338] sm:$0xff]
    %v197 = vld [vmem:[%s0 + $0x340] sm:$0xff]
    %v198 = vld [vmem:[%s0 + $0x348] sm:$0xff]
    %v199 = vld [vmem:[%s0 + $0x350] sm:$0xff]
    %v200 = vld [vmem:[%s0 + $0x358] sm:$0xff]
    %v201 = vld [vmem:[%s0 + $0x360] sm:$0xff]
    %v202 = vld [vmem:[%s0 + $0x368] sm:$0xff]
    %v203 = vld [vmem:[%s0 + $0x370] sm:$0xff]
    %v204 = vld [vmem:[%s0 + $0x378] sm:$0xff]
    %v205 = vpack.c.bf16 %v100, %v93
    %v206 = vpack.c.bf16 %v101, %v94
    %v207 = vpack.c.bf16 %v102, %v95
    %v208 = vpack.c.bf16 %v103, %v96
    %v209 = vpack.c.bf16 %v104, %v97
    %v210 = vpack.c.bf16 %v105, %v98
    %v211 = vpack.c.bf16 %v106, %v99
    %v212 = vpack.c.bf16 %v114, %v107
    %v213 = vpack.c.bf16 %v115, %v108
    %v214 = vpack.c.bf16 %v116, %v109
    %v215 = vpack.c.bf16 %v117, %v110
    %v216 = vpack.c.bf16 %v118, %v111
    %v217 = vpack.c.bf16 %v119, %v112
    %v218 = vpack.c.bf16 %v120, %v113
    %v219 = vpack.c.bf16 %v128, %v121
    %v220 = vpack.c.bf16 %v129, %v122
    %v221 = vpack.c.bf16 %v130, %v123
    %v222 = vpack.c.bf16 %v131, %v124
    %v223 = vpack.c.bf16 %v132, %v125
    %v224 = vpack.c.bf16 %v133, %v126
    %v225 = vpack.c.bf16 %v134, %v127
    %v226 = vpack.c.bf16 %v142, %v135
    %v227 = vpack.c.bf16 %v143, %v136
    %v228 = vpack.c.bf16 %v144, %v137
    %v229 = vpack.c.bf16 %v145, %v138
    %v230 = vpack.c.bf16 %v146, %v139
    %v231 = vpack.c.bf16 %v147, %v140
    %v232 = vpack.c.bf16 %v148, %v141
    %v233 = vpack.c.bf16 %v156, %v149
    %v234 = vpack.c.bf16 %v157, %v150
    %v235 = vpack.c.bf16 %v158, %v151
    %v236 = vpack.c.bf16 %v159, %v152
    %v237 = vpack.c.bf16 %v160, %v153
    %v238 = vpack.c.bf16 %v161, %v154
    %v239 = vpack.c.bf16 %v162, %v155
    %v240 = vpack.c.bf16 %v170, %v163
    %v241 = vpack.c.bf16 %v171, %v164
    %v242 = vpack.c.bf16 %v172, %v165
    %v243 = vpack.c.bf16 %v173, %v166
    %v244 = vpack.c.bf16 %v174, %v167
    %v245 = vpack.c.bf16 %v175, %v168
    %v246 = vpack.c.bf16 %v176, %v169
    %v247 = vpack.c.bf16 %v184, %v177
    %v248 = vpack.c.bf16 %v185, %v178
    %v249 = vpack.c.bf16 %v186, %v179
    %v250 = vpack.c.bf16 %v187, %v180
    %v251 = vpack.c.bf16 %v188, %v181
    %v252 = vpack.c.bf16 %v189, %v182
    %v253 = vpack.c.bf16 %v190, %v183
    %v254 = vpack.c.bf16 %v198, %v191
    %v255 = vpack.c.bf16 %v199, %v192
    %v256 = vpack.c.bf16 %v200, %v193
    %v257 = vpack.c.bf16 %v201, %v194
    %v258 = vpack.c.bf16 %v202, %v195
    %v259 = vpack.c.bf16 %v203, %v196
    %v260 = vpack.c.bf16 %v204, %v197
    %v261 = vld [vmem:[%s1] sm:$0xff]
    %v262 = vld [vmem:[%s1 + $0x8] sm:$0xff]
    %v263 = vld [vmem:[%s1 + $0x10] sm:$0xff]
    %v264 = vld [vmem:[%s1 + $0x18] sm:$0xff]
    %v265 = vld [vmem:[%s1 + $0x20] sm:$0xff]
    %v266 = vld [vmem:[%s1 + $0x28] sm:$0xff]
    %v267 = vld [vmem:[%s1 + $0x30] sm:$0xff]
    %v268 = vld [vmem:[%s1 + $0x38] sm:$0xff]
    %v269 = vld [vmem:[%s1 + $0x40] sm:$0xff]
    %v270 = vld [vmem:[%s1 + $0x48] sm:$0xff]
    %v271 = vld [vmem:[%s1 + $0x50] sm:$0xff]
    %v272 = vld [vmem:[%s1 + $0x58] sm:$0xff]
    %v273 = vld [vmem:[%s1 + $0x60] sm:$0xff]
    %v274 = vld [vmem:[%s1 + $0x68] sm:$0xff]
    %v275 = vld [vmem:[%s1 + $0x70] sm:$0xff]
    %v276 = vld [vmem:[%s1 + $0x78] sm:$0xff]
    %v277 = vld [vmem:[%s1 + $0x80] sm:$0xff]
    %v278 = vld [vmem:[%s1 + $0x88] sm:$0xff]
    %v279 = vld [vmem:[%s1 + $0x90] sm:$0xff]
    %v280 = vld [vmem:[%s1 + $0x98] sm:$0xff]
    %v281 = vld [vmem:[%s1 + $0xa0] sm:$0xff]
    %v282 = vld [vmem:[%s1 + $0xa8] sm:$0xff]
    %v283 = vld [vmem:[%s1 + $0xb0] sm:$0xff]
    %v284 = vld [vmem:[%s1 + $0xb8] sm:$0xff]
    %v285 = vld [vmem:[%s1 + $0xc0] sm:$0xff]
    %v286 = vld [vmem:[%s1 + $0xc8] sm:$0xff]
    %v287 = vld [vmem:[%s1 + $0xd0] sm:$0xff]
    %v288 = vld [vmem:[%s1 + $0xd8] sm:$0xff]
    %v289 = vld [vmem:[%s1 + $0xe0] sm:$0xff]
    %v290 = vld [vmem:[%s1 + $0xe8] sm:$0xff]
    %v291 = vld [vmem:[%s1 + $0xf0] sm:$0xff]
    %v292 = vld [vmem:[%s1 + $0xf8] sm:$0xff]
    %v293 = vld [vmem:[%s1 + $0x100] sm:$0xff]
    %v294 = vld [vmem:[%s1 + $0x108] sm:$0xff]
    %v295 = vld [vmem:[%s1 + $0x110] sm:$0xff]
    %v296 = vld [vmem:[%s1 + $0x118] sm:$0xff]
    %v297 = vld [vmem:[%s1 + $0x120] sm:$0xff]
    %v298 = vld [vmem:[%s1 + $0x128] sm:$0xff]
    %v299 = vld [vmem:[%s1 + $0x130] sm:$0xff]
    %v300 = vld [vmem:[%s1 + $0x138] sm:$0xff]
    %v301 = vld [vmem:[%s1 + $0x140] sm:$0xff]
    %v302 = vld [vmem:[%s1 + $0x148] sm:$0xff]
    %v303 = vld [vmem:[%s1 + $0x150] sm:$0xff]
    %v304 = vld [vmem:[%s1 + $0x158] sm:$0xff]
    %v305 = vld [vmem:[%s1 + $0x160] sm:$0xff]
    %v306 = vld [vmem:[%s1 + $0x168] sm:$0xff]
    %v307 = vld [vmem:[%s1 + $0x170] sm:$0xff]
    %v308 = vld [vmem:[%s1 + $0x178] sm:$0xff]
    %v309 = vld [vmem:[%s1 + $0x180] sm:$0xff]
    %v310 = vld [vmem:[%s1 + $0x188] sm:$0xff]
    %v311 = vld [vmem:[%s1 + $0x190] sm:$0xff]
    %v312 = vld [vmem:[%s1 + $0x198] sm:$0xff]
    %v313 = vld [vmem:[%s1 + $0x1a0] sm:$0xff]
    %v314 = vld [vmem:[%s1 + $0x1a8] sm:$0xff]
    %v315 = vld [vmem:[%s1 + $0x1b0] sm:$0xff]
    %v316 = vld [vmem:[%s1 + $0x1b8] sm:$0xff]
    %v317 = vld [vmem:[%s1 + $0x1c0] sm:$0xff]
    %v318 = vld [vmem:[%s1 + $0x1c8] sm:$0xff]
    %v319 = vld [vmem:[%s1 + $0x1d0] sm:$0xff]
    %v320 = vld [vmem:[%s1 + $0x1d8] sm:$0xff]
    %v321 = vld [vmem:[%s1 + $0x1e0] sm:$0xff]
    %v322 = vld [vmem:[%s1 + $0x1e8] sm:$0xff]
    %v323 = vld [vmem:[%s1 + $0x1f0] sm:$0xff]
    %v324 = vld [vmem:[%s1 + $0x1f8] sm:$0xff]
    %v325 = vld [vmem:[%s1 + $0x200] sm:$0xff]
    %v326 = vld [vmem:[%s1 + $0x208] sm:$0xff]
    %v327 = vld [vmem:[%s1 + $0x210] sm:$0xff]
    %v328 = vld [vmem:[%s1 + $0x218] sm:$0xff]
    %v329 = vld [vmem:[%s1 + $0x220] sm:$0xff]
    %v330 = vld [vmem:[%s1 + $0x228] sm:$0xff]
    %v331 = vld [vmem:[%s1 + $0x230] sm:$0xff]
    %v332 = vld [vmem:[%s1 + $0x238] sm:$0xff]
    %v333 = vld [vmem:[%s1 + $0x240] sm:$0xff]
    %v334 = vld [vmem:[%s1 + $0x248] sm:$0xff]
    %v335 = vld [vmem:[%s1 + $0x250] sm:$0xff]
    %v336 = vld [vmem:[%s1 + $0x258] sm:$0xff]
    %v337 = vld [vmem:[%s1 + $0x260] sm:$0xff]
    %v338 = vld [vmem:[%s1 + $0x268] sm:$0xff]
    %v339 = vld [vmem:[%s1 + $0x270] sm:$0xff]
    %v340 = vld [vmem:[%s1 + $0x278] sm:$0xff]
    %v341 = vld [vmem:[%s1 + $0x280] sm:$0xff]
    %v342 = vld [vmem:[%s1 + $0x288] sm:$0xff]
    %v343 = vld [vmem:[%s1 + $0x290] sm:$0xff]
    %v344 = vld [vmem:[%s1 + $0x298] sm:$0xff]
    %v345 = vld [vmem:[%s1 + $0x2a0] sm:$0xff]
    %v346 = vld [vmem:[%s1 + $0x2a8] sm:$0xff]
    %v347 = vld [vmem:[%s1 + $0x2b0] sm:$0xff]
    %v348 = vld [vmem:[%s1 + $0x2b8] sm:$0xff]
    %v349 = vld [vmem:[%s1 + $0x2c0] sm:$0xff]
    %v350 = vld [vmem:[%s1 + $0x2c8] sm:$0xff]
    %v351 = vld [vmem:[%s1 + $0x2d0] sm:$0xff]
    %v352 = vld [vmem:[%s1 + $0x2d8] sm:$0xff]
    %v353 = vld [vmem:[%s1 + $0x2e0] sm:$0xff]
    %v354 = vld [vmem:[%s1 + $0x2e8] sm:$0xff]
    %v355 = vld [vmem:[%s1 + $0x2f0] sm:$0xff]
    %v356 = vld [vmem:[%s1 + $0x2f8] sm:$0xff]
    %v357 = vld [vmem:[%s1 + $0x300] sm:$0xff]
    %v358 = vld [vmem:[%s1 + $0x308] sm:$0xff]
    %v359 = vld [vmem:[%s1 + $0x310] sm:$0xff]
    %v360 = vld [vmem:[%s1 + $0x318] sm:$0xff]
    %v361 = vld [vmem:[%s1 + $0x320] sm:$0xff]
    %v362 = vld [vmem:[%s1 + $0x328] sm:$0xff]
    %v363 = vld [vmem:[%s1 + $0x330] sm:$0xff]
    %v364 = vld [vmem:[%s1 + $0x338] sm:$0xff]
    %v365 = vld [vmem:[%s1 + $0x340] sm:$0xff]
    %v366 = vld [vmem:[%s1 + $0x348] sm:$0xff]
    %v367 = vld [vmem:[%s1 + $0x350] sm:$0xff]
    %v368 = vld [vmem:[%s1 + $0x358] sm:$0xff]
    %v369 = vld [vmem:[%s1 + $0x360] sm:$0xff]
    %v370 = vld [vmem:[%s1 + $0x368] sm:$0xff]
    %v371 = vld [vmem:[%s1 + $0x370] sm:$0xff]
    %v372 = vld [vmem:[%s1 + $0x378] sm:$0xff]
    %v373 = vld [vmem:[%s1 + $0x380] sm:$0xff]
    %v374 = vld [vmem:[%s1 + $0x388] sm:$0xff]
    %v375 = vld [vmem:[%s1 + $0x390] sm:$0xff]
    %v376 = vld [vmem:[%s1 + $0x398] sm:$0xff]
    %v377 = vld [vmem:[%s1 + $0x3a0] sm:$0xff]
    %v378 = vld [vmem:[%s1 + $0x3a8] sm:$0xff]
    %v379 = vld [vmem:[%s1 + $0x3b0] sm:$0xff]
    %v380 = vld [vmem:[%s1 + $0x3b8] sm:$0xff]
    %v381 = vld [vmem:[%s1 + $0x3c0] sm:$0xff]
    %v382 = vld [vmem:[%s1 + $0x3c8] sm:$0xff]
    %v383 = vld [vmem:[%s1 + $0x3d0] sm:$0xff]
    %v384 = vld [vmem:[%s1 + $0x3d8] sm:$0xff]
    %v385 = vld [vmem:[%s1 + $0x3e0] sm:$0xff]
    %v386 = vld [vmem:[%s1 + $0x3e8] sm:$0xff]
    %v387 = vld [vmem:[%s1 + $0x3f0] sm:$0xff]
    %v388 = vld [vmem:[%s1 + $0x3f8] sm:$0xff]
    %v389 = vld [vmem:[%s1 + $0x400] sm:$0xff]
    %v390 = vld [vmem:[%s1 + $0x408] sm:$0xff]
    %v391 = vld [vmem:[%s1 + $0x410] sm:$0xff]
    %v392 = vld [vmem:[%s1 + $0x418] sm:$0xff]
    %v393 = vld [vmem:[%s1 + $0x420] sm:$0xff]
    %v394 = vld [vmem:[%s1 + $0x428] sm:$0xff]
    %v395 = vld [vmem:[%s1 + $0x430] sm:$0xff]
    %v396 = vld [vmem:[%s1 + $0x438] sm:$0xff]
    %v397 = vld [vmem:[%s1 + $0x440] sm:$0xff]
    %v398 = vld [vmem:[%s1 + $0x448] sm:$0xff]
    %v399 = vld [vmem:[%s1 + $0x450] sm:$0xff]
    %v400 = vld [vmem:[%s1 + $0x458] sm:$0xff]
    %v401 = vld [vmem:[%s1 + $0x460] sm:$0xff]
    %v402 = vld [vmem:[%s1 + $0x468] sm:$0xff]
    %v403 = vld [vmem:[%s1 + $0x470] sm:$0xff]
    %v404 = vld [vmem:[%s1 + $0x478] sm:$0xff]
    %v405 = vld [vmem:[%s1 + $0x480] sm:$0xff]
    %v406 = vld [vmem:[%s1 + $0x488] sm:$0xff]
    %v407 = vld [vmem:[%s1 + $0x490] sm:$0xff]
    %v408 = vld [vmem:[%s1 + $0x498] sm:$0xff]
    %v409 = vld [vmem:[%s1 + $0x4a0] sm:$0xff]
    %v410 = vld [vmem:[%s1 + $0x4a8] sm:$0xff]
    %v411 = vld [vmem:[%s1 + $0x4b0] sm:$0xff]
    %v412 = vld [vmem:[%s1 + $0x4b8] sm:$0xff]
    %v413 = vld [vmem:[%s1 + $0x4c0] sm:$0xff]
    %v414 = vld [vmem:[%s1 + $0x4c8] sm:$0xff]
    %v415 = vld [vmem:[%s1 + $0x4d0] sm:$0xff]
    %v416 = vld [vmem:[%s1 + $0x4d8] sm:$0xff]
    %v417 = vld [vmem:[%s1 + $0x4e0] sm:$0xff]
    %v418 = vld [vmem:[%s1 + $0x4e8] sm:$0xff]
    %v419 = vld [vmem:[%s1 + $0x4f0] sm:$0xff]
    %v420 = vld [vmem:[%s1 + $0x4f8] sm:$0xff]
    %v421 = vld [vmem:[%s1 + $0x500] sm:$0xff]
    %v422 = vld [vmem:[%s1 + $0x508] sm:$0xff]
    %v423 = vld [vmem:[%s1 + $0x510] sm:$0xff]
    %v424 = vld [vmem:[%s1 + $0x518] sm:$0xff]
    %v425 = vld [vmem:[%s1 + $0x520] sm:$0xff]
    %v426 = vld [vmem:[%s1 + $0x528] sm:$0xff]
    %v427 = vld [vmem:[%s1 + $0x530] sm:$0xff]
    %v428 = vld [vmem:[%s1 + $0x538] sm:$0xff]
    %v429 = vld [vmem:[%s1 + $0x540] sm:$0xff]
    %v430 = vld [vmem:[%s1 + $0x548] sm:$0xff]
    %v431 = vld [vmem:[%s1 + $0x550] sm:$0xff]
    %v432 = vld [vmem:[%s1 + $0x558] sm:$0xff]
    %v433 = vld [vmem:[%s1 + $0x560] sm:$0xff]
    %v434 = vld [vmem:[%s1 + $0x568] sm:$0xff]
    %v435 = vld [vmem:[%s1 + $0x570] sm:$0xff]
    %v436 = vld [vmem:[%s1 + $0x578] sm:$0xff]
    %v437 = vld [vmem:[%s1 + $0x580] sm:$0xff]
    %v438 = vld [vmem:[%s1 + $0x588] sm:$0xff]
    %v439 = vld [vmem:[%s1 + $0x590] sm:$0xff]
    %v440 = vld [vmem:[%s1 + $0x598] sm:$0xff]
    %v441 = vld [vmem:[%s1 + $0x5a0] sm:$0xff]
    %v442 = vld [vmem:[%s1 + $0x5a8] sm:$0xff]
    %v443 = vld [vmem:[%s1 + $0x5b0] sm:$0xff]
    %v444 = vld [vmem:[%s1 + $0x5b8] sm:$0xff]
    %v445 = vld [vmem:[%s1 + $0x5c0] sm:$0xff]
    %v446 = vld [vmem:[%s1 + $0x5c8] sm:$0xff]
    %v447 = vld [vmem:[%s1 + $0x5d0] sm:$0xff]
    %v448 = vld [vmem:[%s1 + $0x5d8] sm:$0xff]
    %v449 = vld [vmem:[%s1 + $0x5e0] sm:$0xff]
    %v450 = vld [vmem:[%s1 + $0x5e8] sm:$0xff]
    %v451 = vld [vmem:[%s1 + $0x5f0] sm:$0xff]
    %v452 = vld [vmem:[%s1 + $0x5f8] sm:$0xff]
    %v453 = vld [vmem:[%s1 + $0x600] sm:$0xff]
    %v454 = vld [vmem:[%s1 + $0x608] sm:$0xff]
    %v455 = vld [vmem:[%s1 + $0x610] sm:$0xff]
    %v456 = vld [vmem:[%s1 + $0x618] sm:$0xff]
    %v653 = vunpack.c.l.b16 %v261
    %v654 = vunpack.c.h.b16 %v261
    %v655 = vunpack.c.l.b16 %v262
    %v656 = vunpack.c.h.b16 %v262
    %v657 = vunpack.c.l.b16 %v263
    %v658 = vunpack.c.h.b16 %v263
    %v659 = vunpack.c.l.b16 %v264
    %v660 = vunpack.c.h.b16 %v264
    %v661 = vunpack.c.l.b16 %v265
    %v662 = vunpack.c.h.b16 %v265
    %v663 = vunpack.c.l.b16 %v266
    %v664 = vunpack.c.h.b16 %v266
    %v665 = vunpack.c.l.b16 %v267
    %v666 = vunpack.c.h.b16 %v267
    %v667 = vunpack.c.l.b16 %v268
    %v668 = vunpack.c.h.b16 %v268
    %v669 = vunpack.c.l.b16 %v269
    %v670 = vunpack.c.h.b16 %v269
    %v671 = vunpack.c.l.b16 %v270
    %v672 = vunpack.c.h.b16 %v270
    %v673 = vunpack.c.l.b16 %v271
    %v674 = vunpack.c.h.b16 %v271
    %v675 = vunpack.c.l.b16 %v272
    %v676 = vunpack.c.h.b16 %v272
    %v677 = vunpack.c.l.b16 %v273
    %v678 = vunpack.c.h.b16 %v273
    %v679 = vunpack.c.l.b16 %v274
    %v680 = vunpack.c.h.b16 %v274
    %v681 = vunpack.c.l.b16 %v275
    %v682 = vunpack.c.h.b16 %v275
    %v683 = vunpack.c.l.b16 %v276
    %v684 = vunpack.c.h.b16 %v276
    %v685 = vunpack.c.l.b16 %v277
    %v686 = vunpack.c.h.b16 %v277
    %v687 = vunpack.c.l.b16 %v278
    %v688 = vunpack.c.h.b16 %v278
    %v689 = vunpack.c.l.b16 %v279
    %v690 = vunpack.c.h.b16 %v279
    %v691 = vunpack.c.l.b16 %v280
    %v692 = vunpack.c.h.b16 %v280
    %v693 = vunpack.c.l.b16 %v281
    %v694 = vunpack.c.h.b16 %v281
    %v695 = vunpack.c.l.b16 %v282
    %v696 = vunpack.c.h.b16 %v282
    %v697 = vunpack.c.l.b16 %v283
    %v698 = vunpack.c.h.b16 %v283
    %v699 = vunpack.c.l.b16 %v284
    %v700 = vunpack.c.h.b16 %v284
    %v701 = vunpack.c.l.b16 %v285
    %v702 = vunpack.c.h.b16 %v285
    %v703 = vunpack.c.l.b16 %v286
    %v704 = vunpack.c.h.b16 %v286
    %v705 = vunpack.c.l.b16 %v287
    %v706 = vunpack.c.h.b16 %v287
    %v707 = vunpack.c.l.b16 %v288
    %v708 = vunpack.c.h.b16 %v288
    %v709 = vunpack.c.l.b16 %v289
    %v710 = vunpack.c.h.b16 %v289
    %v711 = vunpack.c.l.b16 %v290
    %v712 = vunpack.c.h.b16 %v290
    %v713 = vunpack.c.l.b16 %v291
    %v714 = vunpack.c.h.b16 %v291
    %v715 = vunpack.c.l.b16 %v292
    %v716 = vunpack.c.h.b16 %v292
    %v717 = vunpack.c.l.b16 %v293
    %v718 = vunpack.c.h.b16 %v293
    %v719 = vunpack.c.l.b16 %v294
    %v720 = vunpack.c.h.b16 %v294
    %v721 = vunpack.c.l.b16 %v295
    %v722 = vunpack.c.h.b16 %v295
    %v723 = vunpack.c.l.b16 %v296
    %v724 = vunpack.c.h.b16 %v296
    %v725 = vunpack.c.l.b16 %v297
    %v726 = vunpack.c.h.b16 %v297
    %v727 = vunpack.c.l.b16 %v298
    %v728 = vunpack.c.h.b16 %v298
    %v729 = vunpack.c.l.b16 %v299
    %v730 = vunpack.c.h.b16 %v299
    %v731 = vunpack.c.l.b16 %v300
    %v732 = vunpack.c.h.b16 %v300
    %v733 = vunpack.c.l.b16 %v301
    %v734 = vunpack.c.h.b16 %v301
    %v735 = vunpack.c.l.b16 %v302
    %v736 = vunpack.c.h.b16 %v302
    %v737 = vunpack.c.l.b16 %v303
    %v738 = vunpack.c.h.b16 %v303
    %v739 = vunpack.c.l.b16 %v304
    %v740 = vunpack.c.h.b16 %v304
    %v741 = vunpack.c.l.b16 %v305
    %v742 = vunpack.c.h.b16 %v305
    %v743 = vunpack.c.l.b16 %v306
    %v744 = vunpack.c.h.b16 %v306
    %v745 = vunpack.c.l.b16 %v307
    %v746 = vunpack.c.h.b16 %v307
    %v747 = vunpack.c.l.b16 %v308
    %v748 = vunpack.c.h.b16 %v308
    %v749 = vunpack.c.l.b16 %v309
    %v750 = vunpack.c.h.b16 %v309
    %v751 = vunpack.c.l.b16 %v310
    %v752 = vunpack.c.h.b16 %v310
    %v753 = vunpack.c.l.b16 %v311
    %v754 = vunpack.c.h.b16 %v311
    %v755 = vunpack.c.l.b16 %v312
    %v756 = vunpack.c.h.b16 %v312
    %v757 = vunpack.c.l.b16 %v313
    %v758 = vunpack.c.h.b16 %v313
    %v759 = vunpack.c.l.b16 %v314
    %v760 = vunpack.c.h.b16 %v314
    %v761 = vunpack.c.l.b16 %v315
    %v762 = vunpack.c.h.b16 %v315
    %v763 = vunpack.c.l.b16 %v316
    %v764 = vunpack.c.h.b16 %v316
    %v765 = vunpack.c.l.b16 %v317
    %v766 = vunpack.c.h.b16 %v317
    %v767 = vunpack.c.l.b16 %v318
    %v768 = vunpack.c.h.b16 %v318
    %v769 = vunpack.c.l.b16 %v319
    %v770 = vunpack.c.h.b16 %v319
    %v771 = vunpack.c.l.b16 %v320
    %v772 = vunpack.c.h.b16 %v320
    %v773 = vunpack.c.l.b16 %v321
    %v774 = vunpack.c.h.b16 %v321
    %v775 = vunpack.c.l.b16 %v322
    %v776 = vunpack.c.h.b16 %v322
    %v777 = vunpack.c.l.b16 %v323
    %v778 = vunpack.c.h.b16 %v323
    %v779 = vunpack.c.l.b16 %v324
    %v780 = vunpack.c.h.b16 %v324
    %v781 = vunpack.c.l.b16 %v325
    %v782 = vunpack.c.h.b16 %v325
    %v783 = vunpack.c.l.b16 %v326
    %v784 = vunpack.c.h.b16 %v326
    %v785 = vunpack.c.l.b16 %v327
    %v786 = vunpack.c.h.b16 %v327
    %v787 = vunpack.c.l.b16 %v328
    %v788 = vunpack.c.h.b16 %v328
    %v789 = vunpack.c.l.b16 %v329
    %v790 = vunpack.c.h.b16 %v329
    %v791 = vunpack.c.l.b16 %v330
    %v792 = vunpack.c.h.b16 %v330
    %v793 = vunpack.c.l.b16 %v331
    %v794 = vunpack.c.h.b16 %v331
    %v795 = vunpack.c.l.b16 %v332
    %v796 = vunpack.c.h.b16 %v332
    %v797 = vunpack.c.l.b16 %v333
    %v798 = vunpack.c.h.b16 %v333
    %v799 = vunpack.c.l.b16 %v334
    %v800 = vunpack.c.h.b16 %v334
    %v801 = vunpack.c.l.b16 %v335
    %v802 = vunpack.c.h.b16 %v335
    %v803 = vunpack.c.l.b16 %v336
    %v804 = vunpack.c.h.b16 %v336
    %v805 = vunpack.c.l.b16 %v337
    %v806 = vunpack.c.h.b16 %v337
    %v807 = vunpack.c.l.b16 %v338
    %v808 = vunpack.c.h.b16 %v338
    %v809 = vunpack.c.l.b16 %v339
    %v810 = vunpack.c.h.b16 %v339
    %v811 = vunpack.c.l.b16 %v340
    %v812 = vunpack.c.h.b16 %v340
    %v813 = vunpack.c.l.b16 %v341
    %v814 = vunpack.c.h.b16 %v341
    %v815 = vunpack.c.l.b16 %v342
    %v816 = vunpack.c.h.b16 %v342
    %v817 = vunpack.c.l.b16 %v343
    %v818 = vunpack.c.h.b16 %v343
    %v819 = vunpack.c.l.b16 %v344
    %v820 = vunpack.c.h.b16 %v344
    %v821 = vunpack.c.l.b16 %v345
    %v822 = vunpack.c.h.b16 %v345
    %v823 = vunpack.c.l.b16 %v346
    %v824 = vunpack.c.h.b16 %v346
    %v825 = vunpack.c.l.b16 %v347
    %v826 = vunpack.c.h.b16 %v347
    %v827 = vunpack.c.l.b16 %v348
    %v828 = vunpack.c.h.b16 %v348
    %v829 = vunpack.c.l.b16 %v349
    %v830 = vunpack.c.h.b16 %v349
    %v831 = vunpack.c.l.b16 %v350
    %v832 = vunpack.c.h.b16 %v350
    %v833 = vunpack.c.l.b16 %v351
    %v834 = vunpack.c.h.b16 %v351
    %v835 = vunpack.c.l.b16 %v352
    %v836 = vunpack.c.h.b16 %v352
    %v837 = vunpack.c.l.b16 %v353
    %v838 = vunpack.c.h.b16 %v353
    %v839 = vunpack.c.l.b16 %v354
    %v840 = vunpack.c.h.b16 %v354
    %v841 = vunpack.c.l.b16 %v355
    %v842 = vunpack.c.h.b16 %v355
    %v843 = vunpack.c.l.b16 %v356
    %v844 = vunpack.c.h.b16 %v356
    %v845 = vunpack.c.l.b16 %v357
    %v846 = vunpack.c.h.b16 %v357
    %v847 = vunpack.c.l.b16 %v358
    %v848 = vunpack.c.h.b16 %v358
    %v849 = vunpack.c.l.b16 %v359
    %v850 = vunpack.c.h.b16 %v359
    %v851 = vunpack.c.l.b16 %v360
    %v852 = vunpack.c.h.b16 %v360
    %v853 = vunpack.c.l.b16 %v361
    %v854 = vunpack.c.h.b16 %v361
    %v855 = vunpack.c.l.b16 %v362
    %v856 = vunpack.c.h.b16 %v362
    %v857 = vunpack.c.l.b16 %v363
    %v858 = vunpack.c.h.b16 %v363
    %v859 = vunpack.c.l.b16 %v364
    %v860 = vunpack.c.h.b16 %v364
    %v861 = vunpack.c.l.b16 %v365
    %v862 = vunpack.c.h.b16 %v365
    %v863 = vunpack.c.l.b16 %v366
    %v864 = vunpack.c.h.b16 %v366
    %v865 = vunpack.c.l.b16 %v367
    %v866 = vunpack.c.h.b16 %v367
    %v867 = vunpack.c.l.b16 %v368
    %v868 = vunpack.c.h.b16 %v368
    %v869 = vunpack.c.l.b16 %v369
    %v870 = vunpack.c.h.b16 %v369
    %v871 = vunpack.c.l.b16 %v370
    %v872 = vunpack.c.h.b16 %v370
    %v873 = vunpack.c.l.b16 %v371
    %v874 = vunpack.c.h.b16 %v371
    %v875 = vunpack.c.l.b16 %v372
    %v876 = vunpack.c.h.b16 %v372
    %v877 = vunpack.c.l.b16 %v373
    %v878 = vunpack.c.h.b16 %v373
    %v879 = vunpack.c.l.b16 %v374
    %v880 = vunpack.c.h.b16 %v374
    %v881 = vunpack.c.l.b16 %v375
    %v882 = vunpack.c.h.b16 %v375
    %v883 = vunpack.c.l.b16 %v376
    %v884 = vunpack.c.h.b16 %v376
    %v885 = vunpack.c.l.b16 %v377
    %v886 = vunpack.c.h.b16 %v377
    %v887 = vunpack.c.l.b16 %v378
    %v888 = vunpack.c.h.b16 %v378
    %v889 = vunpack.c.l.b16 %v379
    %v890 = vunpack.c.h.b16 %v379
    %v891 = vunpack.c.l.b16 %v380
    %v892 = vunpack.c.h.b16 %v380
    %v893 = vunpack.c.l.b16 %v381
    %v894 = vunpack.c.h.b16 %v381
    %v895 = vunpack.c.l.b16 %v382
    %v896 = vunpack.c.h.b16 %v382
    %v897 = vunpack.c.l.b16 %v383
    %v898 = vunpack.c.h.b16 %v383
    %v899 = vunpack.c.l.b16 %v384
    %v900 = vunpack.c.h.b16 %v384
    %v901 = vunpack.c.l.b16 %v385
    %v902 = vunpack.c.h.b16 %v385
    %v903 = vunpack.c.l.b16 %v386
    %v904 = vunpack.c.h.b16 %v386
    %v905 = vunpack.c.l.b16 %v387
    %v906 = vunpack.c.h.b16 %v387
    %v907 = vunpack.c.l.b16 %v388
    %v908 = vunpack.c.h.b16 %v388
    %v909 = vunpack.c.l.b16 %v389
    %v910 = vunpack.c.h.b16 %v389
    %v911 = vunpack.c.l.b16 %v390
    %v912 = vunpack.c.h.b16 %v390
    %v913 = vunpack.c.l.b16 %v391
    %v914 = vunpack.c.h.b16 %v391
    %v915 = vunpack.c.l.b16 %v392
    %v916 = vunpack.c.h.b16 %v392
    %v917 = vunpack.c.l.b16 %v393
    %v918 = vunpack.c.h.b16 %v393
    %v919 = vunpack.c.l.b16 %v394
    %v920 = vunpack.c.h.b16 %v394
    %v921 = vunpack.c.l.b16 %v395
    %v922 = vunpack.c.h.b16 %v395
    %v923 = vunpack.c.l.b16 %v396
    %v924 = vunpack.c.h.b16 %v396
    %v925 = vunpack.c.l.b16 %v397
    %v926 = vunpack.c.h.b16 %v397
    %v927 = vunpack.c.l.b16 %v398
    %v928 = vunpack.c.h.b16 %v398
    %v929 = vunpack.c.l.b16 %v399
    %v930 = vunpack.c.h.b16 %v399
    %v931 = vunpack.c.l.b16 %v400
    %v932 = vunpack.c.h.b16 %v400
    %v933 = vunpack.c.l.b16 %v401
    %v934 = vunpack.c.h.b16 %v401
    %v935 = vunpack.c.l.b16 %v402
    %v936 = vunpack.c.h.b16 %v402
    %v937 = vunpack.c.l.b16 %v403
    %v938 = vunpack.c.h.b16 %v403
    %v939 = vunpack.c.l.b16 %v404
    %v940 = vunpack.c.h.b16 %v404
    %v941 = vunpack.c.l.b16 %v405
    %v942 = vunpack.c.h.b16 %v405
    %v943 = vunpack.c.l.b16 %v406
    %v944 = vunpack.c.h.b16 %v406
    %v945 = vunpack.c.l.b16 %v407
    %v946 = vunpack.c.h.b16 %v407
    %v947 = vunpack.c.l.b16 %v408
    %v948 = vunpack.c.h.b16 %v408
    %v949 = vunpack.c.l.b16 %v409
    %v950 = vunpack.c.h.b16 %v409
    %v951 = vunpack.c.l.b16 %v410
    %v952 = vunpack.c.h.b16 %v410
    %v953 = vunpack.c.l.b16 %v411
    %v954 = vunpack.c.h.b16 %v411
    %v955 = vunpack.c.l.b16 %v412
    %v956 = vunpack.c.h.b16 %v412
    %v957 = vunpack.c.l.b16 %v413
    %v958 = vunpack.c.h.b16 %v413
    %v959 = vunpack.c.l.b16 %v414
    %v960 = vunpack.c.h.b16 %v414
    %v961 = vunpack.c.l.b16 %v415
    %v962 = vunpack.c.h.b16 %v415
    %v963 = vunpack.c.l.b16 %v416
    %v964 = vunpack.c.h.b16 %v416
    %v965 = vunpack.c.l.b16 %v417
    %v966 = vunpack.c.h.b16 %v417
    %v967 = vunpack.c.l.b16 %v418
    %v968 = vunpack.c.h.b16 %v418
    %v969 = vunpack.c.l.b16 %v419
    %v970 = vunpack.c.h.b16 %v419
    %v971 = vunpack.c.l.b16 %v420
    %v972 = vunpack.c.h.b16 %v420
    %v973 = vunpack.c.l.b16 %v421
    %v974 = vunpack.c.h.b16 %v421
    %v975 = vunpack.c.l.b16 %v422
    %v976 = vunpack.c.h.b16 %v422
    %v977 = vunpack.c.l.b16 %v423
    %v978 = vunpack.c.h.b16 %v423
    %v979 = vunpack.c.l.b16 %v424
    %v980 = vunpack.c.h.b16 %v424
    %v981 = vunpack.c.l.b16 %v425
    %v982 = vunpack.c.h.b16 %v425
    %v983 = vunpack.c.l.b16 %v426
    %v984 = vunpack.c.h.b16 %v426
    %v985 = vunpack.c.l.b16 %v427
    %v986 = vunpack.c.h.b16 %v427
    %v987 = vunpack.c.l.b16 %v428
    %v988 = vunpack.c.h.b16 %v428
    %v989 = vunpack.c.l.b16 %v429
    %v990 = vunpack.c.h.b16 %v429
    %v991 = vunpack.c.l.b16 %v430
    %v992 = vunpack.c.h.b16 %v430
    %v993 = vunpack.c.l.b16 %v431
    %v994 = vunpack.c.h.b16 %v431
    %v995 = vunpack.c.l.b16 %v432
    %v996 = vunpack.c.h.b16 %v432
    %v997 = vunpack.c.l.b16 %v433
    %v998 = vunpack.c.h.b16 %v433
    %v999 = vunpack.c.l.b16 %v434
    %v1000 = vunpack.c.h.b16 %v434
    %v1001 = vunpack.c.l.b16 %v435
    %v1002 = vunpack.c.h.b16 %v435
    %v1003 = vunpack.c.l.b16 %v436
    %v1004 = vunpack.c.h.b16 %v436
    %v1005 = vunpack.c.l.b16 %v437
    %v1006 = vunpack.c.h.b16 %v437
    %v1007 = vunpack.c.l.b16 %v438
    %v1008 = vunpack.c.h.b16 %v438
    %v1009 = vunpack.c.l.b16 %v439
    %v1010 = vunpack.c.h.b16 %v439
    %v1011 = vunpack.c.l.b16 %v440
    %v1012 = vunpack.c.h.b16 %v440
    %v1013 = vunpack.c.l.b16 %v441
    %v1014 = vunpack.c.h.b16 %v441
    %v1015 = vunpack.c.l.b16 %v442
    %v1016 = vunpack.c.h.b16 %v442
    %v1017 = vunpack.c.l.b16 %v443
    %v1018 = vunpack.c.h.b16 %v443
    %v1019 = vunpack.c.l.b16 %v444
    %v1020 = vunpack.c.h.b16 %v444
    %v1021 = vunpack.c.l.b16 %v445
    %v1022 = vunpack.c.h.b16 %v445
    %v1023 = vunpack.c.l.b16 %v446
    %v1024 = vunpack.c.h.b16 %v446
    %v1025 = vunpack.c.l.b16 %v447
    %v1026 = vunpack.c.h.b16 %v447
    %v1027 = vunpack.c.l.b16 %v448
    %v1028 = vunpack.c.h.b16 %v448
    %v1029 = vunpack.c.l.b16 %v449
    %v1030 = vunpack.c.h.b16 %v449
    %v1031 = vunpack.c.l.b16 %v450
    %v1032 = vunpack.c.h.b16 %v450
    %v1033 = vunpack.c.l.b16 %v451
    %v1034 = vunpack.c.h.b16 %v451
    %v1035 = vunpack.c.l.b16 %v452
    %v1036 = vunpack.c.h.b16 %v452
    %v1037 = vunpack.c.l.b16 %v453
    %v1038 = vunpack.c.h.b16 %v453
    %v1039 = vunpack.c.l.b16 %v454
    %v1040 = vunpack.c.h.b16 %v454
    %v1041 = vunpack.c.l.b16 %v455
    %v1042 = vunpack.c.h.b16 %v455
    %v1043 = vunpack.c.l.b16 %v456
    %v1044 = vunpack.c.h.b16 %v456
    %v1045 = vpack.c.b16 %v657, %v653
    %v1046 = vpack.c.b16 %v658, %v654
    %v1047 = vpack.c.b16 %v659, %v655
    %v1048 = vpack.c.b16 %v660, %v656
    %v1049 = vpack.c.b16 %v665, %v661
    %v1050 = vpack.c.b16 %v666, %v662
    %v1051 = vpack.c.b16 %v667, %v663
    %v1052 = vpack.c.b16 %v668, %v664
    %v1053 = vpack.c.b16 %v673, %v669
    %v1054 = vpack.c.b16 %v674, %v670
    %v1055 = vpack.c.b16 %v675, %v671
    %v1056 = vpack.c.b16 %v676, %v672
    %v1057 = vpack.c.b16 %v681, %v677
    %v1058 = vpack.c.b16 %v682, %v678
    %v1059 = vpack.c.b16 %v683, %v679
    %v1060 = vpack.c.b16 %v684, %v680
    %v1061 = vpack.c.b16 %v689, %v685
    %v1062 = vpack.c.b16 %v690, %v686
    %v1063 = vpack.c.b16 %v691, %v687
    %v1064 = vpack.c.b16 %v692, %v688
    %v1065 = vpack.c.b16 %v697, %v693
    %v1066 = vpack.c.b16 %v698, %v694
    %v1067 = vpack.c.b16 %v699, %v695
    %v1068 = vpack.c.b16 %v700, %v696
    %v1069 = vpack.c.b16 %v705, %v701
    %v1070 = vpack.c.b16 %v706, %v702
    %v1071 = vpack.c.b16 %v707, %v703
    %v1072 = vpack.c.b16 %v708, %v704
    %v1073 = vpack.c.b16 %v713, %v709
    %v1074 = vpack.c.b16 %v714, %v710
    %v1075 = vpack.c.b16 %v715, %v711
    %v1076 = vpack.c.b16 %v716, %v712
    %v1077 = vpack.c.b16 %v721, %v717
    %v1078 = vpack.c.b16 %v722, %v718
    %v1079 = vpack.c.b16 %v723, %v719
    %v1080 = vpack.c.b16 %v724, %v720
    %v1081 = vpack.c.b16 %v729, %v725
    %v1082 = vpack.c.b16 %v730, %v726
    %v1083 = vpack.c.b16 %v731, %v727
    %v1084 = vpack.c.b16 %v732, %v728
    %v1085 = vpack.c.b16 %v737, %v733
    %v1086 = vpack.c.b16 %v738, %v734
    %v1087 = vpack.c.b16 %v739, %v735
    %v1088 = vpack.c.b16 %v740, %v736
    %v1089 = vpack.c.b16 %v745, %v741
    %v1090 = vpack.c.b16 %v746, %v742
    %v1091 = vpack.c.b16 %v747, %v743
    %v1092 = vpack.c.b16 %v748, %v744
    %v1093 = vpack.c.b16 %v753, %v749
    %v1094 = vpack.c.b16 %v754, %v750
    %v1095 = vpack.c.b16 %v755, %v751
    %v1096 = vpack.c.b16 %v756, %v752
    %v1097 = vpack.c.b16 %v761, %v757
    %v1098 = vpack.c.b16 %v762, %v758
    %v1099 = vpack.c.b16 %v763, %v759
    %v1100 = vpack.c.b16 %v764, %v760
    %v1101 = vpack.c.b16 %v769, %v765
    %v1102 = vpack.c.b16 %v770, %v766
    %v1103 = vpack.c.b16 %v771, %v767
    %v1104 = vpack.c.b16 %v772, %v768
    %v1105 = vpack.c.b16 %v777, %v773
    %v1106 = vpack.c.b16 %v778, %v774
    %v1107 = vpack.c.b16 %v779, %v775
    %v1108 = vpack.c.b16 %v780, %v776
    %v1109 = vpack.c.b16 %v785, %v781
    %v1110 = vpack.c.b16 %v786, %v782
    %v1111 = vpack.c.b16 %v787, %v783
    %v1112 = vpack.c.b16 %v788, %v784
    %v1113 = vpack.c.b16 %v793, %v789
    %v1114 = vpack.c.b16 %v794, %v790
    %v1115 = vpack.c.b16 %v795, %v791
    %v1116 = vpack.c.b16 %v796, %v792
    %v1117 = vpack.c.b16 %v801, %v797
    %v1118 = vpack.c.b16 %v802, %v798
    %v1119 = vpack.c.b16 %v803, %v799
    %v1120 = vpack.c.b16 %v804, %v800
    %v1121 = vpack.c.b16 %v809, %v805
    %v1122 = vpack.c.b16 %v810, %v806
    %v1123 = vpack.c.b16 %v811, %v807
    %v1124 = vpack.c.b16 %v812, %v808
    %v1125 = vpack.c.b16 %v817, %v813
    %v1126 = vpack.c.b16 %v818, %v814
    %v1127 = vpack.c.b16 %v819, %v815
    %v1128 = vpack.c.b16 %v820, %v816
    %v1129 = vpack.c.b16 %v825, %v821
    %v1130 = vpack.c.b16 %v826, %v822
    %v1131 = vpack.c.b16 %v827, %v823
    %v1132 = vpack.c.b16 %v828, %v824
    %v1133 = vpack.c.b16 %v833, %v829
    %v1134 = vpack.c.b16 %v834, %v830
    %v1135 = vpack.c.b16 %v835, %v831
    %v1136 = vpack.c.b16 %v836, %v832
    %v1137 = vpack.c.b16 %v841, %v837
    %v1138 = vpack.c.b16 %v842, %v838
    %v1139 = vpack.c.b16 %v843, %v839
    %v1140 = vpack.c.b16 %v844, %v840
    %v1141 = vpack.c.b16 %v849, %v845
    %v1142 = vpack.c.b16 %v850, %v846
    %v1143 = vpack.c.b16 %v851, %v847
    %v1144 = vpack.c.b16 %v852, %v848
    %v1145 = vpack.c.b16 %v857, %v853
    %v1146 = vpack.c.b16 %v858, %v854
    %v1147 = vpack.c.b16 %v859, %v855
    %v1148 = vpack.c.b16 %v860, %v856
    %v1149 = vpack.c.b16 %v865, %v861
    %v1150 = vpack.c.b16 %v866, %v862
    %v1151 = vpack.c.b16 %v867, %v863
    %v1152 = vpack.c.b16 %v868, %v864
    %v1153 = vpack.c.b16 %v873, %v869
    %v1154 = vpack.c.b16 %v874, %v870
    %v1155 = vpack.c.b16 %v875, %v871
    %v1156 = vpack.c.b16 %v876, %v872
    %v1157 = vpack.c.b16 %v881, %v877
    %v1158 = vpack.c.b16 %v882, %v878
    %v1159 = vpack.c.b16 %v883, %v879
    %v1160 = vpack.c.b16 %v884, %v880
    %v1161 = vpack.c.b16 %v889, %v885
    %v1162 = vpack.c.b16 %v890, %v886
    %v1163 = vpack.c.b16 %v891, %v887
    %v1164 = vpack.c.b16 %v892, %v888
    %v1165 = vpack.c.b16 %v897, %v893
    %v1166 = vpack.c.b16 %v898, %v894
    %v1167 = vpack.c.b16 %v899, %v895
    %v1168 = vpack.c.b16 %v900, %v896
    %v1169 = vpack.c.b16 %v905, %v901
    %v1170 = vpack.c.b16 %v906, %v902
    %v1171 = vpack.c.b16 %v907, %v903
    %v1172 = vpack.c.b16 %v908, %v904
    %v1173 = vpack.c.b16 %v913, %v909
    %v1174 = vpack.c.b16 %v914, %v910
    %v1175 = vpack.c.b16 %v915, %v911
    %v1176 = vpack.c.b16 %v916, %v912
    %v1177 = vpack.c.b16 %v921, %v917
    %v1178 = vpack.c.b16 %v922, %v918
    %v1179 = vpack.c.b16 %v923, %v919
    %v1180 = vpack.c.b16 %v924, %v920
    %v1181 = vpack.c.b16 %v929, %v925
    %v1182 = vpack.c.b16 %v930, %v926
    %v1183 = vpack.c.b16 %v931, %v927
    %v1184 = vpack.c.b16 %v932, %v928
    %v1185 = vpack.c.b16 %v937, %v933
    %v1186 = vpack.c.b16 %v938, %v934
    %v1187 = vpack.c.b16 %v939, %v935
    %v1188 = vpack.c.b16 %v940, %v936
    %v1189 = vpack.c.b16 %v945, %v941
    %v1190 = vpack.c.b16 %v946, %v942
    %v1191 = vpack.c.b16 %v947, %v943
    %v1192 = vpack.c.b16 %v948, %v944
    %v1193 = vpack.c.b16 %v953, %v949
    %v1194 = vpack.c.b16 %v954, %v950
    %v1195 = vpack.c.b16 %v955, %v951
    %v1196 = vpack.c.b16 %v956, %v952
    %v1197 = vpack.c.b16 %v961, %v957
    %v1198 = vpack.c.b16 %v962, %v958
    %v1199 = vpack.c.b16 %v963, %v959
    %v1200 = vpack.c.b16 %v964, %v960
    %v1201 = vpack.c.b16 %v969, %v965
    %v1202 = vpack.c.b16 %v970, %v966
    %v1203 = vpack.c.b16 %v971, %v967
    %v1204 = vpack.c.b16 %v972, %v968
    %v1205 = vpack.c.b16 %v977, %v973
    %v1206 = vpack.c.b16 %v978, %v974
    %v1207 = vpack.c.b16 %v979, %v975
    %v1208 = vpack.c.b16 %v980, %v976
    %v1209 = vpack.c.b16 %v985, %v981
    %v1210 = vpack.c.b16 %v986, %v982
    %v1211 = vpack.c.b16 %v987, %v983
    %v1212 = vpack.c.b16 %v988, %v984
    %v1213 = vpack.c.b16 %v993, %v989
    %v1214 = vpack.c.b16 %v994, %v990
    %v1215 = vpack.c.b16 %v995, %v991
    %v1216 = vpack.c.b16 %v996, %v992
    %v1217 = vpack.c.b16 %v1001, %v997
    %v1218 = vpack.c.b16 %v1002, %v998
    %v1219 = vpack.c.b16 %v1003, %v999
    %v1220 = vpack.c.b16 %v1004, %v1000
    %v1221 = vpack.c.b16 %v1009, %v1005
    %v1222 = vpack.c.b16 %v1010, %v1006
    %v1223 = vpack.c.b16 %v1011, %v1007
    %v1224 = vpack.c.b16 %v1012, %v1008
    %v1225 = vpack.c.b16 %v1017, %v1013
    %v1226 = vpack.c.b16 %v1018, %v1014
    %v1227 = vpack.c.b16 %v1019, %v1015
    %v1228 = vpack.c.b16 %v1020, %v1016
    %v1229 = vpack.c.b16 %v1025, %v1021
    %v1230 = vpack.c.b16 %v1026, %v1022
    %v1231 = vpack.c.b16 %v1027, %v1023
    %v1232 = vpack.c.b16 %v1028, %v1024
    %v1233 = vpack.c.b16 %v1033, %v1029
    %v1234 = vpack.c.b16 %v1034, %v1030
    %v1235 = vpack.c.b16 %v1035, %v1031
    %v1236 = vpack.c.b16 %v1036, %v1032
    %v1237 = vpack.c.b16 %v1041, %v1037
    %v1238 = vpack.c.b16 %v1042, %v1038
    %v1239 = vpack.c.b16 %v1043, %v1039
    %v1240 = vpack.c.b16 %v1044, %v1040
    %vm1437 = vcmask 130048
    %v1439 = vsel %vm1437, %v211, 0
    %v1442 = vsel %vm1437, %v218, 0
    %v1445 = vsel %vm1437, %v225, 0
    %v1448 = vsel %vm1437, %v232, 0
    %v1451 = vsel %vm1437, %v239, 0
    %v1454 = vsel %vm1437, %v246, 0
    %v1457 = vsel %vm1437, %v253, 0
    %v1460 = vsel %vm1437, %v260, 0
    %1462 = vmatprep.subr.bf16.mxu0 %v1046
    %1463 = vmatpush1.bf16.msra.mxu0 %v1045
    %1464 = vmatprep.subr.bf16.mxu0 %v1050
    %1465 = vmatpush1.bf16.msra.mxu0 %v1049
    %1466 = vmatprep.subr.bf16.mxu0 %v1054
    %1467 = vmatpush1.bf16.msra.mxu0 %v1053
    %1468 = vmatprep.subr.bf16.mxu0 %v1058
    %1469 = vmatpush1.bf16.msra.mxu0 %v1057
    %1470 = vmatprep.subr.bf16.mxu0 %v1062
    %1471 = vmatpush1.bf16.msra.mxu0 %v1061
    %1472 = vmatprep.subr.bf16.mxu0 %v1066
    %1473 = vmatpush1.bf16.msra.mxu0 %v1065
    %1474 = vmatprep.subr.bf16.mxu0 %v1070
    %1475 = vmatpush1.bf16.msra.mxu0 %v1069
    %1476 = vmatprep.subr.bf16.mxu0 %v1074
    %1477 = vmatpush1.bf16.msra.mxu0 %v1073
    %1478 = vmatprep.subr.bf16.mxu0 %v1078
    %1479 = vmatpush1.bf16.msra.mxu0 %v1077
    %1480 = vmatprep.subr.bf16.mxu0 %v1082
    %1481 = vmatpush1.bf16.msra.mxu0 %v1081
    %1482 = vmatprep.subr.bf16.mxu0 %v1086
    %1483 = vmatpush1.bf16.msra.mxu0 %v1085
    %1484 = vmatprep.subr.bf16.mxu0 %v1090
    %1485 = vmatpush1.bf16.msra.mxu0 %v1089
    %1486 = vmatprep.subr.bf16.mxu0 %v1094
    %1487 = vmatpush1.bf16.msra.mxu0 %v1093
    %1488 = vmatprep.subr.bf16.mxu0 %v1098
    %1489 = vmatpush1.bf16.msra.mxu0 %v1097
    %1490 = vmatprep.subr.bf16.mxu0 %v1102
    %1491 = vmatpush1.bf16.msra.mxu0 %v1101
    %1492 = vmatprep.subr.bf16.mxu0 %v1106
    %1493 = vmatpush1.bf16.msra.mxu0 %v1105
    %1494 = vmatprep.mubr.bf16.mxu0 %v206
    %1495 = vmatmul.mubr.bf16.gmra.mrb[0].mxu0 %v205
    %v1496 = vpop.f32.mrb[0].mxu0
    %v1497 = vadd.f32 0.0, %v1496
    %v1498 = vpop.f32.mrb[0].mxu0
    %v1499 = vadd.f32 0.0, %v1498
    %v1500 = vpop.f32.mrb[0].mxu0
    %v1501 = vadd.f32 0.0, %v1500
    %v1502 = vpop.f32.mrb[0].mxu0
    %v1503 = vadd.f32 0.0, %v1502
    %1504 = vmatprep.mubr.bf16.mxu0 %v213
    %1505 = vmatmul.mubr.bf16.gmra.mrb[0].mxu0 %v212
    %v1506 = vpop.f32.mrb[0].mxu0
    %v1507 = vadd.f32 0.0, %v1506
    %v1508 = vpop.f32.mrb[0].mxu0
    %v1509 = vadd.f32 0.0, %v1508
    %v1510 = vpop.f32.mrb[0].mxu0
    %v1511 = vadd.f32 0.0, %v1510
    %v1512 = vpop.f32.mrb[0].mxu0
    %v1513 = vadd.f32 0.0, %v1512
    %1514 = vmatprep.mubr.bf16.mxu0 %v220
    %1515 = vmatmul.mubr.bf16.gmra.mrb[0].mxu0 %v219
    %v1516 = vpop.f32.mrb[0].mxu0
    %v1517 = vadd.f32 0.0, %v1516
    %v1518 = vpop.f32.mrb[0].mxu0
    %v1519 = vadd.f32 0.0, %v1518
    %v1520 = vpop.f32.mrb[0].mxu0
    %v1521 = vadd.f32 0.0, %v1520
    %v1522 = vpop.f32.mrb[0].mxu0
    %v1523 = vadd.f32 0.0, %v1522
    %1524 = vmatprep.mubr.bf16.mxu0 %v227
    %1525 = vmatmul.mubr.bf16.gmra.mrb[0].mxu0 %v226
    %v1526 = vpop.f32.mrb[0].mxu0
    %v1527 = vadd.f32 0.0, %v1526
    %v1528 = vpop.f32.mrb[0].mxu0
    %v1529 = vadd.f32 0.0, %v1528
    %v1530 = vpop.f32.mrb[0].mxu0
    %v1531 = vadd.f32 0.0, %v1530
    %v1532 = vpop.f32.mrb[0].mxu0
    %v1533 = vadd.f32 0.0, %v1532
    %1534 = vmatprep.mubr.bf16.mxu0 %v234
    %1535 = vmatmul.mubr.bf16.gmra.mrb[0].mxu0 %v233
    %v1536 = vpop.f32.mrb[0].mxu0
    %v1537 = vadd.f32 0.0, %v1536
    %v1538 = vpop.f32.mrb[0].mxu0
    %v1539 = vadd.f32 0.0, %v1538
    %v1540 = vpop.f32.mrb[0].mxu0
    %v1541 = vadd.f32 0.0, %v1540
    %v1542 = vpop.f32.mrb[0].mxu0
    %v1543 = vadd.f32 0.0, %v1542
    %1544 = vmatprep.mubr.bf16.mxu0 %v241
    %1545 = vmatmul.mubr.bf16.gmra.mrb[0].mxu0 %v240
    %v1546 = vpop.f32.mrb[0].mxu0
    %v1547 = vadd.f32 0.0, %v1546
    %v1548 = vpop.f32.mrb[0].mxu0
    %v1549 = vadd.f32 0.0, %v1548
    %v1550 = vpop.f32.mrb[0].mxu0
    %v1551 = vadd.f32 0.0, %v1550
    %v1552 = vpop.f32.mrb[0].mxu0
    %v1553 = vadd.f32 0.0, %v1552
    %1554 = vmatprep.mubr.bf16.mxu0 %v248
    %1555 = vmatmul.mubr.bf16.gmra.mrb[0].mxu0 %v247
    %v1556 = vpop.f32.mrb[0].mxu0
    %v1557 = vadd.f32 0.0, %v1556
    %v1558 = vpop.f32.mrb[0].mxu0
    %v1559 = vadd.f32 0.0, %v1558
    %v1560 = vpop.f32.mrb[0].mxu0
    %v1561 = vadd.f32 0.0, %v1560
    %v1562 = vpop.f32.mrb[0].mxu0
    %v1563 = vadd.f32 0.0, %v1562
    %1564 = vmatprep.mubr.bf16.mxu0 %v255
    %1565 = vmatmul.mubr.bf16.gmra.mrb[0].mxu0 %v254
    %v1566 = vpop.f32.mrb[0].mxu0
    %v1567 = vadd.f32 0.0, %v1566
    %v1568 = vpop.f32.mrb[0].mxu0
    %v1569 = vadd.f32 0.0, %v1568
    %v1570 = vpop.f32.mrb[0].mxu0
    %v1571 = vadd.f32 0.0, %v1570
    %v1572 = vpop.f32.mrb[0].mxu0
    %v1573 = vadd.f32 0.0, %v1572
    %1574 = vdwg.mxu0
    %1575 = vmatprep.subr.bf16.mxu0 %v1110
    %1576 = vmatpush1.bf16.msra.mxu0 %v1109
    %1577 = vmatprep.subr.bf16.mxu0 %v1114
    %1578 = vmatpush1.bf16.msra.mxu0 %v1113
    %1579 = vmatprep.subr.bf16.mxu0 %v1118
    %1580 = vmatpush1.bf16.msra.mxu0 %v1117
    %1581 = vmatprep.subr.bf16.mxu0 %v1122
    %1582 = vmatpush1.bf16.msra.mxu0 %v1121
    %1583 = vmatprep.subr.bf16.mxu0 %v1126
    %1584 = vmatpush1.bf16.msra.mxu0 %v1125
    %1585 = vmatprep.subr.bf16.mxu0 %v1130
    %1586 = vmatpush1.bf16.msra.mxu0 %v1129
    %1587 = vmatprep.subr.bf16.mxu0 %v1134
    %1588 = vmatpush1.bf16.msra.mxu0 %v1133
    %1589 = vmatprep.subr.bf16.mxu0 %v1138
    %1590 = vmatpush1.bf16.msra.mxu0 %v1137
    %1591 = vmatprep.subr.bf16.mxu0 %v1142
    %1592 = vmatpush1.bf16.msra.mxu0 %v1141
    %1593 = vmatprep.subr.bf16.mxu0 %v1146
    %1594 = vmatpush1.bf16.msra.mxu0 %v1145
    %1595 = vmatprep.subr.bf16.mxu0 %v1150
    %1596 = vmatpush1.bf16.msra.mxu0 %v1149
    %1597 = vmatprep.subr.bf16.mxu0 %v1154
    %1598 = vmatpush1.bf16.msra.mxu0 %v1153
    %1599 = vmatprep.subr.bf16.mxu0 %v1158
    %1600 = vmatpush1.bf16.msra.mxu0 %v1157
    %1601 = vmatprep.subr.bf16.mxu0 %v1162
    %1602 = vmatpush1.bf16.msra.mxu0 %v1161
    %1603 = vmatprep.subr.bf16.mxu0 %v1166
    %1604 = vmatpush1.bf16.msra.mxu0 %v1165
    %1605 = vmatprep.subr.bf16.mxu0 %v1170
    %1606 = vmatpush1.bf16.msra.mxu0 %v1169
    %1607 = vmatprep.mubr.bf16.mxu0 %v208
    %1608 = vmatmul.mubr.bf16.gmra.mrb[0].mxu0 %v207
    %v1609 = vpop.f32.mrb[0].mxu0
    %v1610 = vadd.f32 %v1497, %v1609
    %v1611 = vpop.f32.mrb[0].mxu0
    %v1612 = vadd.f32 %v1499, %v1611
    %v1613 = vpop.f32.mrb[0].mxu0
    %v1614 = vadd.f32 %v1501, %v1613
    %v1615 = vpop.f32.mrb[0].mxu0
    %v1616 = vadd.f32 %v1503, %v1615
    %1617 = vmatprep.mubr.bf16.mxu0 %v215
    %1618 = vmatmul.mubr.bf16.gmra.mrb[0].mxu0 %v214
    %v1619 = vpop.f32.mrb[0].mxu0
    %v1620 = vadd.f32 %v1507, %v1619
    %v1621 = vpop.f32.mrb[0].mxu0
    %v1622 = vadd.f32 %v1509, %v1621
    %v1623 = vpop.f32.mrb[0].mxu0
    %v1624 = vadd.f32 %v1511, %v1623
    %v1625 = vpop.f32.mrb[0].mxu0
    %v1626 = vadd.f32 %v1513, %v1625
    %1627 = vmatprep.mubr.bf16.mxu0 %v222
    %1628 = vmatmul.mubr.bf16.gmra.mrb[0].mxu0 %v221
    %v1629 = vpop.f32.mrb[0].mxu0
    %v1630 = vadd.f32 %v1517, %v1629
    %v1631 = vpop.f32.mrb[0].mxu0
    %v1632 = vadd.f32 %v1519, %v1631
    %v1633 = vpop.f32.mrb[0].mxu0
    %v1634 = vadd.f32 %v1521, %v1633
    %v1635 = vpop.f32.mrb[0].mxu0
    %v1636 = vadd.f32 %v1523, %v1635
    %1637 = vmatprep.mubr.bf16.mxu0 %v229
    %1638 = vmatmul.mubr.bf16.gmra.mrb[0].mxu0 %v228
    %v1639 = vpop.f32.mrb[0].mxu0
    %v1640 = vadd.f32 %v1527, %v1639
    %v1641 = vpop.f32.mrb[0].mxu0
    %v1642 = vadd.f32 %v1529, %v1641
    %v1643 = vpop.f32.mrb[0].mxu0
    %v1644 = vadd.f32 %v1531, %v1643
    %v1645 = vpop.f32.mrb[0].mxu0
    %v1646 = vadd.f32 %v1533, %v1645
    %1647 = vmatprep.mubr.bf16.mxu0 %v236
    %1648 = vmatmul.mubr.bf16.gmra.mrb[0].mxu0 %v235
    %v1649 = vpop.f32.mrb[0].mxu0
    %v1650 = vadd.f32 %v1537, %v1649
    %v1651 = vpop.f32.mrb[0].mxu0
    %v1652 = vadd.f32 %v1539, %v1651
    %v1653 = vpop.f32.mrb[0].mxu0
    %v1654 = vadd.f32 %v1541, %v1653
    %v1655 = vpop.f32.mrb[0].mxu0
    %v1656 = vadd.f32 %v1543, %v1655
    %1657 = vmatprep.mubr.bf16.mxu0 %v243
    %1658 = vmatmul.mubr.bf16.gmra.mrb[0].mxu0 %v242
    %v1659 = vpop.f32.mrb[0].mxu0
    %v1660 = vadd.f32 %v1547, %v1659
    %v1661 = vpop.f32.mrb[0].mxu0
    %v1662 = vadd.f32 %v1549, %v1661
    %v1663 = vpop.f32.mrb[0].mxu0
    %v1664 = vadd.f32 %v1551, %v1663
    %v1665 = vpop.f32.mrb[0].mxu0
    %v1666 = vadd.f32 %v1553, %v1665
    %1667 = vmatprep.mubr.bf16.mxu0 %v250
    %1668 = vmatmul.mubr.bf16.gmra.mrb[0].mxu0 %v249
    %v1669 = vpop.f32.mrb[0].mxu0
    %v1670 = vadd.f32 %v1557, %v1669
    %v1671 = vpop.f32.mrb[0].mxu0
    %v1672 = vadd.f32 %v1559, %v1671
    %v1673 = vpop.f32.mrb[0].mxu0
    %v1674 = vadd.f32 %v1561, %v1673
    %v1675 = vpop.f32.mrb[0].mxu0
    %v1676 = vadd.f32 %v1563, %v1675
    %1677 = vmatprep.mubr.bf16.mxu0 %v257
    %1678 = vmatmul.mubr.bf16.gmra.mrb[0].mxu0 %v256
    %v1679 = vpop.f32.mrb[0].mxu0
    %v1680 = vadd.f32 %v1567, %v1679
    %v1681 = vpop.f32.mrb[0].mxu0
    %v1682 = vadd.f32 %v1569, %v1681
    %v1683 = vpop.f32.mrb[0].mxu0
    %v1684 = vadd.f32 %v1571, %v1683
    %v1685 = vpop.f32.mrb[0].mxu0
    %v1686 = vadd.f32 %v1573, %v1685
    %1687 = vdwg.mxu0
    %1688 = vmatprep.subr.bf16.mxu0 %v1174
    %1689 = vmatpush1.bf16.msra.mxu0 %v1173
    %1690 = vmatprep.subr.bf16.mxu0 %v1178
    %1691 = vmatpush1.bf16.msra.mxu0 %v1177
    %1692 = vmatprep.subr.bf16.mxu0 %v1182
    %1693 = vmatpush1.bf16.msra.mxu0 %v1181
    %1694 = vmatprep.subr.bf16.mxu0 %v1186
    %1695 = vmatpush1.bf16.msra.mxu0 %v1185
    %1696 = vmatprep.subr.bf16.mxu0 %v1190
    %1697 = vmatpush1.bf16.msra.mxu0 %v1189
    %1698 = vmatprep.subr.bf16.mxu0 %v1194
    %1699 = vmatpush1.bf16.msra.mxu0 %v1193
    %1700 = vmatprep.subr.bf16.mxu0 %v1198
    %1701 = vmatpush1.bf16.msra.mxu0 %v1197
    %1702 = vmatprep.subr.bf16.mxu0 %v1202
    %1703 = vmatpush1.bf16.msra.mxu0 %v1201
    %1704 = vmatprep.subr.bf16.mxu0 %v1206
    %1705 = vmatpush1.bf16.msra.mxu0 %v1205
    %1706 = vmatprep.subr.bf16.mxu0 %v1210
    %1707 = vmatpush1.bf16.msra.mxu0 %v1209
    %1708 = vmatprep.subr.bf16.mxu0 %v1214
    %1709 = vmatpush1.bf16.msra.mxu0 %v1213
    %1710 = vmatprep.subr.bf16.mxu0 %v1218
    %1711 = vmatpush1.bf16.msra.mxu0 %v1217
    %1712 = vmatprep.subr.bf16.mxu0 %v1222
    %1713 = vmatpush1.bf16.msra.mxu0 %v1221
    %1714 = vmatprep.subr.bf16.mxu0 %v1226
    %1715 = vmatpush1.bf16.msra.mxu0 %v1225
    %1716 = vmatprep.subr.bf16.mxu0 %v1230
    %1717 = vmatpush1.bf16.msra.mxu0 %v1229
    %1718 = vmatprep.subr.bf16.mxu0 %v1234
    %1719 = vmatpush1.bf16.msra.mxu0 %v1233
    %1720 = vmatprep.mubr.bf16.mxu0 %v210
    %1721 = vmatmul.mubr.bf16.gmra.mrb[0].mxu0 %v209
    %v1722 = vpop.f32.mrb[0].mxu0
    %v1723 = vadd.f32 %v1610, %v1722
    %v1724 = vpop.f32.mrb[0].mxu0
    %v1725 = vadd.f32 %v1612, %v1724
    %v1726 = vpop.f32.mrb[0].mxu0
    %v1727 = vadd.f32 %v1614, %v1726
    %v1728 = vpop.f32.mrb[0].mxu0
    %v1729 = vadd.f32 %v1616, %v1728
    %1730 = vmatprep.mubr.bf16.mxu0 %v217
    %1731 = vmatmul.mubr.bf16.gmra.mrb[0].mxu0 %v216
    %v1732 = vpop.f32.mrb[0].mxu0
    %v1733 = vadd.f32 %v1620, %v1732
    %v1734 = vpop.f32.mrb[0].mxu0
    %v1735 = vadd.f32 %v1622, %v1734
    %v1736 = vpop.f32.mrb[0].mxu0
    %v1737 = vadd.f32 %v1624, %v1736
    %v1738 = vpop.f32.mrb[0].mxu0
    %v1739 = vadd.f32 %v1626, %v1738
    %1740 = vmatprep.mubr.bf16.mxu0 %v224
    %1741 = vmatmul.mubr.bf16.gmra.mrb[0].mxu0 %v223
    %v1742 = vpop.f32.mrb[0].mxu0
    %v1743 = vadd.f32 %v1630, %v1742
    %v1744 = vpop.f32.mrb[0].mxu0
    %v1745 = vadd.f32 %v1632, %v1744
    %v1746 = vpop.f32.mrb[0].mxu0
    %v1747 = vadd.f32 %v1634, %v1746
    %v1748 = vpop.f32.mrb[0].mxu0
    %v1749 = vadd.f32 %v1636, %v1748
    %1750 = vmatprep.mubr.bf16.mxu0 %v231
    %1751 = vmatmul.mubr.bf16.gmra.mrb[0].mxu0 %v230
    %v1752 = vpop.f32.mrb[0].mxu0
    %v1753 = vadd.f32 %v1640, %v1752
    %v1754 = vpop.f32.mrb[0].mxu0
    %v1755 = vadd.f32 %v1642, %v1754
    %v1756 = vpop.f32.mrb[0].mxu0
    %v1757 = vadd.f32 %v1644, %v1756
    %v1758 = vpop.f32.mrb[0].mxu0
    %v1759 = vadd.f32 %v1646, %v1758
    %1760 = vmatprep.mubr.bf16.mxu0 %v238
    %1761 = vmatmul.mubr.bf16.gmra.mrb[0].mxu0 %v237
    %v1762 = vpop.f32.mrb[0].mxu0
    %v1763 = vadd.f32 %v1650, %v1762
    %v1764 = vpop.f32.mrb[0].mxu0
    %v1765 = vadd.f32 %v1652, %v1764
    %v1766 = vpop.f32.mrb[0].mxu0
    %v1767 = vadd.f32 %v1654, %v1766
    %v1768 = vpop.f32.mrb[0].mxu0
    %v1769 = vadd.f32 %v1656, %v1768
    %1770 = vmatprep.mubr.bf16.mxu0 %v245
    %1771 = vmatmul.mubr.bf16.gmra.mrb[0].mxu0 %v244
    %v1772 = vpop.f32.mrb[0].mxu0
    %v1773 = vadd.f32 %v1660, %v1772
    %v1774 = vpop.f32.mrb[0].mxu0
    %v1775 = vadd.f32 %v1662, %v1774
    %v1776 = vpop.f32.mrb[0].mxu0
    %v1777 = vadd.f32 %v1664, %v1776
    %v1778 = vpop.f32.mrb[0].mxu0
    %v1779 = vadd.f32 %v1666, %v1778
    %1780 = vmatprep.mubr.bf16.mxu0 %v252
    %1781 = vmatmul.mubr.bf16.gmra.mrb[0].mxu0 %v251
    %v1782 = vpop.f32.mrb[0].mxu0
    %v1783 = vadd.f32 %v1670, %v1782
    %v1784 = vpop.f32.mrb[0].mxu0
    %v1785 = vadd.f32 %v1672, %v1784
    %v1786 = vpop.f32.mrb[0].mxu0
    %v1787 = vadd.f32 %v1674, %v1786
    %v1788 = vpop.f32.mrb[0].mxu0
    %v1789 = vadd.f32 %v1676, %v1788
    %1790 = vmatprep.mubr.bf16.mxu0 %v259
    %1791 = vmatmul.mubr.bf16.gmra.mrb[0].mxu0 %v258
    %v1792 = vpop.f32.mrb[0].mxu0
    %v1793 = vadd.f32 %v1680, %v1792
    %v1794 = vpop.f32.mrb[0].mxu0
    %v1795 = vadd.f32 %v1682, %v1794
    %v1796 = vpop.f32.mrb[0].mxu0
    %v1797 = vadd.f32 %v1684, %v1796
    %v1798 = vpop.f32.mrb[0].mxu0
    %v1799 = vadd.f32 %v1686, %v1798
    %1800 = vdwg.mxu0
    %1801 = vmatprep.subr.bf16.mxu0 %v1238
    %1802 = vmatpush1.bf16.msra.mxu0 %v1237
    %1803 = vmatprep.subr.bf16.mxu0 0
    %1804 = vmatpush1.bf16.msra.mxu0 0
    %1805 = vmatprep.subr.bf16.mxu0 0
    %1806 = vmatpush1.bf16.msra.mxu0 0
    %1807 = vmatprep.subr.bf16.mxu0 0
    %1808 = vmatpush1.bf16.msra.mxu0 0
    %1809 = vmatprep.subr.bf16.mxu0 0
    %1810 = vmatpush1.bf16.msra.mxu0 0
    %1811 = vmatprep.subr.bf16.mxu0 0
    %1812 = vmatpush1.bf16.msra.mxu0 0
    %1813 = vmatprep.subr.bf16.mxu0 0
    %1814 = vmatpush1.bf16.msra.mxu0 0
    %1815 = vmatprep.subr.bf16.mxu0 0
    %1816 = vmatpush1.bf16.msra.mxu0 0
    %1817 = vmatprep.subr.bf16.mxu0 0
    %1818 = vmatpush1.bf16.msra.mxu0 0
    %1819 = vmatprep.subr.bf16.mxu0 0
    %1820 = vmatpush1.bf16.msra.mxu0 0
    %1821 = vmatprep.subr.bf16.mxu0 0
    %1822 = vmatpush1.bf16.msra.mxu0 0
    %1823 = vmatprep.subr.bf16.mxu0 0
    %1824 = vmatpush1.bf16.msra.mxu0 0
    %1825 = vmatprep.subr.bf16.mxu0 0
    %1826 = vmatpush1.bf16.msra.mxu0 0
    %1827 = vmatprep.subr.bf16.mxu0 0
    %1828 = vmatpush1.bf16.msra.mxu0 0
    %1829 = vmatprep.subr.bf16.mxu0 0
    %1830 = vmatpush1.bf16.msra.mxu0 0
    %1831 = vmatprep.subr.bf16.mxu0 0
    %1832 = vmatpush1.bf16.msra.mxu0 0
    %1833 = vmatprep.mubr.bf16.mxu0 0
    %1834 = vmatmul.mubr.bf16.gmra.mrb[0].mxu0 %v1439
    %v1835 = vpop.f32.mrb[0].mxu0
    %v1836 = vadd.f32 %v1723, %v1835
    %v1837 = vpop.f32.mrb[0].mxu0
    %v1838 = vadd.f32 %v1725, %v1837
    %v1839 = vpop.f32.mrb[0].mxu0
    %v1840 = vadd.f32 %v1727, %v1839
    %v1841 = vpop.f32.mrb[0].mxu0
    %v1842 = vadd.f32 %v1729, %v1841
    %1843 = vmatprep.mubr.bf16.mxu0 0
    %1844 = vmatmul.mubr.bf16.gmra.mrb[0].mxu0 %v1442
    %v1845 = vpop.f32.mrb[0].mxu0
    %v1846 = vadd.f32 %v1733, %v1845
    %v1847 = vpop.f32.mrb[0].mxu0
    %v1848 = vadd.f32 %v1735, %v1847
    %v1849 = vpop.f32.mrb[0].mxu0
    %v1850 = vadd.f32 %v1737, %v1849
    %v1851 = vpop.f32.mrb[0].mxu0
    %v1852 = vadd.f32 %v1739, %v1851
    %1853 = vmatprep.mubr.bf16.mxu0 0
    %1854 = vmatmul.mubr.bf16.gmra.mrb[0].mxu0 %v1445
    %v1855 = vpop.f32.mrb[0].mxu0
    %v1856 = vadd.f32 %v1743, %v1855
    %v1857 = vpop.f32.mrb[0].mxu0
    %v1858 = vadd.f32 %v1745, %v1857
    %v1859 = vpop.f32.mrb[0].mxu0
    %v1860 = vadd.f32 %v1747, %v1859
    %v1861 = vpop.f32.mrb[0].mxu0
    %v1862 = vadd.f32 %v1749, %v1861
    %1863 = vmatprep.mubr.bf16.mxu0 0
    %1864 = vmatmul.mubr.bf16.gmra.mrb[0].mxu0 %v1448
    %v1865 = vpop.f32.mrb[0].mxu0
    %v1866 = vadd.f32 %v1753, %v1865
    %v1867 = vpop.f32.mrb[0].mxu0
    %v1868 = vadd.f32 %v1755, %v1867
    %v1869 = vpop.f32.mrb[0].mxu0
    %v1870 = vadd.f32 %v1757, %v1869
    %v1871 = vpop.f32.mrb[0].mxu0
    %v1872 = vadd.f32 %v1759, %v1871
    %1873 = vmatprep.mubr.bf16.mxu0 0
    %1874 = vmatmul.mubr.bf16.gmra.mrb[0].mxu0 %v1451
    %v1875 = vpop.f32.mrb[0].mxu0
    %v1876 = vadd.f32 %v1763, %v1875
    %v1877 = vpop.f32.mrb[0].mxu0
    %v1878 = vadd.f32 %v1765, %v1877
    %v1879 = vpop.f32.mrb[0].mxu0
    %v1880 = vadd.f32 %v1767, %v1879
    %v1881 = vpop.f32.mrb[0].mxu0
    %v1882 = vadd.f32 %v1769, %v1881
    %1883 = vmatprep.mubr.bf16.mxu0 0
    %1884 = vmatmul.mubr.bf16.gmra.mrb[0].mxu0 %v1454
    %v1885 = vpop.f32.mrb[0].mxu0
    %v1886 = vadd.f32 %v1773, %v1885
    %v1887 = vpop.f32.mrb[0].mxu0
    %v1888 = vadd.f32 %v1775, %v1887
    %v1889 = vpop.f32.mrb[0].mxu0
    %v1890 = vadd.f32 %v1777, %v1889
    %v1891 = vpop.f32.mrb[0].mxu0
    %v1892 = vadd.f32 %v1779, %v1891
    %1893 = vmatprep.mubr.bf16.mxu0 0
    %1894 = vmatmul.mubr.bf16.gmra.mrb[0].mxu0 %v1457
    %v1895 = vpop.f32.mrb[0].mxu0
    %v1896 = vadd.f32 %v1783, %v1895
    %v1897 = vpop.f32.mrb[0].mxu0
    %v1898 = vadd.f32 %v1785, %v1897
    %v1899 = vpop.f32.mrb[0].mxu0
    %v1900 = vadd.f32 %v1787, %v1899
    %v1901 = vpop.f32.mrb[0].mxu0
    %v1902 = vadd.f32 %v1789, %v1901
    %1903 = vmatprep.mubr.bf16.mxu0 0
    %1904 = vmatmul.mubr.bf16.gmra.mrb[0].mxu0 %v1460
    %v1905 = vpop.f32.mrb[0].mxu0
    %v1906 = vadd.f32 %v1793, %v1905
    %v1907 = vpop.f32.mrb[0].mxu0
    %v1908 = vadd.f32 %v1795, %v1907
    %v1909 = vpop.f32.mrb[0].mxu0
    %v1910 = vadd.f32 %v1797, %v1909
    %v1911 = vpop.f32.mrb[0].mxu0
    %v1912 = vadd.f32 %v1799, %v1911
    %1913 = vdwg.mxu0
    %1914 = vmatprep.subr.bf16.mxu0 %v1048
    %1915 = vmatpush1.bf16.msra.mxu0 %v1047
    %1916 = vmatprep.subr.bf16.mxu0 %v1052
    %1917 = vmatpush1.bf16.msra.mxu0 %v1051
    %1918 = vmatprep.subr.bf16.mxu0 %v1056
    %1919 = vmatpush1.bf16.msra.mxu0 %v1055
    %1920 = vmatprep.subr.bf16.mxu0 %v1060
    %1921 = vmatpush1.bf16.msra.mxu0 %v1059
    %1922 = vmatprep.subr.bf16.mxu0 %v1064
    %1923 = vmatpush1.bf16.msra.mxu0 %v1063
    %1924 = vmatprep.subr.bf16.mxu0 %v1068
    %1925 = vmatpush1.bf16.msra.mxu0 %v1067
    %1926 = vmatprep.subr.bf16.mxu0 %v1072
    %1927 = vmatpush1.bf16.msra.mxu0 %v1071
    %1928 = vmatprep.subr.bf16.mxu0 %v1076
    %1929 = vmatpush1.bf16.msra.mxu0 %v1075
    %1930 = vmatprep.subr.bf16.mxu0 %v1080
    %1931 = vmatpush1.bf16.msra.mxu0 %v1079
    %1932 = vmatprep.subr.bf16.mxu0 %v1084
    %1933 = vmatpush1.bf16.msra.mxu0 %v1083
    %1934 = vmatprep.subr.bf16.mxu0 %v1088
    %1935 = vmatpush1.bf16.msra.mxu0 %v1087
    %1936 = vmatprep.subr.bf16.mxu0 %v1092
    %1937 = vmatpush1.bf16.msra.mxu0 %v1091
    %1938 = vmatprep.subr.bf16.mxu0 %v1096
    %1939 = vmatpush1.bf16.msra.mxu0 %v1095
    %1940 = vmatprep.subr.bf16.mxu0 %v1100
    %1941 = vmatpush1.bf16.msra.mxu0 %v1099
    %1942 = vmatprep.subr.bf16.mxu0 %v1104
    %1943 = vmatpush1.bf16.msra.mxu0 %v1103
    %1944 = vmatprep.subr.bf16.mxu0 %v1108
    %1945 = vmatpush1.bf16.msra.mxu0 %v1107
    %1946 = vmatprep.mubr.bf16.mxu0 %v206
    %1947 = vmatmul.mubr.bf16.gmra.mrb[0].mxu0 %v205
    %v1948 = vpop.f32.mrb[0].mxu0
    %v1949 = vadd.f32 0.0, %v1948
    %v1950 = vpop.f32.mrb[0].mxu0
    %v1951 = vadd.f32 0.0, %v1950
    %v1952 = vpop.f32.mrb[0].mxu0
    %v1953 = vadd.f32 0.0, %v1952
    %v1954 = vpop.f32.mrb[0].mxu0
    %v1955 = vadd.f32 0.0, %v1954
    %1956 = vmatprep.mubr.bf16.mxu0 %v213
    %1957 = vmatmul.mubr.bf16.gmra.mrb[0].mxu0 %v212
    %v1958 = vpop.f32.mrb[0].mxu0
    %v1959 = vadd.f32 0.0, %v1958
    %v1960 = vpop.f32.mrb[0].mxu0
    %v1961 = vadd.f32 0.0, %v1960
    %v1962 = vpop.f32.mrb[0].mxu0
    %v1963 = vadd.f32 0.0, %v1962
    %v1964 = vpop.f32.mrb[0].mxu0
    %v1965 = vadd.f32 0.0, %v1964
    %1966 = vmatprep.mubr.bf16.mxu0 %v220
    %1967 = vmatmul.mubr.bf16.gmra.mrb[0].mxu0 %v219
    %v1968 = vpop.f32.mrb[0].mxu0
    %v1969 = vadd.f32 0.0, %v1968
    %v1970 = vpop.f32.mrb[0].mxu0
    %v1971 = vadd.f32 0.0, %v1970
    %v1972 = vpop.f32.mrb[0].mxu0
    %v1973 = vadd.f32 0.0, %v1972
    %v1974 = vpop.f32.mrb[0].mxu0
    %v1975 = vadd.f32 0.0, %v1974
    %1976 = vmatprep.mubr.bf16.mxu0 %v227
    %1977 = vmatmul.mubr.bf16.gmra.mrb[0].mxu0 %v226
    %v1978 = vpop.f32.mrb[0].mxu0
    %v1979 = vadd.f32 0.0, %v1978
    %v1980 = vpop.f32.mrb[0].mxu0
    %v1981 = vadd.f32 0.0, %v1980
    %v1982 = vpop.f32.mrb[0].mxu0
    %v1983 = vadd.f32 0.0, %v1982
    %v1984 = vpop.f32.mrb[0].mxu0
    %v1985 = vadd.f32 0.0, %v1984
    %1986 = vmatprep.mubr.bf16.mxu0 %v234
    %1987 = vmatmul.mubr.bf16.gmra.mrb[0].mxu0 %v233
    %v1988 = vpop.f32.mrb[0].mxu0
    %v1989 = vadd.f32 0.0, %v1988
    %v1990 = vpop.f32.mrb[0].mxu0
    %v1991 = vadd.f32 0.0, %v1990
    %v1992 = vpop.f32.mrb[0].mxu0
    %v1993 = vadd.f32 0.0, %v1992
    %v1994 = vpop.f32.mrb[0].mxu0
    %v1995 = vadd.f32 0.0, %v1994
    %1996 = vmatprep.mubr.bf16.mxu0 %v241
    %1997 = vmatmul.mubr.bf16.gmra.mrb[0].mxu0 %v240
    %v1998 = vpop.f32.mrb[0].mxu0
    %v1999 = vadd.f32 0.0, %v1998
    %v2000 = vpop.f32.mrb[0].mxu0
    %v2001 = vadd.f32 0.0, %v2000
    %v2002 = vpop.f32.mrb[0].mxu0
    %v2003 = vadd.f32 0.0, %v2002
    %v2004 = vpop.f32.mrb[0].mxu0
    %v2005 = vadd.f32 0.0, %v2004
    %2006 = vmatprep.mubr.bf16.mxu0 %v248
    %2007 = vmatmul.mubr.bf16.gmra.mrb[0].mxu0 %v247
    %v2008 = vpop.f32.mrb[0].mxu0
    %v2009 = vadd.f32 0.0, %v2008
    %v2010 = vpop.f32.mrb[0].mxu0
    %v2011 = vadd.f32 0.0, %v2010
    %v2012 = vpop.f32.mrb[0].mxu0
    %v2013 = vadd.f32 0.0, %v2012
    %v2014 = vpop.f32.mrb[0].mxu0
    %v2015 = vadd.f32 0.0, %v2014
    %2016 = vmatprep.mubr.bf16.mxu0 %v255
    %2017 = vmatmul.mubr.bf16.gmra.mrb[0].mxu0 %v254
    %v2018 = vpop.f32.mrb[0].mxu0
    %v2019 = vadd.f32 0.0, %v2018
    %v2020 = vpop.f32.mrb[0].mxu0
    %v2021 = vadd.f32 0.0, %v2020
    %v2022 = vpop.f32.mrb[0].mxu0
    %v2023 = vadd.f32 0.0, %v2022
    %v2024 = vpop.f32.mrb[0].mxu0
    %v2025 = vadd.f32 0.0, %v2024
    %2026 = vdwg.mxu0
    %2027 = vmatprep.subr.bf16.mxu0 %v1112
    %2028 = vmatpush1.bf16.msra.mxu0 %v1111
    %2029 = vmatprep.subr.bf16.mxu0 %v1116
    %2030 = vmatpush1.bf16.msra.mxu0 %v1115
    %2031 = vmatprep.subr.bf16.mxu0 %v1120
    %2032 = vmatpush1.bf16.msra.mxu0 %v1119
    %2033 = vmatprep.subr.bf16.mxu0 %v1124
    %2034 = vmatpush1.bf16.msra.mxu0 %v1123
    %2035 = vmatprep.subr.bf16.mxu0 %v1128
    %2036 = vmatpush1.bf16.msra.mxu0 %v1127
    %2037 = vmatprep.subr.bf16.mxu0 %v1132
    %2038 = vmatpush1.bf16.msra.mxu0 %v1131
    %2039 = vmatprep.subr.bf16.mxu0 %v1136
    %2040 = vmatpush1.bf16.msra.mxu0 %v1135
    %2041 = vmatprep.subr.bf16.mxu0 %v1140
    %2042 = vmatpush1.bf16.msra.mxu0 %v1139
    %2043 = vmatprep.subr.bf16.mxu0 %v1144
    %2044 = vmatpush1.bf16.msra.mxu0 %v1143
    %2045 = vmatprep.subr.bf16.mxu0 %v1148
    %2046 = vmatpush1.bf16.msra.mxu0 %v1147
    %2047 = vmatprep.subr.bf16.mxu0 %v1152
    %2048 = vmatpush1.bf16.msra.mxu0 %v1151
    %2049 = vmatprep.subr.bf16.mxu0 %v1156
    %2050 = vmatpush1.bf16.msra.mxu0 %v1155
    %2051 = vmatprep.subr.bf16.mxu0 %v1160
    %2052 = vmatpush1.bf16.msra.mxu0 %v1159
    %2053 = vmatprep.subr.bf16.mxu0 %v1164
    %2054 = vmatpush1.bf16.msra.mxu0 %v1163
    %2055 = vmatprep.subr.bf16.mxu0 %v1168
    %2056 = vmatpush1.bf16.msra.mxu0 %v1167
    %2057 = vmatprep.subr.bf16.mxu0 %v1172
    %2058 = vmatpush1.bf16.msra.mxu0 %v1171
    %2059 = vmatprep.mubr.bf16.mxu0 %v208
    %2060 = vmatmul.mubr.bf16.gmra.mrb[0].mxu0 %v207
    %v2061 = vpop.f32.mrb[0].mxu0
    %v2062 = vadd.f32 %v1949, %v2061
    %v2063 = vpop.f32.mrb[0].mxu0
    %v2064 = vadd.f32 %v1951, %v2063
    %v2065 = vpop.f32.mrb[0].mxu0
    %v2066 = vadd.f32 %v1953, %v2065
    %v2067 = vpop.f32.mrb[0].mxu0
    %v2068 = vadd.f32 %v1955, %v2067
    %2069 = vmatprep.mubr.bf16.mxu0 %v215
    %2070 = vmatmul.mubr.bf16.gmra.mrb[0].mxu0 %v214
    %v2071 = vpop.f32.mrb[0].mxu0
    %v2072 = vadd.f32 %v1959, %v2071
    %v2073 = vpop.f32.mrb[0].mxu0
    %v2074 = vadd.f32 %v1961, %v2073
    %v2075 = vpop.f32.mrb[0].mxu0
    %v2076 = vadd.f32 %v1963, %v2075
    %v2077 = vpop.f32.mrb[0].mxu0
    %v2078 = vadd.f32 %v1965, %v2077
    %2079 = vmatprep.mubr.bf16.mxu0 %v222
    %2080 = vmatmul.mubr.bf16.gmra.mrb[0].mxu0 %v221
    %v2081 = vpop.f32.mrb[0].mxu0
    %v2082 = vadd.f32 %v1969, %v2081
    %v2083 = vpop.f32.mrb[0].mxu0
    %v2084 = vadd.f32 %v1971, %v2083
    %v2085 = vpop.f32.mrb[0].mxu0
    %v2086 = vadd.f32 %v1973, %v2085
    %v2087 = vpop.f32.mrb[0].mxu0
    %v2088 = vadd.f32 %v1975, %v2087
    %2089 = vmatprep.mubr.bf16.mxu0 %v229
    %2090 = vmatmul.mubr.bf16.gmra.mrb[0].mxu0 %v228
    %v2091 = vpop.f32.mrb[0].mxu0
    %v2092 = vadd.f32 %v1979, %v2091
    %v2093 = vpop.f32.mrb[0].mxu0
    %v2094 = vadd.f32 %v1981, %v2093
    %v2095 = vpop.f32.mrb[0].mxu0
    %v2096 = vadd.f32 %v1983, %v2095
    %v2097 = vpop.f32.mrb[0].mxu0
    %v2098 = vadd.f32 %v1985, %v2097
    %2099 = vmatprep.mubr.bf16.mxu0 %v236
    %2100 = vmatmul.mubr.bf16.gmra.mrb[0].mxu0 %v235
    %v2101 = vpop.f32.mrb[0].mxu0
    %v2102 = vadd.f32 %v1989, %v2101
    %v2103 = vpop.f32.mrb[0].mxu0
    %v2104 = vadd.f32 %v1991, %v2103
    %v2105 = vpop.f32.mrb[0].mxu0
    %v2106 = vadd.f32 %v1993, %v2105
    %v2107 = vpop.f32.mrb[0].mxu0
    %v2108 = vadd.f32 %v1995, %v2107
    %2109 = vmatprep.mubr.bf16.mxu0 %v243
    %2110 = vmatmul.mubr.bf16.gmra.mrb[0].mxu0 %v242
    %v2111 = vpop.f32.mrb[0].mxu0
    %v2112 = vadd.f32 %v1999, %v2111
    %v2113 = vpop.f32.mrb[0].mxu0
    %v2114 = vadd.f32 %v2001, %v2113
    %v2115 = vpop.f32.mrb[0].mxu0
    %v2116 = vadd.f32 %v2003, %v2115
    %v2117 = vpop.f32.mrb[0].mxu0
    %v2118 = vadd.f32 %v2005, %v2117
    %2119 = vmatprep.mubr.bf16.mxu0 %v250
    %2120 = vmatmul.mubr.bf16.gmra.mrb[0].mxu0 %v249
    %v2121 = vpop.f32.mrb[0].mxu0
    %v2122 = vadd.f32 %v2009, %v2121
    %v2123 = vpop.f32.mrb[0].mxu0
    %v2124 = vadd.f32 %v2011, %v2123
    %v2125 = vpop.f32.mrb[0].mxu0
    %v2126 = vadd.f32 %v2013, %v2125
    %v2127 = vpop.f32.mrb[0].mxu0
    %v2128 = vadd.f32 %v2015, %v2127
    %2129 = vmatprep.mubr.bf16.mxu0 %v257
    %2130 = vmatmul.mubr.bf16.gmra.mrb[0].mxu0 %v256
    %v2131 = vpop.f32.mrb[0].mxu0
    %v2132 = vadd.f32 %v2019, %v2131
    %v2133 = vpop.f32.mrb[0].mxu0
    %v2134 = vadd.f32 %v2021, %v2133
    %v2135 = vpop.f32.mrb[0].mxu0
    %v2136 = vadd.f32 %v2023, %v2135
    %v2137 = vpop.f32.mrb[0].mxu0
    %v2138 = vadd.f32 %v2025, %v2137
    %2139 = vdwg.mxu0
    %2140 = vmatprep.subr.bf16.mxu0 %v1176
    %2141 = vmatpush1.bf16.msra.mxu0 %v1175
    %2142 = vmatprep.subr.bf16.mxu0 %v1180
    %2143 = vmatpush1.bf16.msra.mxu0 %v1179
    %2144 = vmatprep.subr.bf16.mxu0 %v1184
    %2145 = vmatpush1.bf16.msra.mxu0 %v1183
    %2146 = vmatprep.subr.bf16.mxu0 %v1188
    %2147 = vmatpush1.bf16.msra.mxu0 %v1187
    %2148 = vmatprep.subr.bf16.mxu0 %v1192
    %2149 = vmatpush1.bf16.msra.mxu0 %v1191
    %2150 = vmatprep.subr.bf16.mxu0 %v1196
    %2151 = vmatpush1.bf16.msra.mxu0 %v1195
    %2152 = vmatprep.subr.bf16.mxu0 %v1200
    %2153 = vmatpush1.bf16.msra.mxu0 %v1199
    %2154 = vmatprep.subr.bf16.mxu0 %v1204
    %2155 = vmatpush1.bf16.msra.mxu0 %v1203
    %2156 = vmatprep.subr.bf16.mxu0 %v1208
    %2157 = vmatpush1.bf16.msra.mxu0 %v1207
    %2158 = vmatprep.subr.bf16.mxu0 %v1212
    %2159 = vmatpush1.bf16.msra.mxu0 %v1211
    %2160 = vmatprep.subr.bf16.mxu0 %v1216
    %2161 = vmatpush1.bf16.msra.mxu0 %v1215
    %2162 = vmatprep.subr.bf16.mxu0 %v1220
    %2163 = vmatpush1.bf16.msra.mxu0 %v1219
    %2164 = vmatprep.subr.bf16.mxu0 %v1224
    %2165 = vmatpush1.bf16.msra.mxu0 %v1223
    %2166 = vmatprep.subr.bf16.mxu0 %v1228
    %2167 = vmatpush1.bf16.msra.mxu0 %v1227
    %2168 = vmatprep.subr.bf16.mxu0 %v1232
    %2169 = vmatpush1.bf16.msra.mxu0 %v1231
    %2170 = vmatprep.subr.bf16.mxu0 %v1236
    %2171 = vmatpush1.bf16.msra.mxu0 %v1235
    %2172 = vmatprep.mubr.bf16.mxu0 %v210
    %2173 = vmatmul.mubr.bf16.gmra.mrb[0].mxu0 %v209
    %v2174 = vpop.f32.mrb[0].mxu0
    %v2175 = vadd.f32 %v2062, %v2174
    %v2176 = vpop.f32.mrb[0].mxu0
    %v2177 = vadd.f32 %v2064, %v2176
    %v2178 = vpop.f32.mrb[0].mxu0
    %v2179 = vadd.f32 %v2066, %v2178
    %v2180 = vpop.f32.mrb[0].mxu0
    %v2181 = vadd.f32 %v2068, %v2180
    %2182 = vmatprep.mubr.bf16.mxu0 %v217
    %2183 = vmatmul.mubr.bf16.gmra.mrb[0].mxu0 %v216
    %v2184 = vpop.f32.mrb[0].mxu0
    %v2185 = vadd.f32 %v2072, %v2184
    %v2186 = vpop.f32.mrb[0].mxu0
    %v2187 = vadd.f32 %v2074, %v2186
    %v2188 = vpop.f32.mrb[0].mxu0
    %v2189 = vadd.f32 %v2076, %v2188
    %v2190 = vpop.f32.mrb[0].mxu0
    %v2191 = vadd.f32 %v2078, %v2190
    %2192 = vmatprep.mubr.bf16.mxu0 %v224
    %2193 = vmatmul.mubr.bf16.gmra.mrb[0].mxu0 %v223
    %v2194 = vpop.f32.mrb[0].mxu0
    %v2195 = vadd.f32 %v2082, %v2194
    %v2196 = vpop.f32.mrb[0].mxu0
    %v2197 = vadd.f32 %v2084, %v2196
    %v2198 = vpop.f32.mrb[0].mxu0
    %v2199 = vadd.f32 %v2086, %v2198
    %v2200 = vpop.f32.mrb[0].mxu0
    %v2201 = vadd.f32 %v2088, %v2200
    %2202 = vmatprep.mubr.bf16.mxu0 %v231
    %2203 = vmatmul.mubr.bf16.gmra.mrb[0].mxu0 %v230
    %v2204 = vpop.f32.mrb[0].mxu0
    %v2205 = vadd.f32 %v2092, %v2204
    %v2206 = vpop.f32.mrb[0].mxu0
    %v2207 = vadd.f32 %v2094, %v2206
    %v2208 = vpop.f32.mrb[0].mxu0
    %v2209 = vadd.f32 %v2096, %v2208
    %v2210 = vpop.f32.mrb[0].mxu0
    %v2211 = vadd.f32 %v2098, %v2210
    %2212 = vmatprep.mubr.bf16.mxu0 %v238
    %2213 = vmatmul.mubr.bf16.gmra.mrb[0].mxu0 %v237
    %v2214 = vpop.f32.mrb[0].mxu0
    %v2215 = vadd.f32 %v2102, %v2214
    %v2216 = vpop.f32.mrb[0].mxu0
    %v2217 = vadd.f32 %v2104, %v2216
    %v2218 = vpop.f32.mrb[0].mxu0
    %v2219 = vadd.f32 %v2106, %v2218
    %v2220 = vpop.f32.mrb[0].mxu0
    %v2221 = vadd.f32 %v2108, %v2220
    %2222 = vmatprep.mubr.bf16.mxu0 %v245
    %2223 = vmatmul.mubr.bf16.gmra.mrb[0].mxu0 %v244
    %v2224 = vpop.f32.mrb[0].mxu0
    %v2225 = vadd.f32 %v2112, %v2224
    %v2226 = vpop.f32.mrb[0].mxu0
    %v2227 = vadd.f32 %v2114, %v2226
    %v2228 = vpop.f32.mrb[0].mxu0
    %v2229 = vadd.f32 %v2116, %v2228
    %v2230 = vpop.f32.mrb[0].mxu0
    %v2231 = vadd.f32 %v2118, %v2230
    %2232 = vmatprep.mubr.bf16.mxu0 %v252
    %2233 = vmatmul.mubr.bf16.gmra.mrb[0].mxu0 %v251
    %v2234 = vpop.f32.mrb[0].mxu0
    %v2235 = vadd.f32 %v2122, %v2234
    %v2236 = vpop.f32.mrb[0].mxu0
    %v2237 = vadd.f32 %v2124, %v2236
    %v2238 = vpop.f32.mrb[0].mxu0
    %v2239 = vadd.f32 %v2126, %v2238
    %v2240 = vpop.f32.mrb[0].mxu0
    %v2241 = vadd.f32 %v2128, %v2240
    %2242 = vmatprep.mubr.bf16.mxu0 %v259
    %2243 = vmatmul.mubr.bf16.gmra.mrb[0].mxu0 %v258
    %v2244 = vpop.f32.mrb[0].mxu0
    %v2245 = vadd.f32 %v2132, %v2244
    %v2246 = vpop.f32.mrb[0].mxu0
    %v2247 = vadd.f32 %v2134, %v2246
    %v2248 = vpop.f32.mrb[0].mxu0
    %v2249 = vadd.f32 %v2136, %v2248
    %v2250 = vpop.f32.mrb[0].mxu0
    %v2251 = vadd.f32 %v2138, %v2250
    %2252 = vdwg.mxu0
    %2253 = vmatprep.subr.bf16.mxu0 %v1240
    %2254 = vmatpush1.bf16.msra.mxu0 %v1239
    %2255 = vmatprep.subr.bf16.mxu0 0
    %2256 = vmatpush1.bf16.msra.mxu0 0
    %2257 = vmatprep.subr.bf16.mxu0 0
    %2258 = vmatpush1.bf16.msra.mxu0 0
    %2259 = vmatprep.subr.bf16.mxu0 0
    %2260 = vmatpush1.bf16.msra.mxu0 0
    %2261 = vmatprep.subr.bf16.mxu0 0
    %2262 = vmatpush1.bf16.msra.mxu0 0
    %2263 = vmatprep.subr.bf16.mxu0 0
    %2264 = vmatpush1.bf16.msra.mxu0 0
    %2265 = vmatprep.subr.bf16.mxu0 0
    %2266 = vmatpush1.bf16.msra.mxu0 0
    %2267 = vmatprep.subr.bf16.mxu0 0
    %2268 = vmatpush1.bf16.msra.mxu0 0
    %2269 = vmatprep.subr.bf16.mxu0 0
    %2270 = vmatpush1.bf16.msra.mxu0 0
    %2271 = vmatprep.subr.bf16.mxu0 0
    %2272 = vmatpush1.bf16.msra.mxu0 0
    %2273 = vmatprep.subr.bf16.mxu0 0
    %2274 = vmatpush1.bf16.msra.mxu0 0
    %2275 = vmatprep.subr.bf16.mxu0 0
    %2276 = vmatpush1.bf16.msra.mxu0 0
    %2277 = vmatprep.subr.bf16.mxu0 0
    %2278 = vmatpush1.bf16.msra.mxu0 0
    %2279 = vmatprep.subr.bf16.mxu0 0
    %2280 = vmatpush1.bf16.msra.mxu0 0
    %2281 = vmatprep.subr.bf16.mxu0 0
    %2282 = vmatpush1.bf16.msra.mxu0 0
    %2283 = vmatprep.subr.bf16.mxu0 0
    %2284 = vmatpush1.bf16.msra.mxu0 0
    %2285 = vmatprep.mubr.bf16.mxu0 0
    %2286 = vmatmul.mubr.bf16.gmra.mrb[0].mxu0 %v1439
    %v2287 = vpop.f32.mrb[0].mxu0
    %v2288 = vadd.f32 %v2175, %v2287
    %v2289 = vpop.f32.mrb[0].mxu0
    %v2290 = vadd.f32 %v2177, %v2289
    %v2291 = vpop.f32.mrb[0].mxu0
    %v2292 = vadd.f32 %v2179, %v2291
    %v2293 = vpop.f32.mrb[0].mxu0
    %v2294 = vadd.f32 %v2181, %v2293
    %2295 = vmatprep.mubr.bf16.mxu0 0
    %2296 = vmatmul.mubr.bf16.gmra.mrb[0].mxu0 %v1442
    %v2297 = vpop.f32.mrb[0].mxu0
    %v2298 = vadd.f32 %v2185, %v2297
    %v2299 = vpop.f32.mrb[0].mxu0
    %v2300 = vadd.f32 %v2187, %v2299
    %v2301 = vpop.f32.mrb[0].mxu0
    %v2302 = vadd.f32 %v2189, %v2301
    %v2303 = vpop.f32.mrb[0].mxu0
    %v2304 = vadd.f32 %v2191, %v2303
    %2305 = vmatprep.mubr.bf16.mxu0 0
    %2306 = vmatmul.mubr.bf16.gmra.mrb[0].mxu0 %v1445
    %v2307 = vpop.f32.mrb[0].mxu0
    %v2308 = vadd.f32 %v2195, %v2307
    %v2309 = vpop.f32.mrb[0].mxu0
    %v2310 = vadd.f32 %v2197, %v2309
    %v2311 = vpop.f32.mrb[0].mxu0
    %v2312 = vadd.f32 %v2199, %v2311
    %v2313 = vpop.f32.mrb[0].mxu0
    %v2314 = vadd.f32 %v2201, %v2313
    %2315 = vmatprep.mubr.bf16.mxu0 0
    %2316 = vmatmul.mubr.bf16.gmra.mrb[0].mxu0 %v1448
    %v2317 = vpop.f32.mrb[0].mxu0
    %v2318 = vadd.f32 %v2205, %v2317
    %v2319 = vpop.f32.mrb[0].mxu0
    %v2320 = vadd.f32 %v2207, %v2319
    %v2321 = vpop.f32.mrb[0].mxu0
    %v2322 = vadd.f32 %v2209, %v2321
    %v2323 = vpop.f32.mrb[0].mxu0
    %v2324 = vadd.f32 %v2211, %v2323
    %2325 = vmatprep.mubr.bf16.mxu0 0
    %2326 = vmatmul.mubr.bf16.gmra.mrb[0].mxu0 %v1451
    %v2327 = vpop.f32.mrb[0].mxu0
    %v2328 = vadd.f32 %v2215, %v2327
    %v2329 = vpop.f32.mrb[0].mxu0
    %v2330 = vadd.f32 %v2217, %v2329
    %v2331 = vpop.f32.mrb[0].mxu0
    %v2332 = vadd.f32 %v2219, %v2331
    %v2333 = vpop.f32.mrb[0].mxu0
    %v2334 = vadd.f32 %v2221, %v2333
    %2335 = vmatprep.mubr.bf16.mxu0 0
    %2336 = vmatmul.mubr.bf16.gmra.mrb[0].mxu0 %v1454
    %v2337 = vpop.f32.mrb[0].mxu0
    %v2338 = vadd.f32 %v2225, %v2337
    %v2339 = vpop.f32.mrb[0].mxu0
    %v2340 = vadd.f32 %v2227, %v2339
    %v2341 = vpop.f32.mrb[0].mxu0
    %v2342 = vadd.f32 %v2229, %v2341
    %v2343 = vpop.f32.mrb[0].mxu0
    %v2344 = vadd.f32 %v2231, %v2343
    %2345 = vmatprep.mubr.bf16.mxu0 0
    %2346 = vmatmul.mubr.bf16.gmra.mrb[0].mxu0 %v1457
    %v2347 = vpop.f32.mrb[0].mxu0
    %v2348 = vadd.f32 %v2235, %v2347
    %v2349 = vpop.f32.mrb[0].mxu0
    %v2350 = vadd.f32 %v2237, %v2349
    %v2351 = vpop.f32.mrb[0].mxu0
    %v2352 = vadd.f32 %v2239, %v2351
    %v2353 = vpop.f32.mrb[0].mxu0
    %v2354 = vadd.f32 %v2241, %v2353
    %2355 = vmatprep.mubr.bf16.mxu0 0
    %2356 = vmatmul.mubr.bf16.gmra.mrb[0].mxu0 %v1460
    %v2357 = vpop.f32.mrb[0].mxu0
    %v2358 = vadd.f32 %v2245, %v2357
    %v2359 = vpop.f32.mrb[0].mxu0
    %v2360 = vadd.f32 %v2247, %v2359
    %v2361 = vpop.f32.mrb[0].mxu0
    %v2362 = vadd.f32 %v2249, %v2361
    %v2363 = vpop.f32.mrb[0].mxu0
    %v2364 = vadd.f32 %v2251, %v2363
    %2365 = vdwg.mxu0
    %v2366 = vadd.f32 %v1836, %v1840
    %v2367 = vadd.f32 %v2366, %v1846
    %v2368 = vadd.f32 %v2367, %v1850
    %v2369 = vadd.f32 %v2368, %v1856
    %v2370 = vadd.f32 %v2369, %v1860
    %v2371 = vadd.f32 %v2370, %v1866
    %v2372 = vadd.f32 %v2371, %v1870
    %v2373 = vadd.f32 %v2372, %v1876
    %v2374 = vadd.f32 %v2373, %v1880
    %v2375 = vadd.f32 %v2374, %v1886
    %v2376 = vadd.f32 %v2375, %v1890
    %v2377 = vadd.f32 %v2376, %v1896
    %v2378 = vadd.f32 %v2377, %v1900
    %v2379 = vadd.f32 %v2378, %v1906
    %v2380 = vadd.f32 %v2379, %v1910
    %v2381 = vrot.slane %v2380, 4
    %v2382 = vadd.f32 %v2380, %v2381
    %v2383 = vrot.slane %v2382, 2
    %v2384 = vadd.f32 %v2382, %v2383
    %v2385 = vrot.slane %v2384, 1
    %v2386 = vadd.f32 %v2384, %v2385
    %v2387 = vadd.f32 %v1838, %v1842
    %v2388 = vadd.f32 %v2387, %v1848
    %v2389 = vadd.f32 %v2388, %v1852
    %v2390 = vadd.f32 %v2389, %v1858
    %v2391 = vadd.f32 %v2390, %v1862
    %v2392 = vadd.f32 %v2391, %v1868
    %v2393 = vadd.f32 %v2392, %v1872
    %v2394 = vadd.f32 %v2393, %v1878
    %v2395 = vadd.f32 %v2394, %v1882
    %v2396 = vadd.f32 %v2395, %v1888
    %v2397 = vadd.f32 %v2396, %v1892
    %v2398 = vadd.f32 %v2397, %v1898
    %v2399 = vadd.f32 %v2398, %v1902
    %v2400 = vadd.f32 %v2399, %v1908
    %v2401 = vadd.f32 %v2400, %v1912
    %v2402 = vrot.slane %v2401, 4
    %v2403 = vadd.f32 %v2401, %v2402
    %v2404 = vrot.slane %v2403, 2
    %v2405 = vadd.f32 %v2403, %v2404
    %v2406 = vrot.slane %v2405, 1
    %v2407 = vadd.f32 %v2405, %v2406
    %v2408 = vadd.f32 %v2288, %v2292
    %v2409 = vadd.f32 %v2408, %v2298
    %v2410 = vadd.f32 %v2409, %v2302
    %v2411 = vadd.f32 %v2410, %v2308
    %v2412 = vadd.f32 %v2411, %v2312
    %v2413 = vadd.f32 %v2412, %v2318
    %v2414 = vadd.f32 %v2413, %v2322
    %v2415 = vadd.f32 %v2414, %v2328
    %v2416 = vadd.f32 %v2415, %v2332
    %v2417 = vadd.f32 %v2416, %v2338
    %v2418 = vadd.f32 %v2417, %v2342
    %v2419 = vadd.f32 %v2418, %v2348
    %v2420 = vadd.f32 %v2419, %v2352
    %v2421 = vadd.f32 %v2420, %v2358
    %v2422 = vadd.f32 %v2421, %v2362
    %v2423 = vrot.slane %v2422, 4
    %v2424 = vadd.f32 %v2422, %v2423
    %v2425 = vrot.slane %v2424, 2
    %v2426 = vadd.f32 %v2424, %v2425
    %v2427 = vrot.slane %v2426, 1
    %v2428 = vadd.f32 %v2426, %v2427
    %v2429 = vadd.f32 %v2290, %v2294
    %v2430 = vadd.f32 %v2429, %v2300
    %v2431 = vadd.f32 %v2430, %v2304
    %v2432 = vadd.f32 %v2431, %v2310
    %v2433 = vadd.f32 %v2432, %v2314
    %v2434 = vadd.f32 %v2433, %v2320
    %v2435 = vadd.f32 %v2434, %v2324
    %v2436 = vadd.f32 %v2435, %v2330
    %v2437 = vadd.f32 %v2436, %v2334
    %v2438 = vadd.f32 %v2437, %v2340
    %v2439 = vadd.f32 %v2438, %v2344
    %v2440 = vadd.f32 %v2439, %v2350
    %v2441 = vadd.f32 %v2440, %v2354
    %v2442 = vadd.f32 %v2441, %v2360
    %v2443 = vadd.f32 %v2442, %v2364
    %v2444 = vrot.slane %v2443, 4
    %v2445 = vadd.f32 %v2443, %v2444
    %v2446 = vrot.slane %v2445, 2
    %v2447 = vadd.f32 %v2445, %v2446
    %v2448 = vrot.slane %v2447, 1
    %v2449 = vadd.f32 %v2447, %v2448
    %v2450 = vrcp.pop 128.0
    %v2451 = vmul.f32 %v2386, %v2450
    %v2452 = vmul.f32 %v2407, %v2450
    %v2453 = vmul.f32 %v2428, %v2450
    %v2454 = vmul.f32 %v2449, %v2450
    %v2455 = vmul.f32 %v1836, %v1836
    %v2456 = vmul.f32 %v1838, %v1838
    %v2457 = vmul.f32 %v2288, %v2288
    %v2458 = vmul.f32 %v2290, %v2290
    %v2459 = vmul.f32 %v1840, %v1840
    %v2460 = vmul.f32 %v1842, %v1842
    %v2461 = vmul.f32 %v2292, %v2292
    %v2462 = vmul.f32 %v2294, %v2294
    %v2463 = vmul.f32 %v1846, %v1846
    %v2464 = vmul.f32 %v1848, %v1848
    %v2465 = vmul.f32 %v2298, %v2298
    %v2466 = vmul.f32 %v2300, %v2300
    %v2467 = vmul.f32 %v1850, %v1850
    %v2468 = vmul.f32 %v1852, %v1852
    %v2469 = vmul.f32 %v2302, %v2302
    %v2470 = vmul.f32 %v2304, %v2304
    %v2471 = vmul.f32 %v1856, %v1856
    %v2472 = vmul.f32 %v1858, %v1858
    %v2473 = vmul.f32 %v2308, %v2308
    %v2474 = vmul.f32 %v2310, %v2310
    %v2475 = vmul.f32 %v1860, %v1860
    %v2476 = vmul.f32 %v1862, %v1862
    %v2477 = vmul.f32 %v2312, %v2312
    %v2478 = vmul.f32 %v2314, %v2314
    %v2479 = vmul.f32 %v1866, %v1866
    %v2480 = vmul.f32 %v1868, %v1868
    %v2481 = vmul.f32 %v2318, %v2318
    %v2482 = vmul.f32 %v2320, %v2320
    %v2483 = vmul.f32 %v1870, %v1870
    %v2484 = vmul.f32 %v1872, %v1872
    %v2485 = vmul.f32 %v2322, %v2322
    %v2486 = vmul.f32 %v2324, %v2324
    %v2487 = vmul.f32 %v1876, %v1876
    %v2488 = vmul.f32 %v1878, %v1878
    %v2489 = vmul.f32 %v2328, %v2328
    %v2490 = vmul.f32 %v2330, %v2330
    %v2491 = vmul.f32 %v1880, %v1880
    %v2492 = vmul.f32 %v1882, %v1882
    %v2493 = vmul.f32 %v2332, %v2332
    %v2494 = vmul.f32 %v2334, %v2334
    %v2495 = vmul.f32 %v1886, %v1886
    %v2496 = vmul.f32 %v1888, %v1888
    %v2497 = vmul.f32 %v2338, %v2338
    %v2498 = vmul.f32 %v2340, %v2340
    %v2499 = vmul.f32 %v1890, %v1890
    %v2500 = vmul.f32 %v1892, %v1892
    %v2501 = vmul.f32 %v2342, %v2342
    %v2502 = vmul.f32 %v2344, %v2344
    %v2503 = vmul.f32 %v1896, %v1896
    %v2504 = vmul.f32 %v1898, %v1898
    %v2505 = vmul.f32 %v2348, %v2348
    %v2506 = vmul.f32 %v2350, %v2350
    %v2507 = vmul.f32 %v1900, %v1900
    %v2508 = vmul.f32 %v1902, %v1902
    %v2509 = vmul.f32 %v2352, %v2352
    %v2510 = vmul.f32 %v2354, %v2354
    %v2511 = vmul.f32 %v1906, %v1906
    %v2512 = vmul.f32 %v1908, %v1908
    %v2513 = vmul.f32 %v2358, %v2358
    %v2514 = vmul.f32 %v2360, %v2360
    %v2515 = vmul.f32 %v1910, %v1910
    %v2516 = vmul.f32 %v1912, %v1912
    %v2517 = vmul.f32 %v2362, %v2362
    %v2518 = vmul.f32 %v2364, %v2364
    %v2519 = vadd.f32 %v2455, %v2459
    %v2520 = vadd.f32 %v2519, %v2463
    %v2521 = vadd.f32 %v2520, %v2467
    %v2522 = vadd.f32 %v2521, %v2471
    %v2523 = vadd.f32 %v2522, %v2475
    %v2524 = vadd.f32 %v2523, %v2479
    %v2525 = vadd.f32 %v2524, %v2483
    %v2526 = vadd.f32 %v2525, %v2487
    %v2527 = vadd.f32 %v2526, %v2491
    %v2528 = vadd.f32 %v2527, %v2495
    %v2529 = vadd.f32 %v2528, %v2499
    %v2530 = vadd.f32 %v2529, %v2503
    %v2531 = vadd.f32 %v2530, %v2507
    %v2532 = vadd.f32 %v2531, %v2511
    %v2533 = vadd.f32 %v2532, %v2515
    %v2534 = vrot.slane %v2533, 4
    %v2535 = vadd.f32 %v2533, %v2534
    %v2536 = vrot.slane %v2535, 2
    %v2537 = vadd.f32 %v2535, %v2536
    %v2538 = vrot.slane %v2537, 1
    %v2539 = vadd.f32 %v2537, %v2538
    %v2540 = vadd.f32 %v2456, %v2460
    %v2541 = vadd.f32 %v2540, %v2464
    %v2542 = vadd.f32 %v2541, %v2468
    %v2543 = vadd.f32 %v2542, %v2472
    %v2544 = vadd.f32 %v2543, %v2476
    %v2545 = vadd.f32 %v2544, %v2480
    %v2546 = vadd.f32 %v2545, %v2484
    %v2547 = vadd.f32 %v2546, %v2488
    %v2548 = vadd.f32 %v2547, %v2492
    %v2549 = vadd.f32 %v2548, %v2496
    %v2550 = vadd.f32 %v2549, %v2500
    %v2551 = vadd.f32 %v2550, %v2504
    %v2552 = vadd.f32 %v2551, %v2508
    %v2553 = vadd.f32 %v2552, %v2512
    %v2554 = vadd.f32 %v2553, %v2516
    %v2555 = vrot.slane %v2554, 4
    %v2556 = vadd.f32 %v2554, %v2555
    %v2557 = vrot.slane %v2556, 2
    %v2558 = vadd.f32 %v2556, %v2557
    %v2559 = vrot.slane %v2558, 1
    %v2560 = vadd.f32 %v2558, %v2559
    %v2561 = vadd.f32 %v2457, %v2461
    %v2562 = vadd.f32 %v2561, %v2465
    %v2563 = vadd.f32 %v2562, %v2469
    %v2564 = vadd.f32 %v2563, %v2473
    %v2565 = vadd.f32 %v2564, %v2477
    %v2566 = vadd.f32 %v2565, %v2481
    %v2567 = vadd.f32 %v2566, %v2485
    %v2568 = vadd.f32 %v2567, %v2489
    %v2569 = vadd.f32 %v2568, %v2493
    %v2570 = vadd.f32 %v2569, %v2497
    %v2571 = vadd.f32 %v2570, %v2501
    %v2572 = vadd.f32 %v2571, %v2505
    %v2573 = vadd.f32 %v2572, %v2509
    %v2574 = vadd.f32 %v2573, %v2513
    %v2575 = vadd.f32 %v2574, %v2517
    %v2576 = vrot.slane %v2575, 4
    %v2577 = vadd.f32 %v2575, %v2576
    %v2578 = vrot.slane %v2577, 2
    %v2579 = vadd.f32 %v2577, %v2578
    %v2580 = vrot.slane %v2579, 1
    %v2581 = vadd.f32 %v2579, %v2580
    %v2582 = vadd.f32 %v2458, %v2462
    %v2583 = vadd.f32 %v2582, %v2466
    %v2584 = vadd.f32 %v2583, %v2470
    %v2585 = vadd.f32 %v2584, %v2474
    %v2586 = vadd.f32 %v2585, %v2478
    %v2587 = vadd.f32 %v2586, %v2482
    %v2588 = vadd.f32 %v2587, %v2486
    %v2589 = vadd.f32 %v2588, %v2490
    %v2590 = vadd.f32 %v2589, %v2494
    %v2591 = vadd.f32 %v2590, %v2498
    %v2592 = vadd.f32 %v2591, %v2502
    %v2593 = vadd.f32 %v2592, %v2506
    %v2594 = vadd.f32 %v2593, %v2510
    %v2595 = vadd.f32 %v2594, %v2514
    %v2596 = vadd.f32 %v2595, %v2518
    %v2597 = vrot.slane %v2596, 4
    %v2598 = vadd.f32 %v2596, %v2597
    %v2599 = vrot.slane %v2598, 2
    %v2600 = vadd.f32 %v2598, %v2599
    %v2601 = vrot.slane %v2600, 1
    %v2602 = vadd.f32 %v2600, %v2601
    %v2603 = vmul.f32 %v2539, %v2450
    %v2604 = vmul.f32 %v2560, %v2450
    %v2605 = vmul.f32 %v2581, %v2450
    %v2606 = vmul.f32 %v2602, %v2450
    %v2607 = vmul.f32 %v2451, %v2451
    %v2608 = vmul.f32 %v2452, %v2452
    %v2609 = vmul.f32 %v2453, %v2453
    %v2610 = vmul.f32 %v2454, %v2454
    %v2611 = vsub.f32 %v2603, %v2607
    %v2612 = vsub.f32 %v2604, %v2608
    %v2613 = vsub.f32 %v2605, %v2609
    %v2614 = vsub.f32 %v2606, %v2610
    %v2615 = vmax.f32 %v2611, 0.0
    %v2616 = vmax.f32 %v2612, 0.0
    %v2617 = vmax.f32 %v2613, 0.0
    %v2618 = vmax.f32 %v2614, 0.0
    %v2619 = vld [vmem:[#allocation2] sm:$0xf]
    %v2620 = vadd.f32 %v2615, 1e-05
    %v2621 = vadd.f32 %v2616, 1e-05
    %v2622 = vadd.f32 %v2617, 1e-05
    %v2623 = vadd.f32 %v2618, 1e-05
    %v2624 = vrsqrt.pop %v2620
    %v2625 = vrsqrt.pop %v2621
    %v2626 = vrsqrt.pop %v2622
    %v2627 = vrsqrt.pop %v2623
    %v2632 = vcombine.low %v2624, %v2625
    %v2633 = vcombine.low %v2626, %v2627
    %v2635 = vunpack.c.l.s4 1966171168
    %v2636 = vunpack.c.0.s8 %v2635
    %v2637 = vlaneseq
    %v2638 = vshrl.u32 %v2637, 7
    %v2639 = vsub.s32 %v2636, %v2638
    %v2640 = vrot.slane %v2632, %v2639
    %v2642 = vunpack.c.l.s4 1966171168
    %v2643 = vunpack.c.0.s8 %v2642
    %v2644 = vlaneseq
    %v2645 = vshrl.u32 %v2644, 7
    %v2646 = vsub.s32 %v2643, %v2645
    %v2647 = vrot.slane %v2633, %v2646
    %v2648 = vcombine.low %v2640, %v2647
    %v2650 = vunpack.c.l.s4 1966171168
    %v2651 = vunpack.c.0.s8 %v2650
    %v2652 = vlaneseq
    %v2653 = vshrl.u32 %v2652, 7
    %v2654 = vsub.s32 %v2651, %v2653
    %v2655 = vrot.slane %v2648, %v2654
    %v2657 = vmul.f32 %v2619, %v2655
    %v2658 = vld [vmem:[#allocation4] sm:$0xf]
    %v2660 = vlaneseq
    %v2661 = vshrl.u32 %v2660, 7
    %v2662 = vsub.s32 0, %v2661
    %v2663 = vrot.slane %v2657, %v2662
    %v2664 = vlaneseq
    %v2665 = vshrl.u32 %v2664, 7
    %v2666 = vsub.s32 1, %v2665
    %v2667 = vrot.slane %v2657, %v2666
    %v2668 = vlaneseq
    %v2669 = vshrl.u32 %v2668, 7
    %v2670 = vsub.s32 2, %v2669
    %v2671 = vrot.slane %v2657, %v2670
    %v2672 = vlaneseq
    %v2673 = vshrl.u32 %v2672, 7
    %v2674 = vsub.s32 3, %v2673
    %v2675 = vrot.slane %v2657, %v2674
    %v2680 = vmul.f32 %v2451, %v2663
    %v2681 = vmul.f32 %v2452, %v2667
    %v2682 = vmul.f32 %v2453, %v2671
    %v2683 = vmul.f32 %v2454, %v2675
    %v2688 = vcombine.low %v2680, %v2681
    %v2689 = vcombine.low %v2682, %v2683
    %v2691 = vunpack.c.l.s4 1966171168
    %v2692 = vunpack.c.0.s8 %v2691
    %v2693 = vlaneseq
    %v2694 = vshrl.u32 %v2693, 7
    %v2695 = vsub.s32 %v2692, %v2694
    %v2696 = vrot.slane %v2688, %v2695
    %v2698 = vunpack.c.l.s4 1966171168
    %v2699 = vunpack.c.0.s8 %v2698
    %v2700 = vlaneseq
    %v2701 = vshrl.u32 %v2700, 7
    %v2702 = vsub.s32 %v2699, %v2701
    %v2703 = vrot.slane %v2689, %v2702
    %v2704 = vcombine.low %v2696, %v2703
    %v2706 = vunpack.c.l.s4 1966171168
    %v2707 = vunpack.c.0.s8 %v2706
    %v2708 = vlaneseq
    %v2709 = vshrl.u32 %v2708, 7
    %v2710 = vsub.s32 %v2707, %v2709
    %v2711 = vrot.slane %v2704, %v2710
    %v2713 = vsub.f32 %v2658, %v2711
    %v2714 = vmul.f32 %v1836, %v2663
    %v2715 = vmul.f32 %v1838, %v2667
    %v2716 = vmul.f32 %v2288, %v2671
    %v2717 = vmul.f32 %v2290, %v2675
    %v2718 = vmul.f32 %v1840, %v2663
    %v2719 = vmul.f32 %v1842, %v2667
    %v2720 = vmul.f32 %v2292, %v2671
    %v2721 = vmul.f32 %v2294, %v2675
    %v2722 = vmul.f32 %v1846, %v2663
    %v2723 = vmul.f32 %v1848, %v2667
    %v2724 = vmul.f32 %v2298, %v2671
    %v2725 = vmul.f32 %v2300, %v2675
    %v2726 = vmul.f32 %v1850, %v2663
    %v2727 = vmul.f32 %v1852, %v2667
    %v2728 = vmul.f32 %v2302, %v2671
    %v2729 = vmul.f32 %v2304, %v2675
    %v2730 = vmul.f32 %v1856, %v2663
    %v2731 = vmul.f32 %v1858, %v2667
    %v2732 = vmul.f32 %v2308, %v2671
    %v2733 = vmul.f32 %v2310, %v2675
    %v2734 = vmul.f32 %v1860, %v2663
    %v2735 = vmul.f32 %v1862, %v2667
    %v2736 = vmul.f32 %v2312, %v2671
    %v2737 = vmul.f32 %v2314, %v2675
    %v2738 = vmul.f32 %v1866, %v2663
    %v2739 = vmul.f32 %v1868, %v2667
    %v2740 = vmul.f32 %v2318, %v2671
    %v2741 = vmul.f32 %v2320, %v2675
    %v2742 = vmul.f32 %v1870, %v2663
    %v2743 = vmul.f32 %v1872, %v2667
    %v2744 = vmul.f32 %v2322, %v2671
    %v2745 = vmul.f32 %v2324, %v2675
    %v2746 = vmul.f32 %v1876, %v2663
    %v2747 = vmul.f32 %v1878, %v2667
    %v2748 = vmul.f32 %v2328, %v2671
    %v2749 = vmul.f32 %v2330, %v2675
    %v2750 = vmul.f32 %v1880, %v2663
    %v2751 = vmul.f32 %v1882, %v2667
    %v2752 = vmul.f32 %v2332, %v2671
    %v2753 = vmul.f32 %v2334, %v2675
    %v2754 = vmul.f32 %v1886, %v2663
    %v2755 = vmul.f32 %v1888, %v2667
    %v2756 = vmul.f32 %v2338, %v2671
    %v2757 = vmul.f32 %v2340, %v2675
    %v2758 = vmul.f32 %v1890, %v2663
    %v2759 = vmul.f32 %v1892, %v2667
    %v2760 = vmul.f32 %v2342, %v2671
    %v2761 = vmul.f32 %v2344, %v2675
    %v2762 = vmul.f32 %v1896, %v2663
    %v2763 = vmul.f32 %v1898, %v2667
    %v2764 = vmul.f32 %v2348, %v2671
    %v2765 = vmul.f32 %v2350, %v2675
    %v2766 = vmul.f32 %v1900, %v2663
    %v2767 = vmul.f32 %v1902, %v2667
    %v2768 = vmul.f32 %v2352, %v2671
    %v2769 = vmul.f32 %v2354, %v2675
    %v2770 = vmul.f32 %v1906, %v2663
    %v2771 = vmul.f32 %v1908, %v2667
    %v2772 = vmul.f32 %v2358, %v2671
    %v2773 = vmul.f32 %v2360, %v2675
    %v2774 = vmul.f32 %v1910, %v2663
    %v2775 = vmul.f32 %v1912, %v2667
    %v2776 = vmul.f32 %v2362, %v2671
    %v2777 = vmul.f32 %v2364, %v2675
    %v2779 = vlaneseq
    %v2780 = vshrl.u32 %v2779, 7
    %v2781 = vsub.s32 0, %v2780
    %v2782 = vrot.slane %v2713, %v2781
    %v2783 = vlaneseq
    %v2784 = vshrl.u32 %v2783, 7
    %v2785 = vsub.s32 1, %v2784
    %v2786 = vrot.slane %v2713, %v2785
    %v2787 = vlaneseq
    %v2788 = vshrl.u32 %v2787, 7
    %v2789 = vsub.s32 2, %v2788
    %v2790 = vrot.slane %v2713, %v2789
    %v2791 = vlaneseq
    %v2792 = vshrl.u32 %v2791, 7
    %v2793 = vsub.s32 3, %v2792
    %v2794 = vrot.slane %v2713, %v2793
    %v2799 = vadd.f32 %v2714, %v2782
    %v2800 = vadd.f32 %v2715, %v2786
    %v2801 = vadd.f32 %v2716, %v2790
    %v2802 = vadd.f32 %v2717, %v2794
    %v2803 = vadd.f32 %v2718, %v2782
    %v2804 = vadd.f32 %v2719, %v2786
    %v2805 = vadd.f32 %v2720, %v2790
    %v2806 = vadd.f32 %v2721, %v2794
    %v2807 = vadd.f32 %v2722, %v2782
    %v2808 = vadd.f32 %v2723, %v2786
    %v2809 = vadd.f32 %v2724, %v2790
    %v2810 = vadd.f32 %v2725, %v2794
    %v2811 = vadd.f32 %v2726, %v2782
    %v2812 = vadd.f32 %v2727, %v2786
    %v2813 = vadd.f32 %v2728, %v2790
    %v2814 = vadd.f32 %v2729, %v2794
    %v2815 = vadd.f32 %v2730, %v2782
    %v2816 = vadd.f32 %v2731, %v2786
    %v2817 = vadd.f32 %v2732, %v2790
    %v2818 = vadd.f32 %v2733, %v2794
    %v2819 = vadd.f32 %v2734, %v2782
    %v2820 = vadd.f32 %v2735, %v2786
    %v2821 = vadd.f32 %v2736, %v2790
    %v2822 = vadd.f32 %v2737, %v2794
    %v2823 = vadd.f32 %v2738, %v2782
    %v2824 = vadd.f32 %v2739, %v2786
    %v2825 = vadd.f32 %v2740, %v2790
    %v2826 = vadd.f32 %v2741, %v2794
    %v2827 = vadd.f32 %v2742, %v2782
    %v2828 = vadd.f32 %v2743, %v2786
    %v2829 = vadd.f32 %v2744, %v2790
    %v2830 = vadd.f32 %v2745, %v2794
    %v2831 = vadd.f32 %v2746, %v2782
    %v2832 = vadd.f32 %v2747, %v2786
    %v2833 = vadd.f32 %v2748, %v2790
    %v2834 = vadd.f32 %v2749, %v2794
    %v2835 = vadd.f32 %v2750, %v2782
    %v2836 = vadd.f32 %v2751, %v2786
    %v2837 = vadd.f32 %v2752, %v2790
    %v2838 = vadd.f32 %v2753, %v2794
    %v2839 = vadd.f32 %v2754, %v2782
    %v2840 = vadd.f32 %v2755, %v2786
    %v2841 = vadd.f32 %v2756, %v2790
    %v2842 = vadd.f32 %v2757, %v2794
    %v2843 = vadd.f32 %v2758, %v2782
    %v2844 = vadd.f32 %v2759, %v2786
    %v2845 = vadd.f32 %v2760, %v2790
    %v2846 = vadd.f32 %v2761, %v2794
    %v2847 = vadd.f32 %v2762, %v2782
    %v2848 = vadd.f32 %v2763, %v2786
    %v2849 = vadd.f32 %v2764, %v2790
    %v2850 = vadd.f32 %v2765, %v2794
    %v2851 = vadd.f32 %v2766, %v2782
    %v2852 = vadd.f32 %v2767, %v2786
    %v2853 = vadd.f32 %v2768, %v2790
    %v2854 = vadd.f32 %v2769, %v2794
    %v2855 = vadd.f32 %v2770, %v2782
    %v2856 = vadd.f32 %v2771, %v2786
    %v2857 = vadd.f32 %v2772, %v2790
    %v2858 = vadd.f32 %v2773, %v2794
    %v2859 = vadd.f32 %v2774, %v2782
    %v2860 = vadd.f32 %v2775, %v2786
    %v2861 = vadd.f32 %v2776, %v2790
    %v2862 = vadd.f32 %v2777, %v2794
    %v2863 = vmax.f32 %v2799, 0.0
    %v2864 = vmax.f32 %v2800, 0.0
    %v2865 = vmax.f32 %v2801, 0.0
    %v2866 = vmax.f32 %v2802, 0.0
    %v2867 = vmax.f32 %v2803, 0.0
    %v2868 = vmax.f32 %v2804, 0.0
    %v2869 = vmax.f32 %v2805, 0.0
    %v2870 = vmax.f32 %v2806, 0.0
    %v2871 = vmax.f32 %v2807, 0.0
    %v2872 = vmax.f32 %v2808, 0.0
    %v2873 = vmax.f32 %v2809, 0.0
    %v2874 = vmax.f32 %v2810, 0.0
    %v2875 = vmax.f32 %v2811, 0.0
    %v2876 = vmax.f32 %v2812, 0.0
    %v2877 = vmax.f32 %v2813, 0.0
    %v2878 = vmax.f32 %v2814, 0.0
    %v2879 = vmax.f32 %v2815, 0.0
    %v2880 = vmax.f32 %v2816, 0.0
    %v2881 = vmax.f32 %v2817, 0.0
    %v2882 = vmax.f32 %v2818, 0.0
    %v2883 = vmax.f32 %v2819, 0.0
    %v2884 = vmax.f32 %v2820, 0.0
    %v2885 = vmax.f32 %v2821, 0.0
    %v2886 = vmax.f32 %v2822, 0.0
    %v2887 = vmax.f32 %v2823, 0.0
    %v2888 = vmax.f32 %v2824, 0.0
    %v2889 = vmax.f32 %v2825, 0.0
    %v2890 = vmax.f32 %v2826, 0.0
    %v2891 = vmax.f32 %v2827, 0.0
    %v2892 = vmax.f32 %v2828, 0.0
    %v2893 = vmax.f32 %v2829, 0.0
    %v2894 = vmax.f32 %v2830, 0.0
    %v2895 = vmax.f32 %v2831, 0.0
    %v2896 = vmax.f32 %v2832, 0.0
    %v2897 = vmax.f32 %v2833, 0.0
    %v2898 = vmax.f32 %v2834, 0.0
    %v2899 = vmax.f32 %v2835, 0.0
    %v2900 = vmax.f32 %v2836, 0.0
    %v2901 = vmax.f32 %v2837, 0.0
    %v2902 = vmax.f32 %v2838, 0.0
    %v2903 = vmax.f32 %v2839, 0.0
    %v2904 = vmax.f32 %v2840, 0.0
    %v2905 = vmax.f32 %v2841, 0.0
    %v2906 = vmax.f32 %v2842, 0.0
    %v2907 = vmax.f32 %v2843, 0.0
    %v2908 = vmax.f32 %v2844, 0.0
    %v2909 = vmax.f32 %v2845, 0.0
    %v2910 = vmax.f32 %v2846, 0.0
    %v2911 = vmax.f32 %v2847, 0.0
    %v2912 = vmax.f32 %v2848, 0.0
    %v2913 = vmax.f32 %v2849, 0.0
    %v2914 = vmax.f32 %v2850, 0.0
    %v2915 = vmax.f32 %v2851, 0.0
    %v2916 = vmax.f32 %v2852, 0.0
    %v2917 = vmax.f32 %v2853, 0.0
    %v2918 = vmax.f32 %v2854, 0.0
    %v2919 = vmax.f32 %v2855, 0.0
    %v2920 = vmax.f32 %v2856, 0.0
    %v2921 = vmax.f32 %v2857, 0.0
    %v2922 = vmax.f32 %v2858, 0.0
    %v2923 = vmax.f32 %v2859, 0.0
    %v2924 = vmax.f32 %v2860, 0.0
    %v2925 = vmax.f32 %v2861, 0.0
    %v2926 = vmax.f32 %v2862, 0.0
    %v2927 = vpack.c.bf16 %v2867, %v2863
    %v2928 = vpack.c.bf16 %v2868, %v2864
    %v2929 = vpack.c.bf16 %v2869, %v2865
    %v2930 = vpack.c.bf16 %v2870, %v2866
    %v2931 = vpack.c.bf16 %v2875, %v2871
    %v2932 = vpack.c.bf16 %v2876, %v2872
    %v2933 = vpack.c.bf16 %v2877, %v2873
    %v2934 = vpack.c.bf16 %v2878, %v2874
    %v2935 = vpack.c.bf16 %v2883, %v2879
    %v2936 = vpack.c.bf16 %v2884, %v2880
    %v2937 = vpack.c.bf16 %v2885, %v2881
    %v2938 = vpack.c.bf16 %v2886, %v2882
    %v2939 = vpack.c.bf16 %v2891, %v2887
    %v2940 = vpack.c.bf16 %v2892, %v2888
    %v2941 = vpack.c.bf16 %v2893, %v2889
    %v2942 = vpack.c.bf16 %v2894, %v2890
    %v2943 = vpack.c.bf16 %v2899, %v2895
    %v2944 = vpack.c.bf16 %v2900, %v2896
    %v2945 = vpack.c.bf16 %v2901, %v2897
    %v2946 = vpack.c.bf16 %v2902, %v2898
    %v2947 = vpack.c.bf16 %v2907, %v2903
    %v2948 = vpack.c.bf16 %v2908, %v2904
    %v2949 = vpack.c.bf16 %v2909, %v2905
    %v2950 = vpack.c.bf16 %v2910, %v2906
    %v2951 = vpack.c.bf16 %v2915, %v2911
    %v2952 = vpack.c.bf16 %v2916, %v2912
    %v2953 = vpack.c.bf16 %v2917, %v2913
    %v2954 = vpack.c.bf16 %v2918, %v2914
    %v2955 = vpack.c.bf16 %v2923, %v2919
    %v2956 = vpack.c.bf16 %v2924, %v2920
    %v2957 = vpack.c.bf16 %v2925, %v2921
    %v2958 = vpack.c.bf16 %v2926, %v2922
    %v2959 = vld [vmem:[#allocation6] sm:$0xff]
    %v2960 = vld [vmem:[#allocation6 + $0x8] sm:$0xff]
    %v2961 = vld [vmem:[#allocation6 + $0x10] sm:$0xff]
    %v2962 = vld [vmem:[#allocation6 + $0x18] sm:$0xff]
    %v2963 = vld [vmem:[#allocation6 + $0x20] sm:$0xff]
    %v2964 = vld [vmem:[#allocation6 + $0x28] sm:$0xff]
    %v2965 = vld [vmem:[#allocation6 + $0x30] sm:$0xff]
    %v2966 = vld [vmem:[#allocation6 + $0x38] sm:$0xff]
    %v2967 = vld [vmem:[#allocation6 + $0x40] sm:$0xff]
    %v2968 = vld [vmem:[#allocation6 + $0x48] sm:$0xff]
    %v2969 = vld [vmem:[#allocation6 + $0x50] sm:$0xff]
    %v2970 = vld [vmem:[#allocation6 + $0x58] sm:$0xff]
    %v2971 = vld [vmem:[#allocation6 + $0x60] sm:$0xff]
    %v2972 = vld [vmem:[#allocation6 + $0x68] sm:$0xff]
    %v2973 = vld [vmem:[#allocation6 + $0x70] sm:$0xff]
    %v2974 = vld [vmem:[#allocation6 + $0x78] sm:$0xff]
    %v2975 = vld [vmem:[#allocation6 + $0x80] sm:$0xff]
    %v2976 = vld [vmem:[#allocation6 + $0x88] sm:$0xff]
    %v2977 = vld [vmem:[#allocation6 + $0x90] sm:$0xff]
    %v2978 = vld [vmem:[#allocation6 + $0x98] sm:$0xff]
    %v2979 = vld [vmem:[#allocation6 + $0xa0] sm:$0xff]
    %v2980 = vld [vmem:[#allocation6 + $0xa8] sm:$0xff]
    %v2981 = vld [vmem:[#allocation6 + $0xb0] sm:$0xff]
    %v2982 = vld [vmem:[#allocation6 + $0xb8] sm:$0xff]
    %v2983 = vld [vmem:[#allocation6 + $0xc0] sm:$0xff]
    %v2984 = vld [vmem:[#allocation6 + $0xc8] sm:$0xff]
    %v2985 = vld [vmem:[#allocation6 + $0xd0] sm:$0xff]
    %v2986 = vld [vmem:[#allocation6 + $0xd8] sm:$0xff]
    %v2987 = vld [vmem:[#allocation6 + $0xe0] sm:$0xff]
    %v2988 = vld [vmem:[#allocation6 + $0xe8] sm:$0xff]
    %v2989 = vld [vmem:[#allocation6 + $0xf0] sm:$0xff]
    %v2990 = vld [vmem:[#allocation6 + $0xf8] sm:$0xff]
    %v2991 = vld [vmem:[#allocation6 + $0x100] sm:$0xff]
    %v2992 = vld [vmem:[#allocation6 + $0x108] sm:$0xff]
    %v2993 = vld [vmem:[#allocation6 + $0x110] sm:$0xff]
    %v2994 = vld [vmem:[#allocation6 + $0x118] sm:$0xff]
    %v2995 = vld [vmem:[#allocation6 + $0x120] sm:$0xff]
    %v2996 = vld [vmem:[#allocation6 + $0x128] sm:$0xff]
    %v2997 = vld [vmem:[#allocation6 + $0x130] sm:$0xff]
    %v2998 = vld [vmem:[#allocation6 + $0x138] sm:$0xff]
    %v2999 = vld [vmem:[#allocation6 + $0x140] sm:$0xff]
    %v3000 = vld [vmem:[#allocation6 + $0x148] sm:$0xff]
    %v3001 = vld [vmem:[#allocation6 + $0x150] sm:$0xff]
    %v3002 = vld [vmem:[#allocation6 + $0x158] sm:$0xff]
    %v3003 = vld [vmem:[#allocation6 + $0x160] sm:$0xff]
    %v3004 = vld [vmem:[#allocation6 + $0x168] sm:$0xff]
    %v3005 = vld [vmem:[#allocation6 + $0x170] sm:$0xff]
    %v3006 = vld [vmem:[#allocation6 + $0x178] sm:$0xff]
    %v3007 = vld [vmem:[#allocation6 + $0x180] sm:$0xff]
    %v3008 = vld [vmem:[#allocation6 + $0x188] sm:$0xff]
    %v3009 = vld [vmem:[#allocation6 + $0x190] sm:$0xff]
    %v3010 = vld [vmem:[#allocation6 + $0x198] sm:$0xff]
    %v3011 = vld [vmem:[#allocation6 + $0x1a0] sm:$0xff]
    %v3012 = vld [vmem:[#allocation6 + $0x1a8] sm:$0xff]
    %v3013 = vld [vmem:[#allocation6 + $0x1b0] sm:$0xff]
    %v3014 = vld [vmem:[#allocation6 + $0x1b8] sm:$0xff]
    %v3015 = vld [vmem:[#allocation6 + $0x1c0] sm:$0xff]
    %v3016 = vld [vmem:[#allocation6 + $0x1c8] sm:$0xff]
    %v3017 = vld [vmem:[#allocation6 + $0x1d0] sm:$0xff]
    %v3018 = vld [vmem:[#allocation6 + $0x1d8] sm:$0xff]
    %v3019 = vld [vmem:[#allocation6 + $0x1e0] sm:$0xff]
    %v3020 = vld [vmem:[#allocation6 + $0x1e8] sm:$0xff]
    %v3021 = vld [vmem:[#allocation6 + $0x1f0] sm:$0xff]
    %v3022 = vld [vmem:[#allocation6 + $0x1f8] sm:$0xff]
    %v3087 = vunpack.c.l.b16 %v2959
    %v3088 = vunpack.c.h.b16 %v2959
    %v3089 = vunpack.c.l.b16 %v2960
    %v3090 = vunpack.c.h.b16 %v2960
    %v3091 = vunpack.c.l.b16 %v2961
    %v3092 = vunpack.c.h.b16 %v2961
    %v3093 = vunpack.c.l.b16 %v2962
    %v3094 = vunpack.c.h.b16 %v2962
    %v3095 = vunpack.c.l.b16 %v2963
    %v3096 = vunpack.c.h.b16 %v2963
    %v3097 = vunpack.c.l.b16 %v2964
    %v3098 = vunpack.c.h.b16 %v2964
    %v3099 = vunpack.c.l.b16 %v2965
    %v3100 = vunpack.c.h.b16 %v2965
    %v3101 = vunpack.c.l.b16 %v2966
    %v3102 = vunpack.c.h.b16 %v2966
    %v3103 = vunpack.c.l.b16 %v2967
    %v3104 = vunpack.c.h.b16 %v2967
    %v3105 = vunpack.c.l.b16 %v2968
    %v3106 = vunpack.c.h.b16 %v2968
    %v3107 = vunpack.c.l.b16 %v2969
    %v3108 = vunpack.c.h.b16 %v2969
    %v3109 = vunpack.c.l.b16 %v2970
    %v3110 = vunpack.c.h.b16 %v2970
    %v3111 = vunpack.c.l.b16 %v2971
    %v3112 = vunpack.c.h.b16 %v2971
    %v3113 = vunpack.c.l.b16 %v2972
    %v3114 = vunpack.c.h.b16 %v2972
    %v3115 = vunpack.c.l.b16 %v2973
    %v3116 = vunpack.c.h.b16 %v2973
    %v3117 = vunpack.c.l.b16 %v2974
    %v3118 = vunpack.c.h.b16 %v2974
    %v3119 = vunpack.c.l.b16 %v2975
    %v3120 = vunpack.c.h.b16 %v2975
    %v3121 = vunpack.c.l.b16 %v2976
    %v3122 = vunpack.c.h.b16 %v2976
    %v3123 = vunpack.c.l.b16 %v2977
    %v3124 = vunpack.c.h.b16 %v2977
    %v3125 = vunpack.c.l.b16 %v2978
    %v3126 = vunpack.c.h.b16 %v2978
    %v3127 = vunpack.c.l.b16 %v2979
    %v3128 = vunpack.c.h.b16 %v2979
    %v3129 = vunpack.c.l.b16 %v2980
    %v3130 = vunpack.c.h.b16 %v2980
    %v3131 = vunpack.c.l.b16 %v2981
    %v3132 = vunpack.c.h.b16 %v2981
    %v3133 = vunpack.c.l.b16 %v2982
    %v3134 = vunpack.c.h.b16 %v2982
    %v3135 = vunpack.c.l.b16 %v2983
    %v3136 = vunpack.c.h.b16 %v2983
    %v3137 = vunpack.c.l.b16 %v2984
    %v3138 = vunpack.c.h.b16 %v2984
    %v3139 = vunpack.c.l.b16 %v2985
    %v3140 = vunpack.c.h.b16 %v2985
    %v3141 = vunpack.c.l.b16 %v2986
    %v3142 = vunpack.c.h.b16 %v2986
    %v3143 = vunpack.c.l.b16 %v2987
    %v3144 = vunpack.c.h.b16 %v2987
    %v3145 = vunpack.c.l.b16 %v2988
    %v3146 = vunpack.c.h.b16 %v2988
    %v3147 = vunpack.c.l.b16 %v2989
    %v3148 = vunpack.c.h.b16 %v2989
    %v3149 = vunpack.c.l.b16 %v2990
    %v3150 = vunpack.c.h.b16 %v2990
    %v3151 = vunpack.c.l.b16 %v2991
    %v3152 = vunpack.c.h.b16 %v2991
    %v3153 = vunpack.c.l.b16 %v2992
    %v3154 = vunpack.c.h.b16 %v2992
    %v3155 = vunpack.c.l.b16 %v2993
    %v3156 = vunpack.c.h.b16 %v2993
    %v3157 = vunpack.c.l.b16 %v2994
    %v3158 = vunpack.c.h.b16 %v2994
    %v3159 = vunpack.c.l.b16 %v2995
    %v3160 = vunpack.c.h.b16 %v2995
    %v3161 = vunpack.c.l.b16 %v2996
    %v3162 = vunpack.c.h.b16 %v2996
    %v3163 = vunpack.c.l.b16 %v2997
    %v3164 = vunpack.c.h.b16 %v2997
    %v3165 = vunpack.c.l.b16 %v2998
    %v3166 = vunpack.c.h.b16 %v2998
    %v3167 = vunpack.c.l.b16 %v2999
    %v3168 = vunpack.c.h.b16 %v2999
    %v3169 = vunpack.c.l.b16 %v3000
    %v3170 = vunpack.c.h.b16 %v3000
    %v3171 = vunpack.c.l.b16 %v3001
    %v3172 = vunpack.c.h.b16 %v3001
    %v3173 = vunpack.c.l.b16 %v3002
    %v3174 = vunpack.c.h.b16 %v3002
    %v3175 = vunpack.c.l.b16 %v3003
    %v3176 = vunpack.c.h.b16 %v3003
    %v3177 = vunpack.c.l.b16 %v3004
    %v3178 = vunpack.c.h.b16 %v3004
    %v3179 = vunpack.c.l.b16 %v3005
    %v3180 = vunpack.c.h.b16 %v3005
    %v3181 = vunpack.c.l.b16 %v3006
    %v3182 = vunpack.c.h.b16 %v3006
    %v3183 = vunpack.c.l.b16 %v3007
    %v3184 = vunpack.c.h.b16 %v3007
    %v3185 = vunpack.c.l.b16 %v3008
    %v3186 = vunpack.c.h.b16 %v3008
    %v3187 = vunpack.c.l.b16 %v3009
    %v3188 = vunpack.c.h.b16 %v3009
    %v3189 = vunpack.c.l.b16 %v3010
    %v3190 = vunpack.c.h.b16 %v3010
    %v3191 = vunpack.c.l.b16 %v3011
    %v3192 = vunpack.c.h.b16 %v3011
    %v3193 = vunpack.c.l.b16 %v3012
    %v3194 = vunpack.c.h.b16 %v3012
    %v3195 = vunpack.c.l.b16 %v3013
    %v3196 = vunpack.c.h.b16 %v3013
    %v3197 = vunpack.c.l.b16 %v3014
    %v3198 = vunpack.c.h.b16 %v3014
    %v3199 = vunpack.c.l.b16 %v3015
    %v3200 = vunpack.c.h.b16 %v3015
    %v3201 = vunpack.c.l.b16 %v3016
    %v3202 = vunpack.c.h.b16 %v3016
    %v3203 = vunpack.c.l.b16 %v3017
    %v3204 = vunpack.c.h.b16 %v3017
    %v3205 = vunpack.c.l.b16 %v3018
    %v3206 = vunpack.c.h.b16 %v3018
    %v3207 = vunpack.c.l.b16 %v3019
    %v3208 = vunpack.c.h.b16 %v3019
    %v3209 = vunpack.c.l.b16 %v3020
    %v3210 = vunpack.c.h.b16 %v3020
    %v3211 = vunpack.c.l.b16 %v3021
    %v3212 = vunpack.c.h.b16 %v3021
    %v3213 = vunpack.c.l.b16 %v3022
    %v3214 = vunpack.c.h.b16 %v3022
    %v3215 = vpack.c.b16 %v3089, %v3087
    %v3216 = vpack.c.b16 %v3090, %v3088
    %v3217 = vpack.c.b16 %v3093, %v3091
    %v3218 = vpack.c.b16 %v3094, %v3092
    %v3219 = vpack.c.b16 %v3097, %v3095
    %v3220 = vpack.c.b16 %v3098, %v3096
    %v3221 = vpack.c.b16 %v3101, %v3099
    %v3222 = vpack.c.b16 %v3102, %v3100
    %v3223 = vpack.c.b16 %v3105, %v3103
    %v3224 = vpack.c.b16 %v3106, %v3104
    %v3225 = vpack.c.b16 %v3109, %v3107
    %v3226 = vpack.c.b16 %v3110, %v3108
    %v3227 = vpack.c.b16 %v3113, %v3111
    %v3228 = vpack.c.b16 %v3114, %v3112
    %v3229 = vpack.c.b16 %v3117, %v3115
    %v3230 = vpack.c.b16 %v3118, %v3116
    %v3231 = vpack.c.b16 %v3121, %v3119
    %v3232 = vpack.c.b16 %v3122, %v3120
    %v3233 = vpack.c.b16 %v3125, %v3123
    %v3234 = vpack.c.b16 %v3126, %v3124
    %v3235 = vpack.c.b16 %v3129, %v3127
    %v3236 = vpack.c.b16 %v3130, %v3128
    %v3237 = vpack.c.b16 %v3133, %v3131
    %v3238 = vpack.c.b16 %v3134, %v3132
    %v3239 = vpack.c.b16 %v3137, %v3135
    %v3240 = vpack.c.b16 %v3138, %v3136
    %v3241 = vpack.c.b16 %v3141, %v3139
    %v3242 = vpack.c.b16 %v3142, %v3140
    %v3243 = vpack.c.b16 %v3145, %v3143
    %v3244 = vpack.c.b16 %v3146, %v3144
    %v3245 = vpack.c.b16 %v3149, %v3147
    %v3246 = vpack.c.b16 %v3150, %v3148
    %v3247 = vpack.c.b16 %v3153, %v3151
    %v3248 = vpack.c.b16 %v3154, %v3152
    %v3249 = vpack.c.b16 %v3157, %v3155
    %v3250 = vpack.c.b16 %v3158, %v3156
    %v3251 = vpack.c.b16 %v3161, %v3159
    %v3252 = vpack.c.b16 %v3162, %v3160
    %v3253 = vpack.c.b16 %v3165, %v3163
    %v3254 = vpack.c.b16 %v3166, %v3164
    %v3255 = vpack.c.b16 %v3169, %v3167
    %v3256 = vpack.c.b16 %v3170, %v3168
    %v3257 = vpack.c.b16 %v3173, %v3171
    %v3258 = vpack.c.b16 %v3174, %v3172
    %v3259 = vpack.c.b16 %v3177, %v3175
    %v3260 = vpack.c.b16 %v3178, %v3176
    %v3261 = vpack.c.b16 %v3181, %v3179
    %v3262 = vpack.c.b16 %v3182, %v3180
    %v3263 = vpack.c.b16 %v3185, %v3183
    %v3264 = vpack.c.b16 %v3186, %v3184
    %v3265 = vpack.c.b16 %v3189, %v3187
    %v3266 = vpack.c.b16 %v3190, %v3188
    %v3267 = vpack.c.b16 %v3193, %v3191
    %v3268 = vpack.c.b16 %v3194, %v3192
    %v3269 = vpack.c.b16 %v3197, %v3195
    %v3270 = vpack.c.b16 %v3198, %v3196
    %v3271 = vpack.c.b16 %v3201, %v3199
    %v3272 = vpack.c.b16 %v3202, %v3200
    %v3273 = vpack.c.b16 %v3205, %v3203
    %v3274 = vpack.c.b16 %v3206, %v3204
    %v3275 = vpack.c.b16 %v3209, %v3207
    %v3276 = vpack.c.b16 %v3210, %v3208
    %v3277 = vpack.c.b16 %v3213, %v3211
    %v3278 = vpack.c.b16 %v3214, %v3212
    %3343 = vmatprep.subr.bf16.mxu0 %v3216
    %3344 = vmatpush1.bf16.msra.mxu0 %v3215
    %3345 = vmatprep.subr.bf16.mxu0 %v3218
    %3346 = vmatpush1.bf16.msra.mxu0 %v3217
    %3347 = vmatprep.subr.bf16.mxu0 %v3220
    %3348 = vmatpush1.bf16.msra.mxu0 %v3219
    %3349 = vmatprep.subr.bf16.mxu0 %v3222
    %3350 = vmatpush1.bf16.msra.mxu0 %v3221
    %3351 = vmatprep.subr.bf16.mxu0 %v3224
    %3352 = vmatpush1.bf16.msra.mxu0 %v3223
    %3353 = vmatprep.subr.bf16.mxu0 %v3226
    %3354 = vmatpush1.bf16.msra.mxu0 %v3225
    %3355 = vmatprep.subr.bf16.mxu0 %v3228
    %3356 = vmatpush1.bf16.msra.mxu0 %v3227
    %3357 = vmatprep.subr.bf16.mxu0 %v3230
    %3358 = vmatpush1.bf16.msra.mxu0 %v3229
    %3359 = vmatprep.subr.bf16.mxu0 %v3232
    %3360 = vmatpush1.bf16.msra.mxu0 %v3231
    %3361 = vmatprep.subr.bf16.mxu0 %v3234
    %3362 = vmatpush1.bf16.msra.mxu0 %v3233
    %3363 = vmatprep.subr.bf16.mxu0 %v3236
    %3364 = vmatpush1.bf16.msra.mxu0 %v3235
    %3365 = vmatprep.subr.bf16.mxu0 %v3238
    %3366 = vmatpush1.bf16.msra.mxu0 %v3237
    %3367 = vmatprep.subr.bf16.mxu0 %v3240
    %3368 = vmatpush1.bf16.msra.mxu0 %v3239
    %3369 = vmatprep.subr.bf16.mxu0 %v3242
    %3370 = vmatpush1.bf16.msra.mxu0 %v3241
    %3371 = vmatprep.subr.bf16.mxu0 %v3244
    %3372 = vmatpush1.bf16.msra.mxu0 %v3243
    %3373 = vmatprep.subr.bf16.mxu0 %v3246
    %3374 = vmatpush1.bf16.msra.mxu0 %v3245
    %3375 = vmatprep.mubr.bf16.mxu0 %v2928
    %3376 = vmatmul.mubr.bf16.gmra.mrb[0].mxu0 %v2927
    %v3377 = vpop.f32.mrb[0].mxu0
    %v3378 = vadd.f32 0.0, %v3377
    %v3379 = vpop.f32.mrb[0].mxu0
    %v3380 = vadd.f32 0.0, %v3379
    %v3381 = vpop.f32.mrb[0].mxu0
    %v3382 = vadd.f32 0.0, %v3381
    %v3383 = vpop.f32.mrb[0].mxu0
    %v3384 = vadd.f32 0.0, %v3383
    %3385 = vmatprep.mubr.bf16.mxu0 %v2932
    %3386 = vmatmul.mubr.bf16.gmra.mrb[0].mxu0 %v2931
    %v3387 = vpop.f32.mrb[0].mxu0
    %v3388 = vadd.f32 0.0, %v3387
    %v3389 = vpop.f32.mrb[0].mxu0
    %v3390 = vadd.f32 0.0, %v3389
    %v3391 = vpop.f32.mrb[0].mxu0
    %v3392 = vadd.f32 0.0, %v3391
    %v3393 = vpop.f32.mrb[0].mxu0
    %v3394 = vadd.f32 0.0, %v3393
    %3395 = vmatprep.mubr.bf16.mxu0 %v2936
    %3396 = vmatmul.mubr.bf16.gmra.mrb[0].mxu0 %v2935
    %v3397 = vpop.f32.mrb[0].mxu0
    %v3398 = vadd.f32 0.0, %v3397
    %v3399 = vpop.f32.mrb[0].mxu0
    %v3400 = vadd.f32 0.0, %v3399
    %v3401 = vpop.f32.mrb[0].mxu0
    %v3402 = vadd.f32 0.0, %v3401
    %v3403 = vpop.f32.mrb[0].mxu0
    %v3404 = vadd.f32 0.0, %v3403
    %3405 = vmatprep.mubr.bf16.mxu0 %v2940
    %3406 = vmatmul.mubr.bf16.gmra.mrb[0].mxu0 %v2939
    %v3407 = vpop.f32.mrb[0].mxu0
    %v3408 = vadd.f32 0.0, %v3407
    %v3409 = vpop.f32.mrb[0].mxu0
    %v3410 = vadd.f32 0.0, %v3409
    %v3411 = vpop.f32.mrb[0].mxu0
    %v3412 = vadd.f32 0.0, %v3411
    %v3413 = vpop.f32.mrb[0].mxu0
    %v3414 = vadd.f32 0.0, %v3413
    %3415 = vmatprep.mubr.bf16.mxu0 %v2944
    %3416 = vmatmul.mubr.bf16.gmra.mrb[0].mxu0 %v2943
    %v3417 = vpop.f32.mrb[0].mxu0
    %v3418 = vadd.f32 0.0, %v3417
    %v3419 = vpop.f32.mrb[0].mxu0
    %v3420 = vadd.f32 0.0, %v3419
    %v3421 = vpop.f32.mrb[0].mxu0
    %v3422 = vadd.f32 0.0, %v3421
    %v3423 = vpop.f32.mrb[0].mxu0
    %v3424 = vadd.f32 0.0, %v3423
    %3425 = vmatprep.mubr.bf16.mxu0 %v2948
    %3426 = vmatmul.mubr.bf16.gmra.mrb[0].mxu0 %v2947
    %v3427 = vpop.f32.mrb[0].mxu0
    %v3428 = vadd.f32 0.0, %v3427
    %v3429 = vpop.f32.mrb[0].mxu0
    %v3430 = vadd.f32 0.0, %v3429
    %v3431 = vpop.f32.mrb[0].mxu0
    %v3432 = vadd.f32 0.0, %v3431
    %v3433 = vpop.f32.mrb[0].mxu0
    %v3434 = vadd.f32 0.0, %v3433
    %3435 = vmatprep.mubr.bf16.mxu0 %v2952
    %3436 = vmatmul.mubr.bf16.gmra.mrb[0].mxu0 %v2951
    %v3437 = vpop.f32.mrb[0].mxu0
    %v3438 = vadd.f32 0.0, %v3437
    %v3439 = vpop.f32.mrb[0].mxu0
    %v3440 = vadd.f32 0.0, %v3439
    %v3441 = vpop.f32.mrb[0].mxu0
    %v3442 = vadd.f32 0.0, %v3441
    %v3443 = vpop.f32.mrb[0].mxu0
    %v3444 = vadd.f32 0.0, %v3443
    %3445 = vmatprep.mubr.bf16.mxu0 %v2956
    %3446 = vmatmul.mubr.bf16.gmra.mrb[0].mxu0 %v2955
    %v3447 = vpop.f32.mrb[0].mxu0
    %v3448 = vadd.f32 0.0, %v3447
    %v3449 = vpop.f32.mrb[0].mxu0
    %v3450 = vadd.f32 0.0, %v3449
    %v3451 = vpop.f32.mrb[0].mxu0
    %v3452 = vadd.f32 0.0, %v3451
    %v3453 = vpop.f32.mrb[0].mxu0
    %v3454 = vadd.f32 0.0, %v3453
    %3455 = vdwg.mxu0
    %3456 = vmatprep.subr.bf16.mxu0 %v3248
    %3457 = vmatpush1.bf16.msra.mxu0 %v3247
    %3458 = vmatprep.subr.bf16.mxu0 %v3250
    %3459 = vmatpush1.bf16.msra.mxu0 %v3249
    %3460 = vmatprep.subr.bf16.mxu0 %v3252
    %3461 = vmatpush1.bf16.msra.mxu0 %v3251
    %3462 = vmatprep.subr.bf16.mxu0 %v3254
    %3463 = vmatpush1.bf16.msra.mxu0 %v3253
    %3464 = vmatprep.subr.bf16.mxu0 %v3256
    %3465 = vmatpush1.bf16.msra.mxu0 %v3255
    %3466 = vmatprep.subr.bf16.mxu0 %v3258
    %3467 = vmatpush1.bf16.msra.mxu0 %v3257
    %3468 = vmatprep.subr.bf16.mxu0 %v3260
    %3469 = vmatpush1.bf16.msra.mxu0 %v3259
    %3470 = vmatprep.subr.bf16.mxu0 %v3262
    %3471 = vmatpush1.bf16.msra.mxu0 %v3261
    %3472 = vmatprep.subr.bf16.mxu0 %v3264
    %3473 = vmatpush1.bf16.msra.mxu0 %v3263
    %3474 = vmatprep.subr.bf16.mxu0 %v3266
    %3475 = vmatpush1.bf16.msra.mxu0 %v3265
    %3476 = vmatprep.subr.bf16.mxu0 %v3268
    %3477 = vmatpush1.bf16.msra.mxu0 %v3267
    %3478 = vmatprep.subr.bf16.mxu0 %v3270
    %3479 = vmatpush1.bf16.msra.mxu0 %v3269
    %3480 = vmatprep.subr.bf16.mxu0 %v3272
    %3481 = vmatpush1.bf16.msra.mxu0 %v3271
    %3482 = vmatprep.subr.bf16.mxu0 %v3274
    %3483 = vmatpush1.bf16.msra.mxu0 %v3273
    %3484 = vmatprep.subr.bf16.mxu0 %v3276
    %3485 = vmatpush1.bf16.msra.mxu0 %v3275
    %3486 = vmatprep.subr.bf16.mxu0 %v3278
    %3487 = vmatpush1.bf16.msra.mxu0 %v3277
    %3488 = vmatprep.mubr.bf16.mxu0 %v2930
    %3489 = vmatmul.mubr.bf16.gmra.mrb[0].mxu0 %v2929
    %v3490 = vpop.f32.mrb[0].mxu0
    %v3491 = vadd.f32 %v3378, %v3490
    %v3492 = vpop.f32.mrb[0].mxu0
    %v3493 = vadd.f32 %v3380, %v3492
    %v3494 = vpop.f32.mrb[0].mxu0
    %v3495 = vadd.f32 %v3382, %v3494
    %v3496 = vpop.f32.mrb[0].mxu0
    %v3497 = vadd.f32 %v3384, %v3496
    %3498 = vmatprep.mubr.bf16.mxu0 %v2934
    %3499 = vmatmul.mubr.bf16.gmra.mrb[0].mxu0 %v2933
    %v3500 = vpop.f32.mrb[0].mxu0
    %v3501 = vadd.f32 %v3388, %v3500
    %v3502 = vpop.f32.mrb[0].mxu0
    %v3503 = vadd.f32 %v3390, %v3502
    %v3504 = vpop.f32.mrb[0].mxu0
    %v3505 = vadd.f32 %v3392, %v3504
    %v3506 = vpop.f32.mrb[0].mxu0
    %v3507 = vadd.f32 %v3394, %v3506
    %3508 = vmatprep.mubr.bf16.mxu0 %v2938
    %3509 = vmatmul.mubr.bf16.gmra.mrb[0].mxu0 %v2937
    %v3510 = vpop.f32.mrb[0].mxu0
    %v3511 = vadd.f32 %v3398, %v3510
    %v3512 = vpop.f32.mrb[0].mxu0
    %v3513 = vadd.f32 %v3400, %v3512
    %v3514 = vpop.f32.mrb[0].mxu0
    %v3515 = vadd.f32 %v3402, %v3514
    %v3516 = vpop.f32.mrb[0].mxu0
    %v3517 = vadd.f32 %v3404, %v3516
    %3518 = vmatprep.mubr.bf16.mxu0 %v2942
    %3519 = vmatmul.mubr.bf16.gmra.mrb[0].mxu0 %v2941
    %v3520 = vpop.f32.mrb[0].mxu0
    %v3521 = vadd.f32 %v3408, %v3520
    %v3522 = vpop.f32.mrb[0].mxu0
    %v3523 = vadd.f32 %v3410, %v3522
    %v3524 = vpop.f32.mrb[0].mxu0
    %v3525 = vadd.f32 %v3412, %v3524
    %v3526 = vpop.f32.mrb[0].mxu0
    %v3527 = vadd.f32 %v3414, %v3526
    %3528 = vmatprep.mubr.bf16.mxu0 %v2946
    %3529 = vmatmul.mubr.bf16.gmra.mrb[0].mxu0 %v2945
    %v3530 = vpop.f32.mrb[0].mxu0
    %v3531 = vadd.f32 %v3418, %v3530
    %v3532 = vpop.f32.mrb[0].mxu0
    %v3533 = vadd.f32 %v3420, %v3532
    %v3534 = vpop.f32.mrb[0].mxu0
    %v3535 = vadd.f32 %v3422, %v3534
    %v3536 = vpop.f32.mrb[0].mxu0
    %v3537 = vadd.f32 %v3424, %v3536
    %3538 = vmatprep.mubr.bf16.mxu0 %v2950
    %3539 = vmatmul.mubr.bf16.gmra.mrb[0].mxu0 %v2949
    %v3540 = vpop.f32.mrb[0].mxu0
    %v3541 = vadd.f32 %v3428, %v3540
    %v3542 = vpop.f32.mrb[0].mxu0
    %v3543 = vadd.f32 %v3430, %v3542
    %v3544 = vpop.f32.mrb[0].mxu0
    %v3545 = vadd.f32 %v3432, %v3544
    %v3546 = vpop.f32.mrb[0].mxu0
    %v3547 = vadd.f32 %v3434, %v3546
    %3548 = vmatprep.mubr.bf16.mxu0 %v2954
    %3549 = vmatmul.mubr.bf16.gmra.mrb[0].mxu0 %v2953
    %v3550 = vpop.f32.mrb[0].mxu0
    %v3551 = vadd.f32 %v3438, %v3550
    %v3552 = vpop.f32.mrb[0].mxu0
    %v3553 = vadd.f32 %v3440, %v3552
    %v3554 = vpop.f32.mrb[0].mxu0
    %v3555 = vadd.f32 %v3442, %v3554
    %v3556 = vpop.f32.mrb[0].mxu0
    %v3557 = vadd.f32 %v3444, %v3556
    %3558 = vmatprep.mubr.bf16.mxu0 %v2958
    %3559 = vmatmul.mubr.bf16.gmra.mrb[0].mxu0 %v2957
    %v3560 = vpop.f32.mrb[0].mxu0
    %v3561 = vadd.f32 %v3448, %v3560
    %v3562 = vpop.f32.mrb[0].mxu0
    %v3563 = vadd.f32 %v3450, %v3562
    %v3564 = vpop.f32.mrb[0].mxu0
    %v3565 = vadd.f32 %v3452, %v3564
    %v3566 = vpop.f32.mrb[0].mxu0
    %v3567 = vadd.f32 %v3454, %v3566
    %3568 = vdwg.mxu0
    %v3569 = vadd.f32 %v3491, %v3495
    %v3570 = vadd.f32 %v3569, %v3501
    %v3571 = vadd.f32 %v3570, %v3505
    %v3572 = vadd.f32 %v3571, %v3511
    %v3573 = vadd.f32 %v3572, %v3515
    %v3574 = vadd.f32 %v3573, %v3521
    %v3575 = vadd.f32 %v3574, %v3525
    %v3576 = vadd.f32 %v3575, %v3531
    %v3577 = vadd.f32 %v3576, %v3535
    %v3578 = vadd.f32 %v3577, %v3541
    %v3579 = vadd.f32 %v3578, %v3545
    %v3580 = vadd.f32 %v3579, %v3551
    %v3581 = vadd.f32 %v3580, %v3555
    %v3582 = vadd.f32 %v3581, %v3561
    %v3583 = vadd.f32 %v3582, %v3565
    %v3584 = vrot.slane %v3583, 4
    %v3585 = vadd.f32 %v3583, %v3584
    %v3586 = vrot.slane %v3585, 2
    %v3587 = vadd.f32 %v3585, %v3586
    %v3588 = vrot.slane %v3587, 1
    %v3589 = vadd.f32 %v3587, %v3588
    %v3590 = vadd.f32 %v3493, %v3497
    %v3591 = vadd.f32 %v3590, %v3503
    %v3592 = vadd.f32 %v3591, %v3507
    %v3593 = vadd.f32 %v3592, %v3513
    %v3594 = vadd.f32 %v3593, %v3517
    %v3595 = vadd.f32 %v3594, %v3523
    %v3596 = vadd.f32 %v3595, %v3527
    %v3597 = vadd.f32 %v3596, %v3533
    %v3598 = vadd.f32 %v3597, %v3537
    %v3599 = vadd.f32 %v3598, %v3543
    %v3600 = vadd.f32 %v3599, %v3547
    %v3601 = vadd.f32 %v3600, %v3553
    %v3602 = vadd.f32 %v3601, %v3557
    %v3603 = vadd.f32 %v3602, %v3563
    %v3604 = vadd.f32 %v3603, %v3567
    %v3605 = vrot.slane %v3604, 4
    %v3606 = vadd.f32 %v3604, %v3605
    %v3607 = vrot.slane %v3606, 2
    %v3608 = vadd.f32 %v3606, %v3607
    %v3609 = vrot.slane %v3608, 1
    %v3610 = vadd.f32 %v3608, %v3609
    %v3611 = vmul.f32 %v3589, %v2450
    %v3612 = vmul.f32 %v3610, %v2450
    %v3613 = vmul.f32 %v3491, %v3491
    %v3614 = vmul.f32 %v3493, %v3493
    %v3615 = vmul.f32 %v3495, %v3495
    %v3616 = vmul.f32 %v3497, %v3497
    %v3617 = vmul.f32 %v3501, %v3501
    %v3618 = vmul.f32 %v3503, %v3503
    %v3619 = vmul.f32 %v3505, %v3505
    %v3620 = vmul.f32 %v3507, %v3507
    %v3621 = vmul.f32 %v3511, %v3511
    %v3622 = vmul.f32 %v3513, %v3513
    %v3623 = vmul.f32 %v3515, %v3515
    %v3624 = vmul.f32 %v3517, %v3517
    %v3625 = vmul.f32 %v3521, %v3521
    %v3626 = vmul.f32 %v3523, %v3523
    %v3627 = vmul.f32 %v3525, %v3525
    %v3628 = vmul.f32 %v3527, %v3527
    %v3629 = vmul.f32 %v3531, %v3531
    %v3630 = vmul.f32 %v3533, %v3533
    %v3631 = vmul.f32 %v3535, %v3535
    %v3632 = vmul.f32 %v3537, %v3537
    %v3633 = vmul.f32 %v3541, %v3541
    %v3634 = vmul.f32 %v3543, %v3543
    %v3635 = vmul.f32 %v3545, %v3545
    %v3636 = vmul.f32 %v3547, %v3547
    %v3637 = vmul.f32 %v3551, %v3551
    %v3638 = vmul.f32 %v3553, %v3553
    %v3639 = vmul.f32 %v3555, %v3555
    %v3640 = vmul.f32 %v3557, %v3557
    %v3641 = vmul.f32 %v3561, %v3561
    %v3642 = vmul.f32 %v3563, %v3563
    %v3643 = vmul.f32 %v3565, %v3565
    %v3644 = vmul.f32 %v3567, %v3567
    %v3645 = vadd.f32 %v3613, %v3615
    %v3646 = vadd.f32 %v3645, %v3617
    %v3647 = vadd.f32 %v3646, %v3619
    %v3648 = vadd.f32 %v3647, %v3621
    %v3649 = vadd.f32 %v3648, %v3623
    %v3650 = vadd.f32 %v3649, %v3625
    %v3651 = vadd.f32 %v3650, %v3627
    %v3652 = vadd.f32 %v3651, %v3629
    %v3653 = vadd.f32 %v3652, %v3631
    %v3654 = vadd.f32 %v3653, %v3633
    %v3655 = vadd.f32 %v3654, %v3635
    %v3656 = vadd.f32 %v3655, %v3637
    %v3657 = vadd.f32 %v3656, %v3639
    %v3658 = vadd.f32 %v3657, %v3641
    %v3659 = vadd.f32 %v3658, %v3643
    %v3660 = vrot.slane %v3659, 4
    %v3661 = vadd.f32 %v3659, %v3660
    %v3662 = vrot.slane %v3661, 2
    %v3663 = vadd.f32 %v3661, %v3662
    %v3664 = vrot.slane %v3663, 1
    %v3665 = vadd.f32 %v3663, %v3664
    %v3666 = vadd.f32 %v3614, %v3616
    %v3667 = vadd.f32 %v3666, %v3618
    %v3668 = vadd.f32 %v3667, %v3620
    %v3669 = vadd.f32 %v3668, %v3622
    %v3670 = vadd.f32 %v3669, %v3624
    %v3671 = vadd.f32 %v3670, %v3626
    %v3672 = vadd.f32 %v3671, %v3628
    %v3673 = vadd.f32 %v3672, %v3630
    %v3674 = vadd.f32 %v3673, %v3632
    %v3675 = vadd.f32 %v3674, %v3634
    %v3676 = vadd.f32 %v3675, %v3636
    %v3677 = vadd.f32 %v3676, %v3638
    %v3678 = vadd.f32 %v3677, %v3640
    %v3679 = vadd.f32 %v3678, %v3642
    %v3680 = vadd.f32 %v3679, %v3644
    %v3681 = vrot.slane %v3680, 4
    %v3682 = vadd.f32 %v3680, %v3681
    %v3683 = vrot.slane %v3682, 2
    %v3684 = vadd.f32 %v3682, %v3683
    %v3685 = vrot.slane %v3684, 1
    %v3686 = vadd.f32 %v3684, %v3685
    %v3687 = vmul.f32 %v3665, %v2450
    %v3688 = vmul.f32 %v3686, %v2450
    %v3689 = vmul.f32 %v3611, %v3611
    %v3690 = vmul.f32 %v3612, %v3612
    %v3691 = vsub.f32 %v3687, %v3689
    %v3692 = vsub.f32 %v3688, %v3690
    %v3693 = vmax.f32 %v3691, 0.0
    %v3694 = vmax.f32 %v3692, 0.0
    %v3695 = vld [vmem:[%s5] sm:$0x3]
    %v3696 = vadd.f32 %v3693, 1e-05
    %v3697 = vadd.f32 %v3694, 1e-05
    %v3698 = vrsqrt.pop %v3696
    %v3699 = vrsqrt.pop %v3697
    %v3702 = vcombine.low %v3698, %v3699
    %v3704 = vunpack.c.l.s4 1966171168
    %v3705 = vunpack.c.0.s8 %v3704
    %v3706 = vlaneseq
    %v3707 = vshrl.u32 %v3706, 7
    %v3708 = vsub.s32 %v3705, %v3707
    %v3709 = vrot.slane %v3702, %v3708
    %v3711 = vunpack.c.l.s4 1966171168
    %v3712 = vunpack.c.0.s8 %v3711
    %v3713 = vlaneseq
    %v3714 = vshrl.u32 %v3713, 7
    %v3715 = vsub.s32 %v3712, %v3714
    %v3716 = vrot.slane %v3709, %v3715
    %v3718 = vmul.f32 %v3695, %v3716
    %v3719 = vld [vmem:[#allocation7] sm:$0x3]
    %v3721 = vlaneseq
    %v3722 = vshrl.u32 %v3721, 7
    %v3723 = vsub.s32 0, %v3722
    %v3724 = vrot.slane %v3718, %v3723
    %v3725 = vlaneseq
    %v3726 = vshrl.u32 %v3725, 7
    %v3727 = vsub.s32 1, %v3726
    %v3728 = vrot.slane %v3718, %v3727
    %v3731 = vmul.f32 %v3611, %v3724
    %v3732 = vmul.f32 %v3612, %v3728
    %v3735 = vcombine.low %v3731, %v3732
    %v3737 = vunpack.c.l.s4 1966171168
    %v3738 = vunpack.c.0.s8 %v3737
    %v3739 = vlaneseq
    %v3740 = vshrl.u32 %v3739, 7
    %v3741 = vsub.s32 %v3738, %v3740
    %v3742 = vrot.slane %v3735, %v3741
    %v3744 = vunpack.c.l.s4 1966171168
    %v3745 = vunpack.c.0.s8 %v3744
    %v3746 = vlaneseq
    %v3747 = vshrl.u32 %v3746, 7
    %v3748 = vsub.s32 %v3745, %v3747
    %v3749 = vrot.slane %v3742, %v3748
    %v3751 = vsub.f32 %v3719, %v3749
    %v3752 = vmul.f32 %v3491, %v3724
    %v3753 = vmul.f32 %v3493, %v3728
    %v3754 = vmul.f32 %v3495, %v3724
    %v3755 = vmul.f32 %v3497, %v3728
    %v3756 = vmul.f32 %v3501, %v3724
    %v3757 = vmul.f32 %v3503, %v3728
    %v3758 = vmul.f32 %v3505, %v3724
    %v3759 = vmul.f32 %v3507, %v3728
    %v3760 = vmul.f32 %v3511, %v3724
    %v3761 = vmul.f32 %v3513, %v3728
    %v3762 = vmul.f32 %v3515, %v3724
    %v3763 = vmul.f32 %v3517, %v3728
    %v3764 = vmul.f32 %v3521, %v3724
    %v3765 = vmul.f32 %v3523, %v3728
    %v3766 = vmul.f32 %v3525, %v3724
    %v3767 = vmul.f32 %v3527, %v3728
    %v3768 = vmul.f32 %v3531, %v3724
    %v3769 = vmul.f32 %v3533, %v3728
    %v3770 = vmul.f32 %v3535, %v3724
    %v3771 = vmul.f32 %v3537, %v3728
    %v3772 = vmul.f32 %v3541, %v3724
    %v3773 = vmul.f32 %v3543, %v3728
    %v3774 = vmul.f32 %v3545, %v3724
    %v3775 = vmul.f32 %v3547, %v3728
    %v3776 = vmul.f32 %v3551, %v3724
    %v3777 = vmul.f32 %v3553, %v3728
    %v3778 = vmul.f32 %v3555, %v3724
    %v3779 = vmul.f32 %v3557, %v3728
    %v3780 = vmul.f32 %v3561, %v3724
    %v3781 = vmul.f32 %v3563, %v3728
    %v3782 = vmul.f32 %v3565, %v3724
    %v3783 = vmul.f32 %v3567, %v3728
    %v3785 = vlaneseq
    %v3786 = vshrl.u32 %v3785, 7
    %v3787 = vsub.s32 0, %v3786
    %v3788 = vrot.slane %v3751, %v3787
    %v3789 = vlaneseq
    %v3790 = vshrl.u32 %v3789, 7
    %v3791 = vsub.s32 1, %v3790
    %v3792 = vrot.slane %v3751, %v3791
    %v3795 = vadd.f32 %v3752, %v3788
    %v3796 = vadd.f32 %v3753, %v3792
    %v3797 = vadd.f32 %v3754, %v3788
    %v3798 = vadd.f32 %v3755, %v3792
    %v3799 = vadd.f32 %v3756, %v3788
    %v3800 = vadd.f32 %v3757, %v3792
    %v3801 = vadd.f32 %v3758, %v3788
    %v3802 = vadd.f32 %v3759, %v3792
    %v3803 = vadd.f32 %v3760, %v3788
    %v3804 = vadd.f32 %v3761, %v3792
    %v3805 = vadd.f32 %v3762, %v3788
    %v3806 = vadd.f32 %v3763, %v3792
    %v3807 = vadd.f32 %v3764, %v3788
    %v3808 = vadd.f32 %v3765, %v3792
    %v3809 = vadd.f32 %v3766, %v3788
    %v3810 = vadd.f32 %v3767, %v3792
    %v3811 = vadd.f32 %v3768, %v3788
    %v3812 = vadd.f32 %v3769, %v3792
    %v3813 = vadd.f32 %v3770, %v3788
    %v3814 = vadd.f32 %v3771, %v3792
    %v3815 = vadd.f32 %v3772, %v3788
    %v3816 = vadd.f32 %v3773, %v3792
    %v3817 = vadd.f32 %v3774, %v3788
    %v3818 = vadd.f32 %v3775, %v3792
    %v3819 = vadd.f32 %v3776, %v3788
    %v3820 = vadd.f32 %v3777, %v3792
    %v3821 = vadd.f32 %v3778, %v3788
    %v3822 = vadd.f32 %v3779, %v3792
    %v3823 = vadd.f32 %v3780, %v3788
    %v3824 = vadd.f32 %v3781, %v3792
    %v3825 = vadd.f32 %v3782, %v3788
    %v3826 = vadd.f32 %v3783, %v3792
    %v3827 = vmax.f32 %v3795, 0.0
    %v3828 = vmax.f32 %v3796, 0.0
    %v3829 = vmax.f32 %v3797, 0.0
    %v3830 = vmax.f32 %v3798, 0.0
    %v3831 = vmax.f32 %v3799, 0.0
    %v3832 = vmax.f32 %v3800, 0.0
    %v3833 = vmax.f32 %v3801, 0.0
    %v3834 = vmax.f32 %v3802, 0.0
    %v3835 = vmax.f32 %v3803, 0.0
    %v3836 = vmax.f32 %v3804, 0.0
    %v3837 = vmax.f32 %v3805, 0.0
    %v3838 = vmax.f32 %v3806, 0.0
    %v3839 = vmax.f32 %v3807, 0.0
    %v3840 = vmax.f32 %v3808, 0.0
    %v3841 = vmax.f32 %v3809, 0.0
    %v3842 = vmax.f32 %v3810, 0.0
    %v3843 = vmax.f32 %v3811, 0.0
    %v3844 = vmax.f32 %v3812, 0.0
    %v3845 = vmax.f32 %v3813, 0.0
    %v3846 = vmax.f32 %v3814, 0.0
    %v3847 = vmax.f32 %v3815, 0.0
    %v3848 = vmax.f32 %v3816, 0.0
    %v3849 = vmax.f32 %v3817, 0.0
    %v3850 = vmax.f32 %v3818, 0.0
    %v3851 = vmax.f32 %v3819, 0.0
    %v3852 = vmax.f32 %v3820, 0.0
    %v3853 = vmax.f32 %v3821, 0.0
    %v3854 = vmax.f32 %v3822, 0.0
    %v3855 = vmax.f32 %v3823, 0.0
    %v3856 = vmax.f32 %v3824, 0.0
    %v3857 = vmax.f32 %v3825, 0.0
    %v3858 = vmax.f32 %v3826, 0.0
    %v3859 = vpack.c.bf16 %v3829, %v3827
    %v3860 = vpack.c.bf16 %v3830, %v3828
    %v3861 = vpack.c.bf16 %v3833, %v3831
    %v3862 = vpack.c.bf16 %v3834, %v3832
    %v3863 = vpack.c.bf16 %v3837, %v3835
    %v3864 = vpack.c.bf16 %v3838, %v3836
    %v3865 = vpack.c.bf16 %v3841, %v3839
    %v3866 = vpack.c.bf16 %v3842, %v3840
    %v3867 = vpack.c.bf16 %v3845, %v3843
    %v3868 = vpack.c.bf16 %v3846, %v3844
    %v3869 = vpack.c.bf16 %v3849, %v3847
    %v3870 = vpack.c.bf16 %v3850, %v3848
    %v3871 = vpack.c.bf16 %v3853, %v3851
    %v3872 = vpack.c.bf16 %v3854, %v3852
    %v3873 = vpack.c.bf16 %v3857, %v3855
    %v3874 = vpack.c.bf16 %v3858, %v3856
    %v3875 = vld [vmem:[%s7] sm:$0xf]
    %v3876 = vld [vmem:[%s7 + $0x4] sm:$0xf]
    %v3877 = vld [vmem:[%s7 + $0x8] sm:$0xf]
    %v3878 = vld [vmem:[%s7 + $0xc] sm:$0xf]
    %v3879 = vld [vmem:[%s7 + $0x10] sm:$0xf]
    %v3880 = vld [vmem:[%s7 + $0x14] sm:$0xf]
    %v3881 = vld [vmem:[%s7 + $0x18] sm:$0xf]
    %v3882 = vld [vmem:[%s7 + $0x1c] sm:$0xf]
    %v3883 = vld [vmem:[%s7 + $0x20] sm:$0xf]
    %v3884 = vld [vmem:[%s7 + $0x24] sm:$0xf]
    %v3885 = vld [vmem:[%s7 + $0x28] sm:$0xf]
    %v3886 = vld [vmem:[%s7 + $0x2c] sm:$0xf]
    %v3887 = vld [vmem:[%s7 + $0x30] sm:$0xf]
    %v3888 = vld [vmem:[%s7 + $0x34] sm:$0xf]
    %v3889 = vld [vmem:[%s7 + $0x38] sm:$0xf]
    %v3890 = vld [vmem:[%s7 + $0x3c] sm:$0xf]
    %v3891 = vld [vmem:[%s7 + $0x40] sm:$0xf]
    %v3892 = vld [vmem:[%s7 + $0x44] sm:$0xf]
    %v3893 = vld [vmem:[%s7 + $0x48] sm:$0xf]
    %v3894 = vld [vmem:[%s7 + $0x4c] sm:$0xf]
    %v3895 = vld [vmem:[%s7 + $0x50] sm:$0xf]
    %v3896 = vld [vmem:[%s7 + $0x54] sm:$0xf]
    %v3897 = vld [vmem:[%s7 + $0x58] sm:$0xf]
    %v3898 = vld [vmem:[%s7 + $0x5c] sm:$0xf]
    %v3899 = vld [vmem:[%s7 + $0x60] sm:$0xf]
    %v3900 = vld [vmem:[%s7 + $0x64] sm:$0xf]
    %v3901 = vld [vmem:[%s7 + $0x68] sm:$0xf]
    %v3902 = vld [vmem:[%s7 + $0x6c] sm:$0xf]
    %v3903 = vld [vmem:[%s7 + $0x70] sm:$0xf]
    %v3904 = vld [vmem:[%s7 + $0x74] sm:$0xf]
    %v3905 = vld [vmem:[%s7 + $0x78] sm:$0xf]
    %v3906 = vld [vmem:[%s7 + $0x7c] sm:$0xf]
    %v3907 = vld [vmem:[#allocation9] sm:$0x1]
    %v3909 = vlaneseq
    %v3910 = vshrl.u32 %v3909, 7
    %v3911 = vsub.s32 0, %v3910
    %v3912 = vrot.slane %v3907, %v3911
    %v3946 = vunpack.c.l.b16 %v3875
    %v3947 = vunpack.c.l.b16 %v3876
    %v3948 = vunpack.c.l.b16 %v3877
    %v3949 = vunpack.c.l.b16 %v3878
    %v3950 = vunpack.c.l.b16 %v3879
    %v3951 = vunpack.c.l.b16 %v3880
    %v3952 = vunpack.c.l.b16 %v3881
    %v3953 = vunpack.c.l.b16 %v3882
    %v3954 = vunpack.c.l.b16 %v3883
    %v3955 = vunpack.c.l.b16 %v3884
    %v3956 = vunpack.c.l.b16 %v3885
    %v3957 = vunpack.c.l.b16 %v3886
    %v3958 = vunpack.c.l.b16 %v3887
    %v3959 = vunpack.c.l.b16 %v3888
    %v3960 = vunpack.c.l.b16 %v3889
    %v3961 = vunpack.c.l.b16 %v3890
    %v3962 = vunpack.c.l.b16 %v3891
    %v3963 = vunpack.c.l.b16 %v3892
    %v3964 = vunpack.c.l.b16 %v3893
    %v3965 = vunpack.c.l.b16 %v3894
    %v3966 = vunpack.c.l.b16 %v3895
    %v3967 = vunpack.c.l.b16 %v3896
    %v3968 = vunpack.c.l.b16 %v3897
    %v3969 = vunpack.c.l.b16 %v3898
    %v3970 = vunpack.c.l.b16 %v3899
    %v3971 = vunpack.c.l.b16 %v3900
    %v3972 = vunpack.c.l.b16 %v3901
    %v3973 = vunpack.c.l.b16 %v3902
    %v3974 = vunpack.c.l.b16 %v3903
    %v3975 = vunpack.c.l.b16 %v3904
    %v3976 = vunpack.c.l.b16 %v3905
    %v3977 = vunpack.c.l.b16 %v3906
    %v3978 = vpack.c.b16 %v3947, %v3946
    %v3979 = vpack.c.b16 %v3949, %v3948
    %v3980 = vpack.c.b16 %v3951, %v3950
    %v3981 = vpack.c.b16 %v3953, %v3952
    %v3982 = vpack.c.b16 %v3955, %v3954
    %v3983 = vpack.c.b16 %v3957, %v3956
    %v3984 = vpack.c.b16 %v3959, %v3958
    %v3985 = vpack.c.b16 %v3961, %v3960
    %v3986 = vpack.c.b16 %v3963, %v3962
    %v3987 = vpack.c.b16 %v3965, %v3964
    %v3988 = vpack.c.b16 %v3967, %v3966
    %v3989 = vpack.c.b16 %v3969, %v3968
    %v3990 = vpack.c.b16 %v3971, %v3970
    %v3991 = vpack.c.b16 %v3973, %v3972
    %v3992 = vpack.c.b16 %v3975, %v3974
    %v3993 = vpack.c.b16 %v3977, %v3976
    %4010 = vmatprep.subr.bf16.mxu0 0
    %4011 = vmatpush1.bf16.msra.mxu0 %v3978
    %4012 = vmatprep.subr.bf16.mxu0 0
    %4013 = vmatpush1.bf16.msra.mxu0 %v3979
    %4014 = vmatprep.subr.bf16.mxu0 0
    %4015 = vmatpush1.bf16.msra.mxu0 %v3980
    %4016 = vmatprep.subr.bf16.mxu0 0
    %4017 = vmatpush1.bf16.msra.mxu0 %v3981
    %4018 = vmatprep.subr.bf16.mxu0 0
    %4019 = vmatpush1.bf16.msra.mxu0 %v3982
    %4020 = vmatprep.subr.bf16.mxu0 0
    %4021 = vmatpush1.bf16.msra.mxu0 %v3983
    %4022 = vmatprep.subr.bf16.mxu0 0
    %4023 = vmatpush1.bf16.msra.mxu0 %v3984
    %4024 = vmatprep.subr.bf16.mxu0 0
    %4025 = vmatpush1.bf16.msra.mxu0 %v3985
    %4026 = vmatprep.subr.bf16.mxu0 0
    %4027 = vmatpush1.bf16.msra.mxu0 %v3986
    %4028 = vmatprep.subr.bf16.mxu0 0
    %4029 = vmatpush1.bf16.msra.mxu0 %v3987
    %4030 = vmatprep.subr.bf16.mxu0 0
    %4031 = vmatpush1.bf16.msra.mxu0 %v3988
    %4032 = vmatprep.subr.bf16.mxu0 0
    %4033 = vmatpush1.bf16.msra.mxu0 %v3989
    %4034 = vmatprep.subr.bf16.mxu0 0
    %4035 = vmatpush1.bf16.msra.mxu0 %v3990
    %4036 = vmatprep.subr.bf16.mxu0 0
    %4037 = vmatpush1.bf16.msra.mxu0 %v3991
    %4038 = vmatprep.subr.bf16.mxu0 0
    %4039 = vmatpush1.bf16.msra.mxu0 %v3992
    %4040 = vmatprep.subr.bf16.mxu0 0
    %4041 = vmatpush1.bf16.msra.mxu0 %v3993
    %4042 = vmatprep.mubr.bf16.mxu0 %v3860
    %4043 = vmatmul.mubr.bf16.gmra.mrb[0].mxu0 %v3859
    %v4044 = vpop.f32.mrb[0].mxu0
    %v4045 = vadd.f32 %v3912, %v4044
    %v4046 = vpop.f32.mrb[0].mxu0
    %v4047 = vpop.f32.mrb[0].mxu0
    %v4048 = vadd.f32 %v3912, %v4047
    %v4049 = vpop.f32.mrb[0].mxu0
    %4050 = vmatprep.mubr.bf16.mxu0 %v3862
    %4051 = vmatmul.mubr.bf16.gmra.mrb[0].mxu0 %v3861
    %v4052 = vpop.f32.mrb[0].mxu0
    %v4053 = vadd.f32 %v3912, %v4052
    %v4054 = vpop.f32.mrb[0].mxu0
    %v4055 = vpop.f32.mrb[0].mxu0
    %v4056 = vadd.f32 %v3912, %v4055
    %v4057 = vpop.f32.mrb[0].mxu0
    %4058 = vmatprep.mubr.bf16.mxu0 %v3864
    %4059 = vmatmul.mubr.bf16.gmra.mrb[0].mxu0 %v3863
    %v4060 = vpop.f32.mrb[0].mxu0
    %v4061 = vadd.f32 %v3912, %v4060
    %v4062 = vpop.f32.mrb[0].mxu0
    %v4063 = vpop.f32.mrb[0].mxu0
    %v4064 = vadd.f32 %v3912, %v4063
    %v4065 = vpop.f32.mrb[0].mxu0
    %4066 = vmatprep.mubr.bf16.mxu0 %v3866
    %4067 = vmatmul.mubr.bf16.gmra.mrb[0].mxu0 %v3865
    %v4068 = vpop.f32.mrb[0].mxu0
    %v4069 = vadd.f32 %v3912, %v4068
    %v4070 = vpop.f32.mrb[0].mxu0
    %v4071 = vpop.f32.mrb[0].mxu0
    %v4072 = vadd.f32 %v3912, %v4071
    %v4073 = vpop.f32.mrb[0].mxu0
    %4074 = vmatprep.mubr.bf16.mxu0 %v3868
    %4075 = vmatmul.mubr.bf16.gmra.mrb[0].mxu0 %v3867
    %v4076 = vpop.f32.mrb[0].mxu0
    %v4077 = vadd.f32 %v3912, %v4076
    %v4078 = vpop.f32.mrb[0].mxu0
    %v4079 = vpop.f32.mrb[0].mxu0
    %v4080 = vadd.f32 %v3912, %v4079
    %v4081 = vpop.f32.mrb[0].mxu0
    %4082 = vmatprep.mubr.bf16.mxu0 %v3870
    %4083 = vmatmul.mubr.bf16.gmra.mrb[0].mxu0 %v3869
    %v4084 = vpop.f32.mrb[0].mxu0
    %v4085 = vadd.f32 %v3912, %v4084
    %v4086 = vpop.f32.mrb[0].mxu0
    %v4087 = vpop.f32.mrb[0].mxu0
    %v4088 = vadd.f32 %v3912, %v4087
    %v4089 = vpop.f32.mrb[0].mxu0
    %4090 = vmatprep.mubr.bf16.mxu0 %v3872
    %4091 = vmatmul.mubr.bf16.gmra.mrb[0].mxu0 %v3871
    %v4092 = vpop.f32.mrb[0].mxu0
    %v4093 = vadd.f32 %v3912, %v4092
    %v4094 = vpop.f32.mrb[0].mxu0
    %v4095 = vpop.f32.mrb[0].mxu0
    %v4096 = vadd.f32 %v3912, %v4095
    %v4097 = vpop.f32.mrb[0].mxu0
    %4098 = vmatprep.mubr.bf16.mxu0 %v3874
    %4099 = vmatmul.mubr.bf16.gmra.mrb[0].mxu0 %v3873
    %v4100 = vpop.f32.mrb[0].mxu0
    %v4101 = vadd.f32 %v3912, %v4100
    %v4102 = vpop.f32.mrb[0].mxu0
    %v4103 = vpop.f32.mrb[0].mxu0
    %v4104 = vadd.f32 %v3912, %v4103
    %v4105 = vpop.f32.mrb[0].mxu0
    %4106 = vdwg.mxu0
    %4107 = vmax.xlane.f32.xlu0 %v4045
    %v4108 = vpop.xlane.xlu0 %4107
    %4109 = vmax.xlane.f32.xlu0 %v4048
    %v4110 = vpop.xlane.xlu0 %4109
    %4111 = vmax.xlane.f32.xlu0 %v4053
    %v4112 = vpop.xlane.xlu0 %4111
    %4113 = vmax.xlane.f32.xlu0 %v4056
    %v4114 = vpop.xlane.xlu0 %4113
    %4115 = vmax.xlane.f32.xlu0 %v4061
    %v4116 = vpop.xlane.xlu0 %4115
    %4117 = vmax.xlane.f32.xlu0 %v4064
    %v4118 = vpop.xlane.xlu0 %4117
    %4119 = vmax.xlane.f32.xlu0 %v4069
    %v4120 = vpop.xlane.xlu0 %4119
    %4121 = vmax.xlane.f32.xlu0 %v4072
    %v4122 = vpop.xlane.xlu0 %4121
    %4123 = vmax.xlane.f32.xlu0 %v4077
    %v4124 = vpop.xlane.xlu0 %4123
    %4125 = vmax.xlane.f32.xlu0 %v4080
    %v4126 = vpop.xlane.xlu0 %4125
    %4127 = vmax.xlane.f32.xlu0 %v4085
    %v4128 = vpop.xlane.xlu0 %4127
    %4129 = vmax.xlane.f32.xlu0 %v4088
    %v4130 = vpop.xlane.xlu0 %4129
    %4131 = vmax.xlane.f32.xlu0 %v4093
    %v4132 = vpop.xlane.xlu0 %4131
    %4133 = vmax.xlane.f32.xlu0 %v4096
    %v4134 = vpop.xlane.xlu0 %4133
    %4135 = vmax.xlane.f32.xlu0 %v4101
    %v4136 = vpop.xlane.xlu0 %4135
    %4137 = vmax.xlane.f32.xlu0 %v4104
    %v4138 = vpop.xlane.xlu0 %4137
    %v4139 = vsub.f32 %v4045, %v4108
    %v4140 = vsub.f32 %v4048, %v4110
    %v4141 = vsub.f32 %v4053, %v4112
    %v4142 = vsub.f32 %v4056, %v4114
    %v4143 = vsub.f32 %v4061, %v4116
    %v4144 = vsub.f32 %v4064, %v4118
    %v4145 = vsub.f32 %v4069, %v4120
    %v4146 = vsub.f32 %v4072, %v4122
    %v4147 = vsub.f32 %v4077, %v4124
    %v4148 = vsub.f32 %v4080, %v4126
    %v4149 = vsub.f32 %v4085, %v4128
    %v4150 = vsub.f32 %v4088, %v4130
    %v4151 = vsub.f32 %v4093, %v4132
    %v4152 = vsub.f32 %v4096, %v4134
    %v4153 = vsub.f32 %v4101, %v4136
    %v4154 = vsub.f32 %v4104, %v4138
    %v4155 = vmul.f32 %v4139, 1.442695
    %v4156 = vpow.pop %v4155
    %v4157 = vmul.f32 %v4140, 1.442695
    %v4158 = vpow.pop %v4157
    %v4159 = vmul.f32 %v4141, 1.442695
    %v4160 = vpow.pop %v4159
    %v4161 = vmul.f32 %v4142, 1.442695
    %v4162 = vpow.pop %v4161
    %v4163 = vmul.f32 %v4143, 1.442695
    %v4164 = vpow.pop %v4163
    %v4165 = vmul.f32 %v4144, 1.442695
    %v4166 = vpow.pop %v4165
    %v4167 = vmul.f32 %v4145, 1.442695
    %v4168 = vpow.pop %v4167
    %v4169 = vmul.f32 %v4146, 1.442695
    %v4170 = vpow.pop %v4169
    %v4171 = vmul.f32 %v4147, 1.442695
    %v4172 = vpow.pop %v4171
    %v4173 = vmul.f32 %v4148, 1.442695
    %v4174 = vpow.pop %v4173
    %v4175 = vmul.f32 %v4149, 1.442695
    %v4176 = vpow.pop %v4175
    %v4177 = vmul.f32 %v4150, 1.442695
    %v4178 = vpow.pop %v4177
    %v4179 = vmul.f32 %v4151, 1.442695
    %v4180 = vpow.pop %v4179
    %v4181 = vmul.f32 %v4152, 1.442695
    %v4182 = vpow.pop %v4181
    %v4183 = vmul.f32 %v4153, 1.442695
    %v4184 = vpow.pop %v4183
    %v4185 = vmul.f32 %v4154, 1.442695
    %v4186 = vpow.pop %v4185
    %4187 = vadd.xlane.f32.xlu0 %v4156
    %v4188 = vpop.xlane.xlu0 %4187
    %4189 = vadd.xlane.f32.xlu0 %v4158
    %v4190 = vpop.xlane.xlu0 %4189
    %4191 = vadd.xlane.f32.xlu0 %v4160
    %v4192 = vpop.xlane.xlu0 %4191
    %4193 = vadd.xlane.f32.xlu0 %v4162
    %v4194 = vpop.xlane.xlu0 %4193
    %4195 = vadd.xlane.f32.xlu0 %v4164
    %v4196 = vpop.xlane.xlu0 %4195
    %4197 = vadd.xlane.f32.xlu0 %v4166
    %v4198 = vpop.xlane.xlu0 %4197
    %4199 = vadd.xlane.f32.xlu0 %v4168
    %v4200 = vpop.xlane.xlu0 %4199
    %4201 = vadd.xlane.f32.xlu0 %v4170
    %v4202 = vpop.xlane.xlu0 %4201
    %4203 = vadd.xlane.f32.xlu0 %v4172
    %v4204 = vpop.xlane.xlu0 %4203
    %4205 = vadd.xlane.f32.xlu0 %v4174
    %v4206 = vpop.xlane.xlu0 %4205
    %4207 = vadd.xlane.f32.xlu0 %v4176
    %v4208 = vpop.xlane.xlu0 %4207
    %4209 = vadd.xlane.f32.xlu0 %v4178
    %v4210 = vpop.xlane.xlu0 %4209
    %4211 = vadd.xlane.f32.xlu0 %v4180
    %v4212 = vpop.xlane.xlu0 %4211
    %4213 = vadd.xlane.f32.xlu0 %v4182
    %v4214 = vpop.xlane.xlu0 %4213
    %4215 = vadd.xlane.f32.xlu0 %v4184
    %v4216 = vpop.xlane.xlu0 %4215
    %4217 = vadd.xlane.f32.xlu0 %v4186
    %v4218 = vpop.xlane.xlu0 %4217
    %v4219 = vlog2.pop %v4188
    %v4220 = vmul.f32 %v4219, 0.6931472
    %v4221 = vlog2.pop %v4190
    %v4222 = vmul.f32 %v4221, 0.6931472
    %v4223 = vlog2.pop %v4192
    %v4224 = vmul.f32 %v4223, 0.6931472
    %v4225 = vlog2.pop %v4194
    %v4226 = vmul.f32 %v4225, 0.6931472
    %v4227 = vlog2.pop %v4196
    %v4228 = vmul.f32 %v4227, 0.6931472
    %v4229 = vlog2.pop %v4198
    %v4230 = vmul.f32 %v4229, 0.6931472
    %v4231 = vlog2.pop %v4200
    %v4232 = vmul.f32 %v4231, 0.6931472
    %v4233 = vlog2.pop %v4202
    %v4234 = vmul.f32 %v4233, 0.6931472
    %v4235 = vlog2.pop %v4204
    %v4236 = vmul.f32 %v4235, 0.6931472
    %v4237 = vlog2.pop %v4206
    %v4238 = vmul.f32 %v4237, 0.6931472
    %v4239 = vlog2.pop %v4208
    %v4240 = vmul.f32 %v4239, 0.6931472
    %v4241 = vlog2.pop %v4210
    %v4242 = vmul.f32 %v4241, 0.6931472
    %v4243 = vlog2.pop %v4212
    %v4244 = vmul.f32 %v4243, 0.6931472
    %v4245 = vlog2.pop %v4214
    %v4246 = vmul.f32 %v4245, 0.6931472
    %v4247 = vlog2.pop %v4216
    %v4248 = vmul.f32 %v4247, 0.6931472
    %v4249 = vlog2.pop %v4218
    %v4250 = vmul.f32 %v4249, 0.6931472
    %v4251 = vsub.f32 %v4139, %v4220
    %v4252 = vsub.f32 %v4140, %v4222
    %v4253 = vsub.f32 %v4141, %v4224
    %v4254 = vsub.f32 %v4142, %v4226
    %v4255 = vsub.f32 %v4143, %v4228
    %v4256 = vsub.f32 %v4144, %v4230
    %v4257 = vsub.f32 %v4145, %v4232
    %v4258 = vsub.f32 %v4146, %v4234
    %v4259 = vsub.f32 %v4147, %v4236
    %v4260 = vsub.f32 %v4148, %v4238
    %v4261 = vsub.f32 %v4149, %v4240
    %v4262 = vsub.f32 %v4150, %v4242
    %v4263 = vsub.f32 %v4151, %v4244
    %v4264 = vsub.f32 %v4152, %v4246
    %v4265 = vsub.f32 %v4153, %v4248
    %v4266 = vsub.f32 %v4154, %v4250
    %4267 = vst [vmem:[%s9] sm:$0xff] %v4251
    %4268 = vst [vmem:[%s9 + $0x8] sm:$0xff] %v4252
    %4269 = vst [vmem:[%s9 + $0x10] sm:$0xff] %v4253
    %4270 = vst [vmem:[%s9 + $0x18] sm:$0xff] %v4254
    %4271 = vst [vmem:[%s9 + $0x20] sm:$0xff] %v4255
    %4272 = vst [vmem:[%s9 + $0x28] sm:$0xff] %v4256
    %4273 = vst [vmem:[%s9 + $0x30] sm:$0xff] %v4257
    %4274 = vst [vmem:[%s9 + $0x38] sm:$0xff] %v4258
    %4275 = vst [vmem:[%s9 + $0x40] sm:$0xff] %v4259
    %4276 = vst [vmem:[%s9 + $0x48] sm:$0xff] %v4260
    %4277 = vst [vmem:[%s9 + $0x50] sm:$0xff] %v4261
    %4278 = vst [vmem:[%s9 + $0x58] sm:$0xff] %v4262
    %4279 = vst [vmem:[%s9 + $0x60] sm:$0xff] %v4263
    %4280 = vst [vmem:[%s9 + $0x68] sm:$0xff] %v4264
    %4281 = vst [vmem:[%s9 + $0x70] sm:$0xff] %v4265
    %4282 = vst [vmem:[%s9 + $0x78] sm:$0xff] %v4266
    // Predicated region
    $region58: #{mlp_forward.1} parent=1 // pred_check
      _
    $region59: #{mlp_forward.1} parent=1 // pred_check_branch
      %4284 = sbr.rel (0) target = $region61
    $region60: #{mlp_forward.1} parent=1 // pred_region
      _
    $region61: #{mlp_forward.1} parent=1 // pred_fallthru
      _
    // Predicated region
    $region62: #{mlp_forward.1} parent=1 // pred_check
      _
    $region63: #{mlp_forward.1} parent=1 // pred_check_branch
      %4286 = sbr.rel (0) target = $region65
    $region64: #{mlp_forward.1} parent=1 // pred_region
      _
    $region65: #{mlp_forward.1} parent=1 // pred_fallthru
      _
    %4287 = vsyncpa [#allocation3], 1
    %4288 = vsyncpa [#allocation5], 1
    %4289 = vsyncpa [#allocation8], 1

</llo_original>
